<compile_context>
chip_gen: v7x
topology: tpu7x:2x2x1
jax: 0.10.0
libtpu: 0.0.40
codegen_flags: <defaults>
</compile_context>

<pallas_src>
import numpy as np

import jax
import jax.numpy as jnp
from jax.experimental import pallas as pl
from jax.experimental.pallas import tpu as pltpu


# ----------------------------------------------------------------------------
# Fused forward kernel
#
# Activation layout: a conv feature map [B, C, H, W] is stored as a 2-D matrix
# [H*B, W*C] with
#   row  = h * B + b      (spatial row, batch fastest)
#   col  = w * C + c      (spatial col, channel fastest)
# With this layout every op is a sublane-aligned slice, an elementwise max, or
# a plain 2-D matmul (MXU) against a pre-packed constant.  B (per-tile batch)
# is a multiple of 16 so every row slice is tile-aligned for both f32 and bf16.
# ----------------------------------------------------------------------------

def _fused_kernel(x_ref, m1_ref, b1_ref, sc1_ref,
                  m2_ref, b2_ref, sc2_ref,
                  w1b_ref, bf1_ref, wh_ref, bh_ref, w9_ref, b9_ref,
                  o_ref):
    f32 = jnp.float32
    bf16 = jnp.bfloat16
    B = x_ref.shape[1] // 28            # static per-tile batch (multiple of 16)
    x2d = x_ref[0]                      # [28B, 28] bf16

    # ---- conv1 (1 -> 10, k=5, valid): ONE K=140 matmul -----------------------
    # Row-im2col slab: 5 row-shifted views of the input, concatenated on lanes.
    xslab = jnp.concatenate(
        [x2d[kh * B:(kh + 24) * B, :] for kh in range(5)], axis=1)   # [24B, 140]
    acc1 = jnp.dot(xslab, m1_ref[...],
                   preferred_element_type=f32) + b1_ref[...]         # [24B, 240] f32

    # ---- 2x2 max-pool + ReLU --------------------------------------------------
    # Row pool: sublane-group max (no matmul, no O(B^2) constant).
    a3 = acc1.reshape(12, 2 * B, 240)
    rp1 = jnp.maximum(a3[:, :B, :], a3[:, B:, :]).reshape(12 * B, 240)
    # Col pool: adjacent-channel-group max, then tiny 0/1 compaction matmul.
    vc1 = jnp.maximum(rp1[:, :-10], rp1[:, 10:])                      # [12B, 230]
    h1 = jnp.maximum(
        jnp.dot(vc1.astype(bf16), sc1_ref[...],
                preferred_element_type=f32), 0.0)                     # [12B, 120]
    h1b = h1.astype(bf16)

    # ---- conv2 (10 -> 20, k=5): 5 banded matmuls, K=120 each ------------------
    # (Dropout2d == identity at inference.)
    acc2 = b2_ref[...] + jnp.dot(h1b[0:8 * B, :], m2_ref[0],
                                 preferred_element_type=f32)
    for kh in range(1, 5):
        acc2 = acc2 + jnp.dot(h1b[kh * B:(kh + 8) * B, :], m2_ref[kh],
                              preferred_element_type=f32)             # [8B, 160]

    # ---- 2x2 max-pool + ReLU --------------------------------------------------
    a3b = acc2.reshape(4, 2 * B, 160)
    rp2 = jnp.maximum(a3b[:, :B, :], a3b[:, B:, :]).reshape(4 * B, 160)
    vc2 = jnp.maximum(rp2[:, :-20], rp2[:, 20:])                      # [4B, 140]
    h2 = jnp.maximum(
        jnp.dot(vc2.astype(bf16), sc2_ref[...],
                preferred_element_type=f32), 0.0)                     # [4B, 80]
    h2b = h2.astype(bf16)

    # ---- fc1: NCHW-flatten permutation folded into per-pooled-row blocks ------
    acc = bf1_ref[...] + jnp.dot(h2b[0:B, :], w1b_ref[0],
                                 preferred_element_type=f32)
    for i in range(1, 4):
        acc = acc + jnp.dot(h2b[i * B:(i + 1) * B, :], w1b_ref[i],
                            preferred_element_type=f32)               # [B, 50]
    h = jnp.tanh(acc)

    # ---- fc2..fc8 (alpha-dropout == identity at inference) --------------------
    for k in range(7):
        h = jnp.tanh(jnp.dot(h.astype(bf16), wh_ref[k],
                             preferred_element_type=f32) + bh_ref[k])

    # ---- fc9 (padded to 128 lanes) + log_softmax ------------------------------
    # Padded classes have bias -1e9 -> exp underflows to 0, softmax unaffected.
    z = jnp.dot(h.astype(bf16), w9_ref[...],
                preferred_element_type=f32) + b9_ref[...]             # [B, 128]
    m = jnp.max(z, axis=-1, keepdims=True)
    e = jnp.exp(z - m)
    o_ref[0] = (z - m) - jnp.log(jnp.sum(e, axis=-1, keepdims=True))


# ----------------------------------------------------------------------------
# Wrapper
# ----------------------------------------------------------------------------

def _const_spec(shape):
    n = len(shape)
    return pl.BlockSpec(shape, lambda i, _n=n: (0,) * _n)


def _round_up(n, m):
    return ((n + m - 1) // m) * m


@jax.jit
def deep_tanh_net_forward(x, packed):
    """x: [B, 1, 28, 28] float32 NCHW; packed: output of pack_params."""
    B = x.shape[0]
    assert x.shape[1:] == (1, 28, 28)

    # Batch tiling: per-tile batch multiple of 16 (bf16 sublane packing),
    # capped at 128 rows/tile so the per-tile working set stays ~8 MiB.
    Bt = 128 if B >= 128 else _round_up(B, 16)
    Bpad = _round_up(B, Bt)
    T = Bpad // Bt

    # Only per-call XLA glue: pad batch, interleave batch into rows per tile,
    # cast to bf16 (halves input DMA; it only feeds the MXU).
    xp = jnp.pad(x.reshape(B, 28, 28), ((0, Bpad - B), (0, 0), (0, 0)))
    x3d = (xp.reshape(T, Bt, 28, 28)
             .transpose(0, 2, 1, 3)
             .reshape(T, 28 * Bt, 28)
             .astype(jnp.bfloat16))

    args = (x3d, packed["m1"], packed["b1t"], packed["sc1"],
            packed["m2"], packed["b2t"], packed["sc2"],
            packed["w1b"], packed["bf1"], packed["wh"], packed["bh"],
            packed["w9"], packed["b9"])

    in_specs = [pl.BlockSpec((1, 28 * Bt, 28), lambda i: (i, 0, 0))]
    in_specs += [_const_spec(a.shape) for a in args[1:]]

    out = pl.pallas_call(
        _fused_kernel,
        out_shape=jax.ShapeDtypeStruct((T, Bt, 128), jnp.float32),
        grid=(T,),
        in_specs=in_specs,
        out_specs=pl.BlockSpec((1, Bt, 128), lambda i: (i, 0, 0)),
        compiler_params=pltpu.CompilerParams(
            dimension_semantics=("parallel",),       # megacore on v7x
            vmem_limit_bytes=32 * 1024 * 1024),      # ample; < v7x 64 MiB VMEM
    )(*args)

    return out.reshape(T * Bt, 128)[:B, :10]


# ----------------------------------------------------------------------------
# One-time parameter packing (numpy; runs offline, not per forward call).
# No constant depends on the batch size.
# ----------------------------------------------------------------------------

def _banded_conv_mat(w, out_hw):
    """w: [Cout, Cin, K, K] -> [K, (out_hw+K-1)*Cin, out_hw*Cout] banded mats."""
    cout, cin, k, _ = w.shape
    in_hw = out_hw + k - 1
    m = np.zeros((k, in_hw * cin, out_hw * cout), np.float32)
    ow = np.arange(out_hw)
    for kh in range(k):
        for kw in range(k):
            for ci in range(cin):
                for co in range(cout):
                    m[kh, (ow + kw) * cin + ci, ow * cout + co] = w[co, ci, kh, kw]
    return m


def _col_pool_select(n_pairs, channels):
    """Picks even (pooled) column groups out of the adjacent-col-max matrix."""
    n_in = 2 * n_pairs * channels - channels
    s = np.zeros((n_in, n_pairs * channels), np.float32)
    for j in range(n_pairs):
        for c in range(channels):
            s[2 * j * channels + c, j * channels + c] = 1.0
    return s


def pack_params(params):
    w1 = np.asarray(params["conv1_w"]); b1 = np.asarray(params["conv1_b"])
    w2 = np.asarray(params["conv2_w"]); b2 = np.asarray(params["conv2_b"])
    fw = [np.asarray(w) for w in params["fc_w"]]
    fb = [np.asarray(b) for b in params["fc_b"]]

    # fc9 padded to 128 output lanes; padded biases = -1e9 so log_softmax
    # ignores the fake classes.
    w9p = np.zeros((50, 128), np.float32); w9p[:, :10] = fw[8]
    b9p = np.full((1, 128), -1e9, np.float32); b9p[0, :10] = fb[8]

    bf16_consts = {
        "m1": _banded_conv_mat(w1, 24).reshape(140, 240),     # fused K=140 conv1
        "sc1": _col_pool_select(12, 10),                      # [230, 120]
        "m2": _banded_conv_mat(w2, 8),                        # [5, 120, 160]
        "sc2": _col_pool_select(4, 20),                       # [140, 80]
        # fc1 weight [320,50], flat index c*16+i*4+j -> per-pooled-row blocks
        "w1b": fw[0].reshape(20, 4, 4, 50).transpose(1, 2, 0, 3).reshape(4, 80, 50),
        "wh": np.stack(fw[1:8]),                              # [7, 50, 50]
        "w9": w9p,                                            # [50, 128]
    }
    f32_consts = {
        "b1t": np.tile(b1, 24).reshape(1, 240),
        "b2t": np.tile(b2, 8).reshape(1, 160),
        "bf1": fb[0].reshape(1, 50),
        "bh": np.stack(fb[1:8]).reshape(7, 1, 50),
        "b9": b9p,                                            # [1, 128]
    }
    packed = {k: jnp.asarray(v, jnp.bfloat16) for k, v in bf16_consts.items()}
    packed.update({k: jnp.asarray(v, jnp.float32) for k, v in f32_consts.items()})
    return packed


# ----------------------------------------------------------------------------
# Parameter init (PyTorch-style uniform(-1/sqrt(fan_in), 1/sqrt(fan_in)))
# ----------------------------------------------------------------------------

def init_params(key):
    def uni(k, shape, fan_in):
        bound = 1.0 / np.sqrt(float(fan_in))
        return jax.random.uniform(k, shape, jnp.float32, -bound, bound)

    keys = jax.random.split(key, 32)
    ki = iter(keys)
    params = {
        "conv1_w": uni(next(ki), (10, 1, 5, 5), 1 * 5 * 5),
        "conv1_b": uni(next(ki), (10,), 1 * 5 * 5),
        "conv2_w": uni(next(ki), (20, 10, 5, 5), 10 * 5 * 5),
        "conv2_b": uni(next(ki), (20,), 10 * 5 * 5),
        "fc_w": [], "fc_b": [],
    }
    fc_dims = [(320, 50)] + [(50, 50)] * 7 + [(50, 10)]
    for din, dout in fc_dims:
        params["fc_w"].append(uni(next(ki), (din, dout), din))
        params["fc_b"].append(uni(next(ki), (dout,), din))
    return params


# ----------------------------------------------------------------------------
# Pure-JAX f32 reference (for correctness check)
# ----------------------------------------------------------------------------

def _reference_forward(x, params):
    def conv2d(h, w, b):
        out = jax.lax.conv_general_dilated(
            h, w, window_strides=(1, 1), padding="VALID",
            dimension_numbers=("NCHW", "OIHW", "NCHW"))
        return out + b.reshape(1, -1, 1, 1)

    def pool_relu(h):
        p = jax.lax.reduce_window(h, -jnp.inf, jax.lax.max,
                                  (1, 1, 2, 2), (1, 1, 2, 2), "VALID")
        return jnp.maximum(p, 0.0)

    h = pool_relu(conv2d(x, params["conv1_w"], params["conv1_b"]))
    h = pool_relu(conv2d(h, params["conv2_w"], params["conv2_b"]))
    h = h.reshape(h.shape[0], -1)                      # NCHW flatten -> 320
    for i in range(8):
        h = jnp.tanh(h @ params["fc_w"][i] + params["fc_b"][i])
    z = h @ params["fc_w"][8] + params["fc_b"][8]
    return jax.nn.log_softmax(z, axis=-1)


if __name__ == "__main__":
    key = jax.random.PRNGKey(0)
    k_x, k_p = jax.random.split(key)
    # MNIST-shaped input implied by view(-1, 320): 28x28 single-channel.
    x = jax.random.normal(k_x, (2, 1, 28, 28), jnp.float32)
    params = init_params(k_p)
    packed = pack_params(params)

    out = jax.block_until_ready(deep_tanh_net_forward(x, packed))

    assert out.shape == (2, 10)
    # log_softmax rows should exp-sum to 1 (computed in f32).
    assert jnp.allclose(jnp.sum(jnp.exp(out), axis=-1), 1.0, atol=1e-4)
    # Match the f32 reference; tolerance loosened for bf16 MXU operands.
    ref = _reference_forward(x, params)
    max_err = float(jnp.max(jnp.abs(out - ref)))
    assert jnp.allclose(out, ref, atol=5e-2, rtol=0.0), max_err
    print("KERNEL_OK")
</pallas_src>

<mosaic_0001>
module attributes {stable_mosaic.version = 11 : i64} {
  func.func @_fused_kernel(%arg0: i32, %arg1: memref<1x448x28xbf16, #tpu.memory_space<vmem>>, %arg2: memref<140x240xbf16, #tpu.memory_space<vmem>>, %arg3: memref<1x240xf32, #tpu.memory_space<vmem>>, %arg4: memref<230x120xbf16, #tpu.memory_space<vmem>>, %arg5: memref<5x120x160xbf16, #tpu.memory_space<vmem>>, %arg6: memref<1x160xf32, #tpu.memory_space<vmem>>, %arg7: memref<140x80xbf16, #tpu.memory_space<vmem>>, %arg8: memref<4x80x50xbf16, #tpu.memory_space<vmem>>, %arg9: memref<1x50xf32, #tpu.memory_space<vmem>>, %arg10: memref<7x50x50xbf16, #tpu.memory_space<vmem>>, %arg11: memref<7x1x50xf32, #tpu.memory_space<vmem>>, %arg12: memref<50x128xbf16, #tpu.memory_space<vmem>>, %arg13: memref<1x128xf32, #tpu.memory_space<vmem>>, %arg14: memref<1x16x128xf32, #tpu.memory_space<vmem>>) attributes {dimension_semantics = [#tpu.dimension_semantics<parallel>], iteration_bounds = array<i64: 1>, scalar_prefetch = 0 : i64, scratch_operands = 0 : i64, tpu.core_type = #tpu.core_type<tc>, window_params = [{transform_indices = @transform_0, window_bounds = array<i64: 1, 448, 28>}, {pipeline_mode = #tpu.pipeline_mode<synchronous>, transform_indices = @transform_1, window_bounds = array<i64: 140, 240>}, {pipeline_mode = #tpu.pipeline_mode<synchronous>, transform_indices = @transform_2, window_bounds = array<i64: 1, 240>}, {pipeline_mode = #tpu.pipeline_mode<synchronous>, transform_indices = @transform_3, window_bounds = array<i64: 230, 120>}, {pipeline_mode = #tpu.pipeline_mode<synchronous>, transform_indices = @transform_4, window_bounds = array<i64: 5, 120, 160>}, {pipeline_mode = #tpu.pipeline_mode<synchronous>, transform_indices = @transform_5, window_bounds = array<i64: 1, 160>}, {pipeline_mode = #tpu.pipeline_mode<synchronous>, transform_indices = @transform_6, window_bounds = array<i64: 140, 80>}, {pipeline_mode = #tpu.pipeline_mode<synchronous>, transform_indices = @transform_7, window_bounds = array<i64: 4, 80, 50>}, {pipeline_mode = #tpu.pipeline_mode<synchronous>, transform_indices = @transform_8, window_bounds = array<i64: 1, 50>}, {pipeline_mode = #tpu.pipeline_mode<synchronous>, transform_indices = @transform_9, window_bounds = array<i64: 7, 50, 50>}, {pipeline_mode = #tpu.pipeline_mode<synchronous>, transform_indices = @transform_10, window_bounds = array<i64: 7, 1, 50>}, {pipeline_mode = #tpu.pipeline_mode<synchronous>, transform_indices = @transform_11, window_bounds = array<i64: 50, 128>}, {pipeline_mode = #tpu.pipeline_mode<synchronous>, transform_indices = @transform_12, window_bounds = array<i64: 1, 128>}, {transform_indices = @transform_13, window_bounds = array<i64: 1, 16, 128>}]} {
    %c0 = arith.constant 0 : index
    %c0_0 = arith.constant 0 : index
    %c0_1 = arith.constant 0 : index
    %0 = vector.load %arg1[%c0, %c0_0, %c0_1] : memref<1x448x28xbf16, #tpu.memory_space<vmem>>, vector<1x448x28xbf16>
    %1 = vector.shape_cast %0 : vector<1x448x28xbf16> to vector<448x28xbf16>
    %2 = vector.extract_strided_slice %1 {offsets = [0, 0], sizes = [384, 28], strides = [1, 1]} : vector<448x28xbf16> to vector<384x28xbf16>
    %3 = vector.extract_strided_slice %1 {offsets = [16, 0], sizes = [384, 28], strides = [1, 1]} : vector<448x28xbf16> to vector<384x28xbf16>
    %4 = vector.extract_strided_slice %1 {offsets = [32, 0], sizes = [384, 28], strides = [1, 1]} : vector<448x28xbf16> to vector<384x28xbf16>
    %5 = vector.extract_strided_slice %1 {offsets = [48, 0], sizes = [384, 28], strides = [1, 1]} : vector<448x28xbf16> to vector<384x28xbf16>
    %6 = vector.extract_strided_slice %1 {offsets = [64, 0], sizes = [384, 28], strides = [1, 1]} : vector<448x28xbf16> to vector<384x28xbf16>
    %7 = tpu.concatenate %2, %3, %4, %5, %6 in 1 : vector<384x28xbf16>, vector<384x28xbf16>, vector<384x28xbf16>, vector<384x28xbf16>, vector<384x28xbf16> -> vector<384x140xbf16>
    %c0_2 = arith.constant 0 : index
    %c0_3 = arith.constant 0 : index
    %8 = vector.load %arg2[%c0_2, %c0_3] : memref<140x240xbf16, #tpu.memory_space<vmem>>, vector<140x240xbf16>
    %cst = arith.constant dense<0.000000e+00> : vector<384x240xf32>
    %9 = tpu.matmul %7, %8, %cst {dimension_numbers = #tpu.dot_dimension_numbers<[1], [0], [0], [1], [0, 0, 1, 1], [], []>} : vector<384x140xbf16>, vector<140x240xbf16>, vector<384x240xf32> -> vector<384x240xf32>
    %c0_4 = arith.constant 0 : index
    %c0_5 = arith.constant 0 : index
    %10 = vector.load %arg3[%c0_4, %c0_5] : memref<1x240xf32, #tpu.memory_space<vmem>>, vector<1x240xf32>
    %11 = vector.broadcast %10 : vector<1x240xf32> to vector<384x240xf32>
    %12 = arith.addf %9, %11 : vector<384x240xf32>
    %13 = vector.shape_cast %12 : vector<384x240xf32> to vector<12x32x240xf32>
    %14 = vector.extract_strided_slice %13 {offsets = [0, 0, 0], sizes = [12, 16, 240], strides = [1, 1, 1]} : vector<12x32x240xf32> to vector<12x16x240xf32>
    %15 = vector.extract_strided_slice %13 {offsets = [0, 16, 0], sizes = [12, 16, 240], strides = [1, 1, 1]} : vector<12x32x240xf32> to vector<12x16x240xf32>
    %16 = arith.maximumf %14, %15 : vector<12x16x240xf32>
    %17 = vector.shape_cast %16 : vector<12x16x240xf32> to vector<192x240xf32>
    %18 = vector.extract_strided_slice %17 {offsets = [0, 0], sizes = [192, 230], strides = [1, 1]} : vector<192x240xf32> to vector<192x230xf32>
    %19 = vector.extract_strided_slice %17 {offsets = [0, 10], sizes = [192, 230], strides = [1, 1]} : vector<192x240xf32> to vector<192x230xf32>
    %20 = arith.maximumf %18, %19 : vector<192x230xf32>
    %21 = arith.truncf %20 : vector<192x230xf32> to vector<192x230xbf16>
    %c0_6 = arith.constant 0 : index
    %c0_7 = arith.constant 0 : index
    %22 = vector.load %arg4[%c0_6, %c0_7] : memref<230x120xbf16, #tpu.memory_space<vmem>>, vector<230x120xbf16>
    %cst_8 = arith.constant dense<0.000000e+00> : vector<192x120xf32>
    %23 = tpu.matmul %21, %22, %cst_8 {dimension_numbers = #tpu.dot_dimension_numbers<[1], [0], [0], [1], [0, 0, 1, 1], [], []>} : vector<192x230xbf16>, vector<230x120xbf16>, vector<192x120xf32> -> vector<192x120xf32>
    %cst_9 = arith.constant 0.000000e+00 : f32
    %24 = vector.broadcast %cst_9 : f32 to vector<192x120xf32>
    %25 = arith.maximumf %23, %24 : vector<192x120xf32>
    %26 = arith.truncf %25 : vector<192x120xf32> to vector<192x120xbf16>
    %c0_10 = arith.constant 0 : index
    %c0_11 = arith.constant 0 : index
    %27 = vector.load %arg6[%c0_10, %c0_11] : memref<1x160xf32, #tpu.memory_space<vmem>>, vector<1x160xf32>
    %28 = vector.extract_strided_slice %26 {offsets = [0, 0], sizes = [128, 120], strides = [1, 1]} : vector<192x120xbf16> to vector<128x120xbf16>
    %c0_12 = arith.constant 0 : index
    %c0_13 = arith.constant 0 : index
    %c0_14 = arith.constant 0 : index
    %29 = vector.load %arg5[%c0_12, %c0_13, %c0_14] : memref<5x120x160xbf16, #tpu.memory_space<vmem>>, vector<1x120x160xbf16>
    %30 = vector.shape_cast %29 : vector<1x120x160xbf16> to vector<120x160xbf16>
    %cst_15 = arith.constant dense<0.000000e+00> : vector<128x160xf32>
    %31 = tpu.matmul %28, %30, %cst_15 {dimension_numbers = #tpu.dot_dimension_numbers<[1], [0], [0], [1], [0, 0, 1, 1], [], []>} : vector<128x120xbf16>, vector<120x160xbf16>, vector<128x160xf32> -> vector<128x160xf32>
    %32 = vector.broadcast %27 : vector<1x160xf32> to vector<128x160xf32>
    %33 = arith.addf %32, %31 : vector<128x160xf32>
    %34 = vector.extract_strided_slice %26 {offsets = [16, 0], sizes = [128, 120], strides = [1, 1]} : vector<192x120xbf16> to vector<128x120xbf16>
    %c1 = arith.constant 1 : index
    %c0_16 = arith.constant 0 : index
    %c0_17 = arith.constant 0 : index
    %35 = vector.load %arg5[%c1, %c0_16, %c0_17] : memref<5x120x160xbf16, #tpu.memory_space<vmem>>, vector<1x120x160xbf16>
    %36 = vector.shape_cast %35 : vector<1x120x160xbf16> to vector<120x160xbf16>
    %cst_18 = arith.constant dense<0.000000e+00> : vector<128x160xf32>
    %37 = tpu.matmul %34, %36, %cst_18 {dimension_numbers = #tpu.dot_dimension_numbers<[1], [0], [0], [1], [0, 0, 1, 1], [], []>} : vector<128x120xbf16>, vector<120x160xbf16>, vector<128x160xf32> -> vector<128x160xf32>
    %38 = arith.addf %33, %37 : vector<128x160xf32>
    %39 = vector.extract_strided_slice %26 {offsets = [32, 0], sizes = [128, 120], strides = [1, 1]} : vector<192x120xbf16> to vector<128x120xbf16>
    %c2 = arith.constant 2 : index
    %c0_19 = arith.constant 0 : index
    %c0_20 = arith.constant 0 : index
    %40 = vector.load %arg5[%c2, %c0_19, %c0_20] : memref<5x120x160xbf16, #tpu.memory_space<vmem>>, vector<1x120x160xbf16>
    %41 = vector.shape_cast %40 : vector<1x120x160xbf16> to vector<120x160xbf16>
    %cst_21 = arith.constant dense<0.000000e+00> : vector<128x160xf32>
    %42 = tpu.matmul %39, %41, %cst_21 {dimension_numbers = #tpu.dot_dimension_numbers<[1], [0], [0], [1], [0, 0, 1, 1], [], []>} : vector<128x120xbf16>, vector<120x160xbf16>, vector<128x160xf32> -> vector<128x160xf32>
    %43 = arith.addf %38, %42 : vector<128x160xf32>
    %44 = vector.extract_strided_slice %26 {offsets = [48, 0], sizes = [128, 120], strides = [1, 1]} : vector<192x120xbf16> to vector<128x120xbf16>
    %c3 = arith.constant 3 : index
    %c0_22 = arith.constant 0 : index
    %c0_23 = arith.constant 0 : index
    %45 = vector.load %arg5[%c3, %c0_22, %c0_23] : memref<5x120x160xbf16, #tpu.memory_space<vmem>>, vector<1x120x160xbf16>
    %46 = vector.shape_cast %45 : vector<1x120x160xbf16> to vector<120x160xbf16>
    %cst_24 = arith.constant dense<0.000000e+00> : vector<128x160xf32>
    %47 = tpu.matmul %44, %46, %cst_24 {dimension_numbers = #tpu.dot_dimension_numbers<[1], [0], [0], [1], [0, 0, 1, 1], [], []>} : vector<128x120xbf16>, vector<120x160xbf16>, vector<128x160xf32> -> vector<128x160xf32>
    %48 = arith.addf %43, %47 : vector<128x160xf32>
    %49 = vector.extract_strided_slice %26 {offsets = [64, 0], sizes = [128, 120], strides = [1, 1]} : vector<192x120xbf16> to vector<128x120xbf16>
    %c4 = arith.constant 4 : index
    %c0_25 = arith.constant 0 : index
    %c0_26 = arith.constant 0 : index
    %50 = vector.load %arg5[%c4, %c0_25, %c0_26] : memref<5x120x160xbf16, #tpu.memory_space<vmem>>, vector<1x120x160xbf16>
    %51 = vector.shape_cast %50 : vector<1x120x160xbf16> to vector<120x160xbf16>
    %cst_27 = arith.constant dense<0.000000e+00> : vector<128x160xf32>
    %52 = tpu.matmul %49, %51, %cst_27 {dimension_numbers = #tpu.dot_dimension_numbers<[1], [0], [0], [1], [0, 0, 1, 1], [], []>} : vector<128x120xbf16>, vector<120x160xbf16>, vector<128x160xf32> -> vector<128x160xf32>
    %53 = arith.addf %48, %52 : vector<128x160xf32>
    %54 = vector.shape_cast %53 : vector<128x160xf32> to vector<4x32x160xf32>
    %55 = vector.extract_strided_slice %54 {offsets = [0, 0, 0], sizes = [4, 16, 160], strides = [1, 1, 1]} : vector<4x32x160xf32> to vector<4x16x160xf32>
    %56 = vector.extract_strided_slice %54 {offsets = [0, 16, 0], sizes = [4, 16, 160], strides = [1, 1, 1]} : vector<4x32x160xf32> to vector<4x16x160xf32>
    %57 = arith.maximumf %55, %56 : vector<4x16x160xf32>
    %58 = vector.shape_cast %57 : vector<4x16x160xf32> to vector<64x160xf32>
    %59 = vector.extract_strided_slice %58 {offsets = [0, 0], sizes = [64, 140], strides = [1, 1]} : vector<64x160xf32> to vector<64x140xf32>
    %60 = vector.extract_strided_slice %58 {offsets = [0, 20], sizes = [64, 140], strides = [1, 1]} : vector<64x160xf32> to vector<64x140xf32>
    %61 = arith.maximumf %59, %60 : vector<64x140xf32>
    %62 = arith.truncf %61 : vector<64x140xf32> to vector<64x140xbf16>
    %c0_28 = arith.constant 0 : index
    %c0_29 = arith.constant 0 : index
    %63 = vector.load %arg7[%c0_28, %c0_29] : memref<140x80xbf16, #tpu.memory_space<vmem>>, vector<140x80xbf16>
    %cst_30 = arith.constant dense<0.000000e+00> : vector<64x80xf32>
    %64 = tpu.matmul %62, %63, %cst_30 {dimension_numbers = #tpu.dot_dimension_numbers<[1], [0], [0], [1], [0, 0, 1, 1], [], []>} : vector<64x140xbf16>, vector<140x80xbf16>, vector<64x80xf32> -> vector<64x80xf32>
    %cst_31 = arith.constant 0.000000e+00 : f32
    %65 = vector.broadcast %cst_31 : f32 to vector<64x80xf32>
    %66 = arith.maximumf %64, %65 : vector<64x80xf32>
    %67 = arith.truncf %66 : vector<64x80xf32> to vector<64x80xbf16>
    %c0_32 = arith.constant 0 : index
    %c0_33 = arith.constant 0 : index
    %68 = vector.load %arg9[%c0_32, %c0_33] : memref<1x50xf32, #tpu.memory_space<vmem>>, vector<1x50xf32>
    %69 = vector.extract_strided_slice %67 {offsets = [0, 0], sizes = [16, 80], strides = [1, 1]} : vector<64x80xbf16> to vector<16x80xbf16>
    %c0_34 = arith.constant 0 : index
    %c0_35 = arith.constant 0 : index
    %c0_36 = arith.constant 0 : index
    %70 = vector.load %arg8[%c0_34, %c0_35, %c0_36] : memref<4x80x50xbf16, #tpu.memory_space<vmem>>, vector<1x80x50xbf16>
    %71 = vector.shape_cast %70 : vector<1x80x50xbf16> to vector<80x50xbf16>
    %cst_37 = arith.constant dense<0.000000e+00> : vector<16x50xf32>
    %72 = tpu.matmul %69, %71, %cst_37 {dimension_numbers = #tpu.dot_dimension_numbers<[1], [0], [0], [1], [0, 0, 1, 1], [], []>} : vector<16x80xbf16>, vector<80x50xbf16>, vector<16x50xf32> -> vector<16x50xf32>
    %73 = vector.broadcast %68 : vector<1x50xf32> to vector<16x50xf32>
    %74 = arith.addf %73, %72 : vector<16x50xf32>
    %75 = vector.extract_strided_slice %67 {offsets = [16, 0], sizes = [16, 80], strides = [1, 1]} : vector<64x80xbf16> to vector<16x80xbf16>
    %c1_38 = arith.constant 1 : index
    %c0_39 = arith.constant 0 : index
    %c0_40 = arith.constant 0 : index
    %76 = vector.load %arg8[%c1_38, %c0_39, %c0_40] : memref<4x80x50xbf16, #tpu.memory_space<vmem>>, vector<1x80x50xbf16>
    %77 = vector.shape_cast %76 : vector<1x80x50xbf16> to vector<80x50xbf16>
    %cst_41 = arith.constant dense<0.000000e+00> : vector<16x50xf32>
    %78 = tpu.matmul %75, %77, %cst_41 {dimension_numbers = #tpu.dot_dimension_numbers<[1], [0], [0], [1], [0, 0, 1, 1], [], []>} : vector<16x80xbf16>, vector<80x50xbf16>, vector<16x50xf32> -> vector<16x50xf32>
    %79 = arith.addf %74, %78 : vector<16x50xf32>
    %80 = vector.extract_strided_slice %67 {offsets = [32, 0], sizes = [16, 80], strides = [1, 1]} : vector<64x80xbf16> to vector<16x80xbf16>
    %c2_42 = arith.constant 2 : index
    %c0_43 = arith.constant 0 : index
    %c0_44 = arith.constant 0 : index
    %81 = vector.load %arg8[%c2_42, %c0_43, %c0_44] : memref<4x80x50xbf16, #tpu.memory_space<vmem>>, vector<1x80x50xbf16>
    %82 = vector.shape_cast %81 : vector<1x80x50xbf16> to vector<80x50xbf16>
    %cst_45 = arith.constant dense<0.000000e+00> : vector<16x50xf32>
    %83 = tpu.matmul %80, %82, %cst_45 {dimension_numbers = #tpu.dot_dimension_numbers<[1], [0], [0], [1], [0, 0, 1, 1], [], []>} : vector<16x80xbf16>, vector<80x50xbf16>, vector<16x50xf32> -> vector<16x50xf32>
    %84 = arith.addf %79, %83 : vector<16x50xf32>
    %85 = vector.extract_strided_slice %67 {offsets = [48, 0], sizes = [16, 80], strides = [1, 1]} : vector<64x80xbf16> to vector<16x80xbf16>
    %c3_46 = arith.constant 3 : index
    %c0_47 = arith.constant 0 : index
    %c0_48 = arith.constant 0 : index
    %86 = vector.load %arg8[%c3_46, %c0_47, %c0_48] : memref<4x80x50xbf16, #tpu.memory_space<vmem>>, vector<1x80x50xbf16>
    %87 = vector.shape_cast %86 : vector<1x80x50xbf16> to vector<80x50xbf16>
    %cst_49 = arith.constant dense<0.000000e+00> : vector<16x50xf32>
    %88 = tpu.matmul %85, %87, %cst_49 {dimension_numbers = #tpu.dot_dimension_numbers<[1], [0], [0], [1], [0, 0, 1, 1], [], []>} : vector<16x80xbf16>, vector<80x50xbf16>, vector<16x50xf32> -> vector<16x50xf32>
    %89 = arith.addf %84, %88 : vector<16x50xf32>
    %90 = math.tanh %89 : vector<16x50xf32>
    %91 = arith.truncf %90 : vector<16x50xf32> to vector<16x50xbf16>
    %c0_50 = arith.constant 0 : index
    %c0_51 = arith.constant 0 : index
    %c0_52 = arith.constant 0 : index
    %92 = vector.load %arg10[%c0_50, %c0_51, %c0_52] : memref<7x50x50xbf16, #tpu.memory_space<vmem>>, vector<1x50x50xbf16>
    %93 = vector.shape_cast %92 : vector<1x50x50xbf16> to vector<50x50xbf16>
    %cst_53 = arith.constant dense<0.000000e+00> : vector<16x50xf32>
    %94 = tpu.matmul %91, %93, %cst_53 {dimension_numbers = #tpu.dot_dimension_numbers<[1], [0], [0], [1], [0, 0, 1, 1], [], []>} : vector<16x50xbf16>, vector<50x50xbf16>, vector<16x50xf32> -> vector<16x50xf32>
    %c0_54 = arith.constant 0 : index
    %c0_55 = arith.constant 0 : index
    %c0_56 = arith.constant 0 : index
    %95 = vector.load %arg11[%c0_54, %c0_55, %c0_56] : memref<7x1x50xf32, #tpu.memory_space<vmem>>, vector<1x1x50xf32>
    %96 = vector.shape_cast %95 : vector<1x1x50xf32> to vector<1x50xf32>
    %97 = vector.broadcast %96 : vector<1x50xf32> to vector<16x50xf32>
    %98 = arith.addf %94, %97 : vector<16x50xf32>
    %99 = math.tanh %98 : vector<16x50xf32>
    %100 = arith.truncf %99 : vector<16x50xf32> to vector<16x50xbf16>
    %c1_57 = arith.constant 1 : index
    %c0_58 = arith.constant 0 : index
    %c0_59 = arith.constant 0 : index
    %101 = vector.load %arg10[%c1_57, %c0_58, %c0_59] : memref<7x50x50xbf16, #tpu.memory_space<vmem>>, vector<1x50x50xbf16>
    %102 = vector.shape_cast %101 : vector<1x50x50xbf16> to vector<50x50xbf16>
    %cst_60 = arith.constant dense<0.000000e+00> : vector<16x50xf32>
    %103 = tpu.matmul %100, %102, %cst_60 {dimension_numbers = #tpu.dot_dimension_numbers<[1], [0], [0], [1], [0, 0, 1, 1], [], []>} : vector<16x50xbf16>, vector<50x50xbf16>, vector<16x50xf32> -> vector<16x50xf32>
    %c1_61 = arith.constant 1 : index
    %c0_62 = arith.constant 0 : index
    %c0_63 = arith.constant 0 : index
    %104 = vector.load %arg11[%c1_61, %c0_62, %c0_63] : memref<7x1x50xf32, #tpu.memory_space<vmem>>, vector<1x1x50xf32>
    %105 = vector.shape_cast %104 : vector<1x1x50xf32> to vector<1x50xf32>
    %106 = vector.broadcast %105 : vector<1x50xf32> to vector<16x50xf32>
    %107 = arith.addf %103, %106 : vector<16x50xf32>
    %108 = math.tanh %107 : vector<16x50xf32>
    %109 = arith.truncf %108 : vector<16x50xf32> to vector<16x50xbf16>
    %c2_64 = arith.constant 2 : index
    %c0_65 = arith.constant 0 : index
    %c0_66 = arith.constant 0 : index
    %110 = vector.load %arg10[%c2_64, %c0_65, %c0_66] : memref<7x50x50xbf16, #tpu.memory_space<vmem>>, vector<1x50x50xbf16>
    %111 = vector.shape_cast %110 : vector<1x50x50xbf16> to vector<50x50xbf16>
    %cst_67 = arith.constant dense<0.000000e+00> : vector<16x50xf32>
    %112 = tpu.matmul %109, %111, %cst_67 {dimension_numbers = #tpu.dot_dimension_numbers<[1], [0], [0], [1], [0, 0, 1, 1], [], []>} : vector<16x50xbf16>, vector<50x50xbf16>, vector<16x50xf32> -> vector<16x50xf32>
    %c2_68 = arith.constant 2 : index
    %c0_69 = arith.constant 0 : index
    %c0_70 = arith.constant 0 : index
    %113 = vector.load %arg11[%c2_68, %c0_69, %c0_70] : memref<7x1x50xf32, #tpu.memory_space<vmem>>, vector<1x1x50xf32>
    %114 = vector.shape_cast %113 : vector<1x1x50xf32> to vector<1x50xf32>
    %115 = vector.broadcast %114 : vector<1x50xf32> to vector<16x50xf32>
    %116 = arith.addf %112, %115 : vector<16x50xf32>
    %117 = math.tanh %116 : vector<16x50xf32>
    %118 = arith.truncf %117 : vector<16x50xf32> to vector<16x50xbf16>
    %c3_71 = arith.constant 3 : index
    %c0_72 = arith.constant 0 : index
    %c0_73 = arith.constant 0 : index
    %119 = vector.load %arg10[%c3_71, %c0_72, %c0_73] : memref<7x50x50xbf16, #tpu.memory_space<vmem>>, vector<1x50x50xbf16>
    %120 = vector.shape_cast %119 : vector<1x50x50xbf16> to vector<50x50xbf16>
    %cst_74 = arith.constant dense<0.000000e+00> : vector<16x50xf32>
    %121 = tpu.matmul %118, %120, %cst_74 {dimension_numbers = #tpu.dot_dimension_numbers<[1], [0], [0], [1], [0, 0, 1, 1], [], []>} : vector<16x50xbf16>, vector<50x50xbf16>, vector<16x50xf32> -> vector<16x50xf32>
    %c3_75 = arith.constant 3 : index
    %c0_76 = arith.constant 0 : index
    %c0_77 = arith.constant 0 : index
    %122 = vector.load %arg11[%c3_75, %c0_76, %c0_77] : memref<7x1x50xf32, #tpu.memory_space<vmem>>, vector<1x1x50xf32>
    %123 = vector.shape_cast %122 : vector<1x1x50xf32> to vector<1x50xf32>
    %124 = vector.broadcast %123 : vector<1x50xf32> to vector<16x50xf32>
    %125 = arith.addf %121, %124 : vector<16x50xf32>
    %126 = math.tanh %125 : vector<16x50xf32>
    %127 = arith.truncf %126 : vector<16x50xf32> to vector<16x50xbf16>
    %c4_78 = arith.constant 4 : index
    %c0_79 = arith.constant 0 : index
    %c0_80 = arith.constant 0 : index
    %128 = vector.load %arg10[%c4_78, %c0_79, %c0_80] : memref<7x50x50xbf16, #tpu.memory_space<vmem>>, vector<1x50x50xbf16>
    %129 = vector.shape_cast %128 : vector<1x50x50xbf16> to vector<50x50xbf16>
    %cst_81 = arith.constant dense<0.000000e+00> : vector<16x50xf32>
    %130 = tpu.matmul %127, %129, %cst_81 {dimension_numbers = #tpu.dot_dimension_numbers<[1], [0], [0], [1], [0, 0, 1, 1], [], []>} : vector<16x50xbf16>, vector<50x50xbf16>, vector<16x50xf32> -> vector<16x50xf32>
    %c4_82 = arith.constant 4 : index
    %c0_83 = arith.constant 0 : index
    %c0_84 = arith.constant 0 : index
    %131 = vector.load %arg11[%c4_82, %c0_83, %c0_84] : memref<7x1x50xf32, #tpu.memory_space<vmem>>, vector<1x1x50xf32>
    %132 = vector.shape_cast %131 : vector<1x1x50xf32> to vector<1x50xf32>
    %133 = vector.broadcast %132 : vector<1x50xf32> to vector<16x50xf32>
    %134 = arith.addf %130, %133 : vector<16x50xf32>
    %135 = math.tanh %134 : vector<16x50xf32>
    %136 = arith.truncf %135 : vector<16x50xf32> to vector<16x50xbf16>
    %c5 = arith.constant 5 : index
    %c0_85 = arith.constant 0 : index
    %c0_86 = arith.constant 0 : index
    %137 = vector.load %arg10[%c5, %c0_85, %c0_86] : memref<7x50x50xbf16, #tpu.memory_space<vmem>>, vector<1x50x50xbf16>
    %138 = vector.shape_cast %137 : vector<1x50x50xbf16> to vector<50x50xbf16>
    %cst_87 = arith.constant dense<0.000000e+00> : vector<16x50xf32>
    %139 = tpu.matmul %136, %138, %cst_87 {dimension_numbers = #tpu.dot_dimension_numbers<[1], [0], [0], [1], [0, 0, 1, 1], [], []>} : vector<16x50xbf16>, vector<50x50xbf16>, vector<16x50xf32> -> vector<16x50xf32>
    %c5_88 = arith.constant 5 : index
    %c0_89 = arith.constant 0 : index
    %c0_90 = arith.constant 0 : index
    %140 = vector.load %arg11[%c5_88, %c0_89, %c0_90] : memref<7x1x50xf32, #tpu.memory_space<vmem>>, vector<1x1x50xf32>
    %141 = vector.shape_cast %140 : vector<1x1x50xf32> to vector<1x50xf32>
    %142 = vector.broadcast %141 : vector<1x50xf32> to vector<16x50xf32>
    %143 = arith.addf %139, %142 : vector<16x50xf32>
    %144 = math.tanh %143 : vector<16x50xf32>
    %145 = arith.truncf %144 : vector<16x50xf32> to vector<16x50xbf16>
    %c6 = arith.constant 6 : index
    %c0_91 = arith.constant 0 : index
    %c0_92 = arith.constant 0 : index
    %146 = vector.load %arg10[%c6, %c0_91, %c0_92] : memref<7x50x50xbf16, #tpu.memory_space<vmem>>, vector<1x50x50xbf16>
    %147 = vector.shape_cast %146 : vector<1x50x50xbf16> to vector<50x50xbf16>
    %cst_93 = arith.constant dense<0.000000e+00> : vector<16x50xf32>
    %148 = tpu.matmul %145, %147, %cst_93 {dimension_numbers = #tpu.dot_dimension_numbers<[1], [0], [0], [1], [0, 0, 1, 1], [], []>} : vector<16x50xbf16>, vector<50x50xbf16>, vector<16x50xf32> -> vector<16x50xf32>
    %c6_94 = arith.constant 6 : index
    %c0_95 = arith.constant 0 : index
    %c0_96 = arith.constant 0 : index
    %149 = vector.load %arg11[%c6_94, %c0_95, %c0_96] : memref<7x1x50xf32, #tpu.memory_space<vmem>>, vector<1x1x50xf32>
    %150 = vector.shape_cast %149 : vector<1x1x50xf32> to vector<1x50xf32>
    %151 = vector.broadcast %150 : vector<1x50xf32> to vector<16x50xf32>
    %152 = arith.addf %148, %151 : vector<16x50xf32>
    %153 = math.tanh %152 : vector<16x50xf32>
    %154 = arith.truncf %153 : vector<16x50xf32> to vector<16x50xbf16>
    %c0_97 = arith.constant 0 : index
    %c0_98 = arith.constant 0 : index
    %155 = vector.load %arg12[%c0_97, %c0_98] : memref<50x128xbf16, #tpu.memory_space<vmem>>, vector<50x128xbf16>
    %cst_99 = arith.constant dense<0.000000e+00> : vector<16x128xf32>
    %156 = tpu.matmul %154, %155, %cst_99 {dimension_numbers = #tpu.dot_dimension_numbers<[1], [0], [0], [1], [0, 0, 1, 1], [], []>} : vector<16x50xbf16>, vector<50x128xbf16>, vector<16x128xf32> -> vector<16x128xf32>
    %c0_100 = arith.constant 0 : index
    %c0_101 = arith.constant 0 : index
    %157 = vector.load %arg13[%c0_100, %c0_101] : memref<1x128xf32, #tpu.memory_space<vmem>>, vector<1x128xf32>
    %158 = vector.broadcast %157 : vector<1x128xf32> to vector<16x128xf32>
    %159 = arith.addf %156, %158 : vector<16x128xf32>
    %cst_102 = arith.constant dense<0xFF800000> : vector<16xf32>
    %160 = vector.multi_reduction <maximumf>, %159, %cst_102 [1] : vector<16x128xf32> to vector<16xf32>
    %161 = vector.shape_cast %160 : vector<16xf32> to vector<16x1xf32>
    %162 = vector.broadcast %161 : vector<16x1xf32> to vector<16x128xf32>
    %163 = arith.subf %159, %162 : vector<16x128xf32>
    %164 = math.exp %163 : vector<16x128xf32>
    %165 = vector.broadcast %161 : vector<16x1xf32> to vector<16x128xf32>
    %166 = arith.subf %159, %165 : vector<16x128xf32>
    %cst_103 = arith.constant dense<0.000000e+00> : vector<16xf32>
    %167 = vector.multi_reduction <add>, %164, %cst_103 [1] : vector<16x128xf32> to vector<16xf32>
    %168 = vector.shape_cast %167 : vector<16xf32> to vector<16x1xf32>
    %169 = math.log %168 : vector<16x1xf32>
    %170 = vector.broadcast %169 : vector<16x1xf32> to vector<16x128xf32>
    %171 = arith.subf %166, %170 : vector<16x128xf32>
    %c0_104 = arith.constant 0 : index
    %c0_105 = arith.constant 0 : index
    %c0_106 = arith.constant 0 : index
    %172 = vector.load %arg14[%c0_104, %c0_105, %c0_106] : memref<1x16x128xf32, #tpu.memory_space<vmem>>, vector<1x16x128xf32>
    %173 = vector.shape_cast %172 : vector<1x16x128xf32> to vector<16x128xf32>
    %174 = vector.shape_cast %171 : vector<16x128xf32> to vector<1x16x128xf32>
    tpu.vector_store %arg14[%c0_104, %c0_105, %c0_106], %174 {strides = array<i32>} : memref<1x16x128xf32, #tpu.memory_space<vmem>>, vector<1x16x128xf32>,
    return
  }
  func.func @transform_0(%arg0: i32) -> (i32, i32, i32) {
    %c0_i32 = arith.constant 0 : i32
    %c0_i32_0 = arith.constant 0 : i32
    %c0_i32_1 = arith.constant 0 : i32
    return %arg0, %c0_i32, %c0_i32_0 : i32, i32, i32
  }
  func.func @transform_1(%arg0: i32) -> (i32, i32) {
    %c0_i32 = arith.constant 0 : i32
    %c0_i32_0 = arith.constant 0 : i32
    %c0_i32_1 = arith.constant 0 : i32
    return %c0_i32, %c0_i32_0 : i32, i32
  }
  func.func @transform_2(%arg0: i32) -> (i32, i32) {
    %c0_i32 = arith.constant 0 : i32
    %c0_i32_0 = arith.constant 0 : i32
    %c0_i32_1 = arith.constant 0 : i32
    return %c0_i32, %c0_i32_0 : i32, i32
  }
  func.func @transform_3(%arg0: i32) -> (i32, i32) {
    %c0_i32 = arith.constant 0 : i32
    %c0_i32_0 = arith.constant 0 : i32
    %c0_i32_1 = arith.constant 0 : i32
    return %c0_i32, %c0_i32_0 : i32, i32
  }
  func.func @transform_4(%arg0: i32) -> (i32, i32, i32) {
    %c0_i32 = arith.constant 0 : i32
    %c0_i32_0 = arith.constant 0 : i32
    %c0_i32_1 = arith.constant 0 : i32
    %c0_i32_2 = arith.constant 0 : i32
    return %c0_i32, %c0_i32_0, %c0_i32_1 : i32, i32, i32
  }
  func.func @transform_5(%arg0: i32) -> (i32, i32) {
    %c0_i32 = arith.constant 0 : i32
    %c0_i32_0 = arith.constant 0 : i32
    %c0_i32_1 = arith.constant 0 : i32
    return %c0_i32, %c0_i32_0 : i32, i32
  }
  func.func @transform_6(%arg0: i32) -> (i32, i32) {
    %c0_i32 = arith.constant 0 : i32
    %c0_i32_0 = arith.constant 0 : i32
    %c0_i32_1 = arith.constant 0 : i32
    return %c0_i32, %c0_i32_0 : i32, i32
  }
  func.func @transform_7(%arg0: i32) -> (i32, i32, i32) {
    %c0_i32 = arith.constant 0 : i32
    %c0_i32_0 = arith.constant 0 : i32
    %c0_i32_1 = arith.constant 0 : i32
    %c0_i32_2 = arith.constant 0 : i32
    return %c0_i32, %c0_i32_0, %c0_i32_1 : i32, i32, i32
  }
  func.func @transform_8(%arg0: i32) -> (i32, i32) {
    %c0_i32 = arith.constant 0 : i32
    %c0_i32_0 = arith.constant 0 : i32
    %c0_i32_1 = arith.constant 0 : i32
    return %c0_i32, %c0_i32_0 : i32, i32
  }
  func.func @transform_9(%arg0: i32) -> (i32, i32, i32) {
    %c0_i32 = arith.constant 0 : i32
    %c0_i32_0 = arith.constant 0 : i32
    %c0_i32_1 = arith.constant 0 : i32
    %c0_i32_2 = arith.constant 0 : i32
    return %c0_i32, %c0_i32_0, %c0_i32_1 : i32, i32, i32
  }
  func.func @transform_10(%arg0: i32) -> (i32, i32, i32) {
    %c0_i32 = arith.constant 0 : i32
    %c0_i32_0 = arith.constant 0 : i32
    %c0_i32_1 = arith.constant 0 : i32
    %c0_i32_2 = arith.constant 0 : i32
    return %c0_i32, %c0_i32_0, %c0_i32_1 : i32, i32, i32
  }
  func.func @transform_11(%arg0: i32) -> (i32, i32) {
    %c0_i32 = arith.constant 0 : i32
    %c0_i32_0 = arith.constant 0 : i32
    %c0_i32_1 = arith.constant 0 : i32
    return %c0_i32, %c0_i32_0 : i32, i32
  }
  func.func @transform_12(%arg0: i32) -> (i32, i32) {
    %c0_i32 = arith.constant 0 : i32
    %c0_i32_0 = arith.constant 0 : i32
    %c0_i32_1 = arith.constant 0 : i32
    return %c0_i32, %c0_i32_0 : i32, i32
  }
  func.func @transform_13(%arg0: i32) -> (i32, i32, i32) {
    %c0_i32 = arith.constant 0 : i32
    %c0_i32_0 = arith.constant 0 : i32
    %c0_i32_1 = arith.constant 0 : i32
    return %arg0, %c0_i32, %c0_i32_0 : i32, i32, i32
  }
}

</mosaic_0001>

<llo_original>
// kernel: deep_tanh_net_forward.1
$region0: #{deep_tanh_net_forward.1}
  #allocation0 [shape = 'u32[]', space=smem, size = 0x4, offset = 0x4, fixed_abs, tag = 'smem constant byte address 0x4 - core index']
  #allocation1 [shape = 'u32[144,128]{1,0:T(1,128)}', space=vmem, size = 0x12000, scoped, tag = 'internal scratch']
  %s0 = inlined_call_operand.vmem [shape: bf16[1,448,28], index: 0, kind: input, shape index: {}]
  %s1 = inlined_call_operand.vmem [shape: bf16[140,240], index: 1, kind: input, shape index: {}]
  %s2 = inlined_call_operand.vmem [shape: f32[1,240], index: 2, kind: input, shape index: {}]
  %s3 = inlined_call_operand.vmem [shape: bf16[230,120], index: 3, kind: input, shape index: {}]
  %s4 = inlined_call_operand.vmem [shape: bf16[5,120,160], index: 4, kind: input, shape index: {}]
  %s5 = inlined_call_operand.vmem [shape: f32[1,160], index: 5, kind: input, shape index: {}]
  %s6 = inlined_call_operand.vmem [shape: bf16[140,80], index: 6, kind: input, shape index: {}]
  %s7 = inlined_call_operand.vmem [shape: bf16[4,80,50], index: 7, kind: input, shape index: {}]
  %s8 = inlined_call_operand.vmem [shape: f32[1,50], index: 8, kind: input, shape index: {}]
  %s9 = inlined_call_operand.vmem [shape: bf16[7,50,50], index: 9, kind: input, shape index: {}]
  %s10 = inlined_call_operand.vmem [shape: f32[7,1,50], index: 10, kind: input, shape index: {}]
  %s11 = inlined_call_operand.vmem [shape: bf16[50,128], index: 11, kind: input, shape index: {}]
  %s12 = inlined_call_operand.vmem [shape: f32[1,128], index: 12, kind: input, shape index: {}]
  %s13 = inlined_call_operand.vmem [shape: f32[1,16,128], index: 13, kind: output, shape index: {}]
  %s14 = sld [smem:[#allocation0]]
  $region62: #{deep_tanh_net_forward.1} parent=0
    _
  %s16 = ssub.s32 1, %s14
  %s17 = scalar_select 0, %s16, %s14
  // Predicated region
  $region2: #{deep_tanh_net_forward.1} parent=0 // pred_check
    _
  $region3: #{deep_tanh_net_forward.1} parent=0 // pred_check_branch
    %19 = sbr.rel (0) target = $region5
  $region4: #{deep_tanh_net_forward.1} parent=0 // pred_region
    _
  $region5: #{deep_tanh_net_forward.1} parent=0 // pred_fallthru
    _
  // Predicated region
  $region6: #{deep_tanh_net_forward.1} parent=0 // pred_check
    _
  $region7: #{deep_tanh_net_forward.1} parent=0 // pred_check_branch
    %21 = sbr.rel (0) target = $region9
  $region8: #{deep_tanh_net_forward.1} parent=0 // pred_region
    _
  $region9: #{deep_tanh_net_forward.1} parent=0 // pred_fallthru
    _
  // Predicated region
  $region10: #{deep_tanh_net_forward.1} parent=0 // pred_check
    _
  $region11: #{deep_tanh_net_forward.1} parent=0 // pred_check_branch
    %23 = sbr.rel (0) target = $region13
  $region12: #{deep_tanh_net_forward.1} parent=0 // pred_region
    _
  $region13: #{deep_tanh_net_forward.1} parent=0 // pred_fallthru
    _
  // Predicated region
  $region14: #{deep_tanh_net_forward.1} parent=0 // pred_check
    _
  $region15: #{deep_tanh_net_forward.1} parent=0 // pred_check_branch
    %25 = sbr.rel (0) target = $region17
  $region16: #{deep_tanh_net_forward.1} parent=0 // pred_region
    _
  $region17: #{deep_tanh_net_forward.1} parent=0 // pred_fallthru
    _
  // Predicated region
  $region18: #{deep_tanh_net_forward.1} parent=0 // pred_check
    _
  $region19: #{deep_tanh_net_forward.1} parent=0 // pred_check_branch
    %27 = sbr.rel (0) target = $region21
  $region20: #{deep_tanh_net_forward.1} parent=0 // pred_region
    _
  $region21: #{deep_tanh_net_forward.1} parent=0 // pred_fallthru
    _
  // Predicated region
  $region22: #{deep_tanh_net_forward.1} parent=0 // pred_check
    _
  $region23: #{deep_tanh_net_forward.1} parent=0 // pred_check_branch
    %29 = sbr.rel (0) target = $region25
  $region24: #{deep_tanh_net_forward.1} parent=0 // pred_region
    _
  $region25: #{deep_tanh_net_forward.1} parent=0 // pred_fallthru
    _
  // Predicated region
  $region26: #{deep_tanh_net_forward.1} parent=0 // pred_check
    _
  $region27: #{deep_tanh_net_forward.1} parent=0 // pred_check_branch
    %31 = sbr.rel (0) target = $region29
  $region28: #{deep_tanh_net_forward.1} parent=0 // pred_region
    _
  $region29: #{deep_tanh_net_forward.1} parent=0 // pred_fallthru
    _
  // Predicated region
  $region30: #{deep_tanh_net_forward.1} parent=0 // pred_check
    _
  $region31: #{deep_tanh_net_forward.1} parent=0 // pred_check_branch
    %33 = sbr.rel (0) target = $region33
  $region32: #{deep_tanh_net_forward.1} parent=0 // pred_region
    _
  $region33: #{deep_tanh_net_forward.1} parent=0 // pred_fallthru
    _
  // Predicated region
  $region34: #{deep_tanh_net_forward.1} parent=0 // pred_check
    _
  $region35: #{deep_tanh_net_forward.1} parent=0 // pred_check_branch
    %35 = sbr.rel (0) target = $region37
  $region36: #{deep_tanh_net_forward.1} parent=0 // pred_region
    _
  $region37: #{deep_tanh_net_forward.1} parent=0 // pred_fallthru
    _
  // Predicated region
  $region38: #{deep_tanh_net_forward.1} parent=0 // pred_check
    _
  $region39: #{deep_tanh_net_forward.1} parent=0 // pred_check_branch
    %37 = sbr.rel (0) target = $region41
  $region40: #{deep_tanh_net_forward.1} parent=0 // pred_region
    _
  $region41: #{deep_tanh_net_forward.1} parent=0 // pred_fallthru
    _
  // Predicated region
  $region42: #{deep_tanh_net_forward.1} parent=0 // pred_check
    _
  $region43: #{deep_tanh_net_forward.1} parent=0 // pred_check_branch
    %39 = sbr.rel (0) target = $region45
  $region44: #{deep_tanh_net_forward.1} parent=0 // pred_region
    _
  $region45: #{deep_tanh_net_forward.1} parent=0 // pred_fallthru
    _
  // Predicated region
  $region46: #{deep_tanh_net_forward.1} parent=0 // pred_check
    _
  $region47: #{deep_tanh_net_forward.1} parent=0 // pred_check_branch
    %41 = sbr.rel (0) target = $region49
  $region48: #{deep_tanh_net_forward.1} parent=0 // pred_region
    _
  $region49: #{deep_tanh_net_forward.1} parent=0 // pred_fallthru
    _
  // Predicated region
  $region50: #{deep_tanh_net_forward.1} parent=0 // pred_check
    _
  $region51: #{deep_tanh_net_forward.1} parent=0 // pred_check_branch
    %43 = sbr.rel (0) target = $region53
  $region52: #{deep_tanh_net_forward.1} parent=0 // pred_region
    _
  $region53: #{deep_tanh_net_forward.1} parent=0 // pred_fallthru
    _
  %v45 = vld [vmem:[%s0] sm:$0xf]
  %v46 = vld [vmem:[%s0 + $0x4] sm:$0xf]
  %v47 = vld [vmem:[%s0 + $0x8] sm:$0xf]
  %v48 = vld [vmem:[%s0 + $0xc] sm:$0xf]
  %v49 = vld [vmem:[%s0 + $0x10] sm:$0xf]
  %v50 = vld [vmem:[%s0 + $0x14] sm:$0xf]
  %v51 = vld [vmem:[%s0 + $0x18] sm:$0xf]
  %v52 = vld [vmem:[%s0 + $0x1c] sm:$0xf]
  %v53 = vld [vmem:[%s0 + $0x20] sm:$0xf]
  %v54 = vld [vmem:[%s0 + $0x24] sm:$0xf]
  %v55 = vld [vmem:[%s0 + $0x28] sm:$0xf]
  %v56 = vld [vmem:[%s0 + $0x2c] sm:$0xf]
  %v57 = vld [vmem:[%s0 + $0x30] sm:$0xf]
  %v58 = vld [vmem:[%s0 + $0x34] sm:$0xf]
  %v59 = vld [vmem:[%s0 + $0x38] sm:$0xf]
  %v60 = vld [vmem:[%s0 + $0x3c] sm:$0xf]
  %v61 = vld [vmem:[%s0 + $0x40] sm:$0xf]
  %v62 = vld [vmem:[%s0 + $0x44] sm:$0xf]
  %v63 = vld [vmem:[%s0 + $0x48] sm:$0xf]
  %v64 = vld [vmem:[%s0 + $0x4c] sm:$0xf]
  %v65 = vld [vmem:[%s0 + $0x50] sm:$0xf]
  %v66 = vld [vmem:[%s0 + $0x54] sm:$0xf]
  %v67 = vld [vmem:[%s0 + $0x58] sm:$0xf]
  %v68 = vld [vmem:[%s0 + $0x5c] sm:$0xf]
  %v69 = vld [vmem:[%s0 + $0x60] sm:$0xf]
  %v70 = vld [vmem:[%s0 + $0x64] sm:$0xf]
  %v71 = vld [vmem:[%s0 + $0x68] sm:$0xf]
  %v72 = vld [vmem:[%s0 + $0x6c] sm:$0xf]
  %v73 = vld [vmem:[%s0 + $0x70] sm:$0xf]
  %v74 = vld [vmem:[%s0 + $0x74] sm:$0xf]
  %v75 = vld [vmem:[%s0 + $0x78] sm:$0xf]
  %v76 = vld [vmem:[%s0 + $0x7c] sm:$0xf]
  %v77 = vld [vmem:[%s0 + $0x80] sm:$0xf]
  %v78 = vld [vmem:[%s0 + $0x84] sm:$0xf]
  %v79 = vld [vmem:[%s0 + $0x88] sm:$0xf]
  %v80 = vld [vmem:[%s0 + $0x8c] sm:$0xf]
  %v81 = vld [vmem:[%s0 + $0x90] sm:$0xf]
  %v82 = vld [vmem:[%s0 + $0x94] sm:$0xf]
  %v83 = vld [vmem:[%s0 + $0x98] sm:$0xf]
  %v84 = vld [vmem:[%s0 + $0x9c] sm:$0xf]
  %v85 = vld [vmem:[%s0 + $0xa0] sm:$0xf]
  %v86 = vld [vmem:[%s0 + $0xa4] sm:$0xf]
  %v87 = vld [vmem:[%s0 + $0xa8] sm:$0xf]
  %v88 = vld [vmem:[%s0 + $0xac] sm:$0xf]
  %v89 = vld [vmem:[%s0 + $0xb0] sm:$0xf]
  %v90 = vld [vmem:[%s0 + $0xb4] sm:$0xf]
  %v91 = vld [vmem:[%s0 + $0xb8] sm:$0xf]
  %v92 = vld [vmem:[%s0 + $0xbc] sm:$0xf]
  %v93 = vld [vmem:[%s0 + $0xc0] sm:$0xf]
  %v94 = vld [vmem:[%s0 + $0xc4] sm:$0xf]
  %v95 = vld [vmem:[%s0 + $0xc8] sm:$0xf]
  %v96 = vld [vmem:[%s0 + $0xcc] sm:$0xf]
  %v97 = vld [vmem:[%s0 + $0xd0] sm:$0xf]
  %v98 = vld [vmem:[%s0 + $0xd4] sm:$0xf]
  %v99 = vld [vmem:[%s0 + $0xd8] sm:$0xf]
  %v100 = vld [vmem:[%s0 + $0xdc] sm:$0xf]
  %v149 = vunpack.c.l.b16 %v45
  %v150 = vunpack.c.l.b16 %v46
  %v151 = vunpack.c.l.b16 %v47
  %v152 = vunpack.c.l.b16 %v48
  %v153 = vunpack.c.l.b16 %v49
  %v154 = vunpack.c.l.b16 %v50
  %v155 = vunpack.c.l.b16 %v51
  %v156 = vunpack.c.l.b16 %v52
  %v157 = vunpack.c.l.b16 %v53
  %v158 = vunpack.c.l.b16 %v54
  %v159 = vunpack.c.l.b16 %v55
  %v160 = vunpack.c.l.b16 %v56
  %v161 = vunpack.c.l.b16 %v57
  %v162 = vunpack.c.l.b16 %v58
  %v163 = vunpack.c.l.b16 %v59
  %v164 = vunpack.c.l.b16 %v60
  %v165 = vunpack.c.l.b16 %v61
  %v166 = vunpack.c.l.b16 %v62
  %v167 = vunpack.c.l.b16 %v63
  %v168 = vunpack.c.l.b16 %v64
  %v169 = vunpack.c.l.b16 %v65
  %v170 = vunpack.c.l.b16 %v66
  %v171 = vunpack.c.l.b16 %v67
  %v172 = vunpack.c.l.b16 %v68
  %v173 = vunpack.c.l.b16 %v69
  %v174 = vunpack.c.l.b16 %v70
  %v175 = vunpack.c.l.b16 %v71
  %v176 = vunpack.c.l.b16 %v72
  %v177 = vunpack.c.l.b16 %v73
  %v178 = vunpack.c.l.b16 %v74
  %v179 = vunpack.c.l.b16 %v75
  %v180 = vunpack.c.l.b16 %v76
  %v181 = vunpack.c.l.b16 %v77
  %v182 = vunpack.c.l.b16 %v78
  %v183 = vunpack.c.l.b16 %v79
  %v184 = vunpack.c.l.b16 %v80
  %v185 = vunpack.c.l.b16 %v81
  %v186 = vunpack.c.l.b16 %v82
  %v187 = vunpack.c.l.b16 %v83
  %v188 = vunpack.c.l.b16 %v84
  %v189 = vunpack.c.l.b16 %v85
  %v190 = vunpack.c.l.b16 %v86
  %v191 = vunpack.c.l.b16 %v87
  %v192 = vunpack.c.l.b16 %v88
  %v193 = vunpack.c.l.b16 %v89
  %v194 = vunpack.c.l.b16 %v90
  %v195 = vunpack.c.l.b16 %v91
  %v196 = vunpack.c.l.b16 %v92
  %v197 = vpack.c.b16 %v150, %v149
  %v198 = vpack.c.b16 %v152, %v151
  %v199 = vpack.c.b16 %v154, %v153
  %v200 = vpack.c.b16 %v156, %v155
  %v201 = vpack.c.b16 %v158, %v157
  %v202 = vpack.c.b16 %v160, %v159
  %v203 = vpack.c.b16 %v162, %v161
  %v204 = vpack.c.b16 %v164, %v163
  %v205 = vpack.c.b16 %v166, %v165
  %v206 = vpack.c.b16 %v168, %v167
  %v207 = vpack.c.b16 %v170, %v169
  %v208 = vpack.c.b16 %v172, %v171
  %v209 = vpack.c.b16 %v174, %v173
  %v210 = vpack.c.b16 %v176, %v175
  %v211 = vpack.c.b16 %v178, %v177
  %v212 = vpack.c.b16 %v180, %v179
  %v213 = vpack.c.b16 %v182, %v181
  %v214 = vpack.c.b16 %v184, %v183
  %v215 = vpack.c.b16 %v186, %v185
  %v216 = vpack.c.b16 %v188, %v187
  %v217 = vpack.c.b16 %v190, %v189
  %v218 = vpack.c.b16 %v192, %v191
  %v219 = vpack.c.b16 %v194, %v193
  %v220 = vpack.c.b16 %v196, %v195
  %v223 = vunpack.c.l.b16 %v93
  %v224 = vunpack.c.l.b16 %v94
  %v225 = vpack.c.b16 %v224, %v223
  %226 = vrot.lane.b32.xlu0 %v198, 28
  %v227 = vpop.permute.xlu0 %226
  %228 = vrot.lane.b32.xlu0 %v199, 28
  %v229 = vpop.permute.xlu0 %228
  %230 = vrot.lane.b32.xlu0 %v200, 28
  %v231 = vpop.permute.xlu0 %230
  %232 = vrot.lane.b32.xlu0 %v201, 28
  %v233 = vpop.permute.xlu0 %232
  %234 = vrot.lane.b32.xlu0 %v202, 28
  %v235 = vpop.permute.xlu0 %234
  %236 = vrot.lane.b32.xlu0 %v203, 28
  %v237 = vpop.permute.xlu0 %236
  %238 = vrot.lane.b32.xlu0 %v204, 28
  %v239 = vpop.permute.xlu0 %238
  %240 = vrot.lane.b32.xlu0 %v205, 28
  %v241 = vpop.permute.xlu0 %240
  %242 = vrot.lane.b32.xlu0 %v206, 28
  %v243 = vpop.permute.xlu0 %242
  %244 = vrot.lane.b32.xlu0 %v207, 28
  %v245 = vpop.permute.xlu0 %244
  %246 = vrot.lane.b32.xlu0 %v208, 28
  %v247 = vpop.permute.xlu0 %246
  %248 = vrot.lane.b32.xlu0 %v209, 28
  %v249 = vpop.permute.xlu0 %248
  %250 = vrot.lane.b32.xlu0 %v210, 28
  %v251 = vpop.permute.xlu0 %250
  %252 = vrot.lane.b32.xlu0 %v211, 28
  %v253 = vpop.permute.xlu0 %252
  %254 = vrot.lane.b32.xlu0 %v212, 28
  %v255 = vpop.permute.xlu0 %254
  %256 = vrot.lane.b32.xlu0 %v213, 28
  %v257 = vpop.permute.xlu0 %256
  %258 = vrot.lane.b32.xlu0 %v214, 28
  %v259 = vpop.permute.xlu0 %258
  %260 = vrot.lane.b32.xlu0 %v215, 28
  %v261 = vpop.permute.xlu0 %260
  %262 = vrot.lane.b32.xlu0 %v216, 28
  %v263 = vpop.permute.xlu0 %262
  %264 = vrot.lane.b32.xlu0 %v217, 28
  %v265 = vpop.permute.xlu0 %264
  %266 = vrot.lane.b32.xlu0 %v218, 28
  %v267 = vpop.permute.xlu0 %266
  %268 = vrot.lane.b32.xlu0 %v219, 28
  %v269 = vpop.permute.xlu0 %268
  %270 = vrot.lane.b32.xlu0 %v220, 28
  %v271 = vpop.permute.xlu0 %270
  %272 = vrot.lane.b32.xlu0 %v225, 28
  %v273 = vpop.permute.xlu0 %272
  %v276 = vunpack.c.l.b16 %v95
  %v277 = vunpack.c.l.b16 %v96
  %v278 = vpack.c.b16 %v277, %v276
  %279 = vrot.lane.b32.xlu0 %v199, 56
  %v280 = vpop.permute.xlu0 %279
  %281 = vrot.lane.b32.xlu0 %v200, 56
  %v282 = vpop.permute.xlu0 %281
  %283 = vrot.lane.b32.xlu0 %v201, 56
  %v284 = vpop.permute.xlu0 %283
  %285 = vrot.lane.b32.xlu0 %v202, 56
  %v286 = vpop.permute.xlu0 %285
  %287 = vrot.lane.b32.xlu0 %v203, 56
  %v288 = vpop.permute.xlu0 %287
  %289 = vrot.lane.b32.xlu0 %v204, 56
  %v290 = vpop.permute.xlu0 %289
  %291 = vrot.lane.b32.xlu0 %v205, 56
  %v292 = vpop.permute.xlu0 %291
  %293 = vrot.lane.b32.xlu0 %v206, 56
  %v294 = vpop.permute.xlu0 %293
  %295 = vrot.lane.b32.xlu0 %v207, 56
  %v296 = vpop.permute.xlu0 %295
  %297 = vrot.lane.b32.xlu0 %v208, 56
  %v298 = vpop.permute.xlu0 %297
  %299 = vrot.lane.b32.xlu0 %v209, 56
  %v300 = vpop.permute.xlu0 %299
  %301 = vrot.lane.b32.xlu0 %v210, 56
  %v302 = vpop.permute.xlu0 %301
  %303 = vrot.lane.b32.xlu0 %v211, 56
  %v304 = vpop.permute.xlu0 %303
  %305 = vrot.lane.b32.xlu0 %v212, 56
  %v306 = vpop.permute.xlu0 %305
  %307 = vrot.lane.b32.xlu0 %v213, 56
  %v308 = vpop.permute.xlu0 %307
  %309 = vrot.lane.b32.xlu0 %v214, 56
  %v310 = vpop.permute.xlu0 %309
  %311 = vrot.lane.b32.xlu0 %v215, 56
  %v312 = vpop.permute.xlu0 %311
  %313 = vrot.lane.b32.xlu0 %v216, 56
  %v314 = vpop.permute.xlu0 %313
  %315 = vrot.lane.b32.xlu0 %v217, 56
  %v316 = vpop.permute.xlu0 %315
  %317 = vrot.lane.b32.xlu0 %v218, 56
  %v318 = vpop.permute.xlu0 %317
  %319 = vrot.lane.b32.xlu0 %v219, 56
  %v320 = vpop.permute.xlu0 %319
  %321 = vrot.lane.b32.xlu0 %v220, 56
  %v322 = vpop.permute.xlu0 %321
  %323 = vrot.lane.b32.xlu0 %v225, 56
  %v324 = vpop.permute.xlu0 %323
  %325 = vrot.lane.b32.xlu0 %v278, 56
  %v326 = vpop.permute.xlu0 %325
  %v329 = vunpack.c.l.b16 %v97
  %v330 = vunpack.c.l.b16 %v98
  %v331 = vpack.c.b16 %v330, %v329
  %332 = vrot.lane.b32.xlu0 %v200, 84
  %v333 = vpop.permute.xlu0 %332
  %334 = vrot.lane.b32.xlu0 %v201, 84
  %v335 = vpop.permute.xlu0 %334
  %336 = vrot.lane.b32.xlu0 %v202, 84
  %v337 = vpop.permute.xlu0 %336
  %338 = vrot.lane.b32.xlu0 %v203, 84
  %v339 = vpop.permute.xlu0 %338
  %340 = vrot.lane.b32.xlu0 %v204, 84
  %v341 = vpop.permute.xlu0 %340
  %342 = vrot.lane.b32.xlu0 %v205, 84
  %v343 = vpop.permute.xlu0 %342
  %344 = vrot.lane.b32.xlu0 %v206, 84
  %v345 = vpop.permute.xlu0 %344
  %346 = vrot.lane.b32.xlu0 %v207, 84
  %v347 = vpop.permute.xlu0 %346
  %348 = vrot.lane.b32.xlu0 %v208, 84
  %v349 = vpop.permute.xlu0 %348
  %350 = vrot.lane.b32.xlu0 %v209, 84
  %v351 = vpop.permute.xlu0 %350
  %352 = vrot.lane.b32.xlu0 %v210, 84
  %v353 = vpop.permute.xlu0 %352
  %354 = vrot.lane.b32.xlu0 %v211, 84
  %v355 = vpop.permute.xlu0 %354
  %356 = vrot.lane.b32.xlu0 %v212, 84
  %v357 = vpop.permute.xlu0 %356
  %358 = vrot.lane.b32.xlu0 %v213, 84
  %v359 = vpop.permute.xlu0 %358
  %360 = vrot.lane.b32.xlu0 %v214, 84
  %v361 = vpop.permute.xlu0 %360
  %362 = vrot.lane.b32.xlu0 %v215, 84
  %v363 = vpop.permute.xlu0 %362
  %364 = vrot.lane.b32.xlu0 %v216, 84
  %v365 = vpop.permute.xlu0 %364
  %366 = vrot.lane.b32.xlu0 %v217, 84
  %v367 = vpop.permute.xlu0 %366
  %368 = vrot.lane.b32.xlu0 %v218, 84
  %v369 = vpop.permute.xlu0 %368
  %370 = vrot.lane.b32.xlu0 %v219, 84
  %v371 = vpop.permute.xlu0 %370
  %372 = vrot.lane.b32.xlu0 %v220, 84
  %v373 = vpop.permute.xlu0 %372
  %374 = vrot.lane.b32.xlu0 %v225, 84
  %v375 = vpop.permute.xlu0 %374
  %376 = vrot.lane.b32.xlu0 %v278, 84
  %v377 = vpop.permute.xlu0 %376
  %378 = vrot.lane.b32.xlu0 %v331, 84
  %v379 = vpop.permute.xlu0 %378
  %v382 = vunpack.c.l.b16 %v99
  %v383 = vunpack.c.l.b16 %v100
  %v384 = vpack.c.b16 %v383, %v382
  %385 = vrot.lane.b32.xlu0 %v201, 112
  %v386 = vpop.permute.xlu0 %385
  %387 = vrot.lane.b32.xlu0 %v202, 112
  %v388 = vpop.permute.xlu0 %387
  %389 = vrot.lane.b32.xlu0 %v203, 112
  %v390 = vpop.permute.xlu0 %389
  %391 = vrot.lane.b32.xlu0 %v204, 112
  %v392 = vpop.permute.xlu0 %391
  %393 = vrot.lane.b32.xlu0 %v205, 112
  %v394 = vpop.permute.xlu0 %393
  %395 = vrot.lane.b32.xlu0 %v206, 112
  %v396 = vpop.permute.xlu0 %395
  %397 = vrot.lane.b32.xlu0 %v207, 112
  %v398 = vpop.permute.xlu0 %397
  %399 = vrot.lane.b32.xlu0 %v208, 112
  %v400 = vpop.permute.xlu0 %399
  %401 = vrot.lane.b32.xlu0 %v209, 112
  %v402 = vpop.permute.xlu0 %401
  %403 = vrot.lane.b32.xlu0 %v210, 112
  %v404 = vpop.permute.xlu0 %403
  %405 = vrot.lane.b32.xlu0 %v211, 112
  %v406 = vpop.permute.xlu0 %405
  %407 = vrot.lane.b32.xlu0 %v212, 112
  %v408 = vpop.permute.xlu0 %407
  %409 = vrot.lane.b32.xlu0 %v213, 112
  %v410 = vpop.permute.xlu0 %409
  %411 = vrot.lane.b32.xlu0 %v214, 112
  %v412 = vpop.permute.xlu0 %411
  %413 = vrot.lane.b32.xlu0 %v215, 112
  %v414 = vpop.permute.xlu0 %413
  %415 = vrot.lane.b32.xlu0 %v216, 112
  %v416 = vpop.permute.xlu0 %415
  %417 = vrot.lane.b32.xlu0 %v217, 112
  %v418 = vpop.permute.xlu0 %417
  %419 = vrot.lane.b32.xlu0 %v218, 112
  %v420 = vpop.permute.xlu0 %419
  %421 = vrot.lane.b32.xlu0 %v219, 112
  %v422 = vpop.permute.xlu0 %421
  %423 = vrot.lane.b32.xlu0 %v220, 112
  %v424 = vpop.permute.xlu0 %423
  %425 = vrot.lane.b32.xlu0 %v225, 112
  %v426 = vpop.permute.xlu0 %425
  %427 = vrot.lane.b32.xlu0 %v278, 112
  %v428 = vpop.permute.xlu0 %427
  %429 = vrot.lane.b32.xlu0 %v331, 112
  %v430 = vpop.permute.xlu0 %429
  %431 = vrot.lane.b32.xlu0 %v384, 112
  %v432 = vpop.permute.xlu0 %431
  %vm433 = vcmask 228352
  %v436 = vsel %vm433, %v197, %v227
  %v439 = vsel %vm433, %v198, %v229
  %v442 = vsel %vm433, %v199, %v231
  %v445 = vsel %vm433, %v200, %v233
  %v448 = vsel %vm433, %v201, %v235
  %v451 = vsel %vm433, %v202, %v237
  %v454 = vsel %vm433, %v203, %v239
  %v457 = vsel %vm433, %v204, %v241
  %v460 = vsel %vm433, %v205, %v243
  %v463 = vsel %vm433, %v206, %v245
  %v466 = vsel %vm433, %v207, %v247
  %v469 = vsel %vm433, %v208, %v249
  %v472 = vsel %vm433, %v209, %v251
  %v475 = vsel %vm433, %v210, %v253
  %v478 = vsel %vm433, %v211, %v255
  %v481 = vsel %vm433, %v212, %v257
  %v484 = vsel %vm433, %v213, %v259
  %v487 = vsel %vm433, %v214, %v261
  %v490 = vsel %vm433, %v215, %v263
  %v493 = vsel %vm433, %v216, %v265
  %v496 = vsel %vm433, %v217, %v267
  %v499 = vsel %vm433, %v218, %v269
  %v502 = vsel %vm433, %v219, %v271
  %v505 = vsel %vm433, %v220, %v273
  %vm506 = vcmask 457728
  %v508 = vsel %vm506, %v436, %v280
  %v510 = vsel %vm506, %v439, %v282
  %v512 = vsel %vm506, %v442, %v284
  %v514 = vsel %vm506, %v445, %v286
  %v516 = vsel %vm506, %v448, %v288
  %v518 = vsel %vm506, %v451, %v290
  %v520 = vsel %vm506, %v454, %v292
  %v522 = vsel %vm506, %v457, %v294
  %v524 = vsel %vm506, %v460, %v296
  %v526 = vsel %vm506, %v463, %v298
  %v528 = vsel %vm506, %v466, %v300
  %v530 = vsel %vm506, %v469, %v302
  %v532 = vsel %vm506, %v472, %v304
  %v534 = vsel %vm506, %v475, %v306
  %v536 = vsel %vm506, %v478, %v308
  %v538 = vsel %vm506, %v481, %v310
  %v540 = vsel %vm506, %v484, %v312
  %v542 = vsel %vm506, %v487, %v314
  %v544 = vsel %vm506, %v490, %v316
  %v546 = vsel %vm506, %v493, %v318
  %v548 = vsel %vm506, %v496, %v320
  %v550 = vsel %vm506, %v499, %v322
  %v552 = vsel %vm506, %v502, %v324
  %v554 = vsel %vm506, %v505, %v326
  %vm555 = vcmask 687104
  %v557 = vsel %vm555, %v508, %v333
  %v559 = vsel %vm555, %v510, %v335
  %v561 = vsel %vm555, %v512, %v337
  %v563 = vsel %vm555, %v514, %v339
  %v565 = vsel %vm555, %v516, %v341
  %v567 = vsel %vm555, %v518, %v343
  %v569 = vsel %vm555, %v520, %v345
  %v571 = vsel %vm555, %v522, %v347
  %v573 = vsel %vm555, %v524, %v349
  %v575 = vsel %vm555, %v526, %v351
  %v577 = vsel %vm555, %v528, %v353
  %v579 = vsel %vm555, %v530, %v355
  %v581 = vsel %vm555, %v532, %v357
  %v583 = vsel %vm555, %v534, %v359
  %v585 = vsel %vm555, %v536, %v361
  %v587 = vsel %vm555, %v538, %v363
  %v589 = vsel %vm555, %v540, %v365
  %v591 = vsel %vm555, %v542, %v367
  %v593 = vsel %vm555, %v544, %v369
  %v595 = vsel %vm555, %v546, %v371
  %v597 = vsel %vm555, %v548, %v373
  %v599 = vsel %vm555, %v550, %v375
  %v601 = vsel %vm555, %v552, %v377
  %v603 = vsel %vm555, %v554, %v379
  %vm604 = vcmask 916480
  %v606 = vsel %vm604, %v557, %v386
  %v609 = vsel %vm604, %v559, %v388
  %v612 = vsel %vm604, %v561, %v390
  %v615 = vsel %vm604, %v563, %v392
  %v618 = vsel %vm604, %v565, %v394
  %v621 = vsel %vm604, %v567, %v396
  %v624 = vsel %vm604, %v569, %v398
  %v627 = vsel %vm604, %v571, %v400
  %v630 = vsel %vm604, %v573, %v402
  %v633 = vsel %vm604, %v575, %v404
  %v636 = vsel %vm604, %v577, %v406
  %v639 = vsel %vm604, %v579, %v408
  %v642 = vsel %vm604, %v581, %v410
  %v645 = vsel %vm604, %v583, %v412
  %v648 = vsel %vm604, %v585, %v414
  %v651 = vsel %vm604, %v587, %v416
  %v654 = vsel %vm604, %v589, %v418
  %v657 = vsel %vm604, %v591, %v420
  %v660 = vsel %vm604, %v593, %v422
  %v663 = vsel %vm604, %v595, %v424
  %v666 = vsel %vm604, %v597, %v426
  %v669 = vsel %vm604, %v599, %v428
  %v672 = vsel %vm604, %v601, %v430
  %v675 = vsel %vm604, %v603, %v432
  %v677 = vld [vmem:[%s1] sm:$0xff]
  %v678 = vld [vmem:[%s1 + $0x8] sm:$0xff]
  %v679 = vld [vmem:[%s1 + $0x10] sm:$0xff]
  %v680 = vld [vmem:[%s1 + $0x18] sm:$0xff]
  %v681 = vld [vmem:[%s1 + $0x20] sm:$0xff]
  %v682 = vld [vmem:[%s1 + $0x28] sm:$0xff]
  %v683 = vld [vmem:[%s1 + $0x30] sm:$0xff]
  %v684 = vld [vmem:[%s1 + $0x38] sm:$0xff]
  %v685 = vld [vmem:[%s1 + $0x40] sm:$0xff]
  %v686 = vld [vmem:[%s1 + $0x48] sm:$0xff]
  %v687 = vld [vmem:[%s1 + $0x50] sm:$0xff]
  %v688 = vld [vmem:[%s1 + $0x58] sm:$0xff]
  %v689 = vld [vmem:[%s1 + $0x60] sm:$0xff]
  %v690 = vld [vmem:[%s1 + $0x68] sm:$0xff]
  %v691 = vld [vmem:[%s1 + $0x70] sm:$0xff]
  %v692 = vld [vmem:[%s1 + $0x78] sm:$0xff]
  %v693 = vld [vmem:[%s1 + $0x80] sm:$0xff]
  %v694 = vld [vmem:[%s1 + $0x88] sm:$0x33]
  %v695 = vld [vmem:[%s2] sm:$0x3]
  %v697 = vlaneseq
  %v698 = vshrl.u32 %v697, 7
  %v699 = vsub.s32 0, %v698
  %v700 = vrot.slane %v695, %v699
  %v701 = vlaneseq
  %v702 = vshrl.u32 %v701, 7
  %v703 = vsub.s32 1, %v702
  %v704 = vrot.slane %v695, %v703
  %v725 = vunpack.c.l.b16 %v677
  %v726 = vunpack.c.h.b16 %v677
  %v727 = vunpack.c.l.b16 %v678
  %v728 = vunpack.c.h.b16 %v678
  %v729 = vunpack.c.l.b16 %v679
  %v730 = vunpack.c.h.b16 %v679
  %v731 = vunpack.c.l.b16 %v680
  %v732 = vunpack.c.h.b16 %v680
  %v733 = vunpack.c.l.b16 %v681
  %v734 = vunpack.c.h.b16 %v681
  %v735 = vunpack.c.l.b16 %v682
  %v736 = vunpack.c.h.b16 %v682
  %v737 = vunpack.c.l.b16 %v683
  %v738 = vunpack.c.h.b16 %v683
  %v739 = vunpack.c.l.b16 %v684
  %v740 = vunpack.c.h.b16 %v684
  %v741 = vunpack.c.l.b16 %v685
  %v742 = vunpack.c.h.b16 %v685
  %v743 = vunpack.c.l.b16 %v686
  %v744 = vunpack.c.h.b16 %v686
  %v745 = vunpack.c.l.b16 %v687
  %v746 = vunpack.c.h.b16 %v687
  %v747 = vunpack.c.l.b16 %v688
  %v748 = vunpack.c.h.b16 %v688
  %v749 = vunpack.c.l.b16 %v689
  %v750 = vunpack.c.h.b16 %v689
  %v751 = vunpack.c.l.b16 %v690
  %v752 = vunpack.c.h.b16 %v690
  %v753 = vunpack.c.l.b16 %v691
  %v754 = vunpack.c.h.b16 %v691
  %v755 = vunpack.c.l.b16 %v692
  %v756 = vunpack.c.h.b16 %v692
  %v757 = vunpack.c.l.b16 %v693
  %v758 = vunpack.c.h.b16 %v693
  %v759 = vunpack.c.l.b16 %v694
  %v760 = vunpack.c.h.b16 %v694
  %v761 = vpack.c.b16 %v727, %v725
  %v762 = vpack.c.b16 %v728, %v726
  %v763 = vpack.c.b16 %v731, %v729
  %v764 = vpack.c.b16 %v732, %v730
  %v765 = vpack.c.b16 %v735, %v733
  %v766 = vpack.c.b16 %v736, %v734
  %v767 = vpack.c.b16 %v739, %v737
  %v768 = vpack.c.b16 %v740, %v738
  %v769 = vpack.c.b16 %v743, %v741
  %v770 = vpack.c.b16 %v744, %v742
  %v771 = vpack.c.b16 %v747, %v745
  %v772 = vpack.c.b16 %v748, %v746
  %v773 = vpack.c.b16 %v751, %v749
  %v774 = vpack.c.b16 %v752, %v750
  %v775 = vpack.c.b16 %v755, %v753
  %v776 = vpack.c.b16 %v756, %v754
  %v777 = vpack.c.b16 %v759, %v757
  %v778 = vpack.c.b16 %v760, %v758
  %vm795 = vcmask 97280
  %v796 = vsel %vm795, %v386, 0
  %v798 = vsel %vm795, %v388, 0
  %v800 = vsel %vm795, %v390, 0
  %v802 = vsel %vm795, %v392, 0
  %v804 = vsel %vm795, %v394, 0
  %v806 = vsel %vm795, %v396, 0
  %v808 = vsel %vm795, %v398, 0
  %v810 = vsel %vm795, %v400, 0
  %v812 = vsel %vm795, %v402, 0
  %v814 = vsel %vm795, %v404, 0
  %v816 = vsel %vm795, %v406, 0
  %v818 = vsel %vm795, %v408, 0
  %v820 = vsel %vm795, %v410, 0
  %v822 = vsel %vm795, %v412, 0
  %v824 = vsel %vm795, %v414, 0
  %v826 = vsel %vm795, %v416, 0
  %v828 = vsel %vm795, %v418, 0
  %v830 = vsel %vm795, %v420, 0
  %v832 = vsel %vm795, %v422, 0
  %v834 = vsel %vm795, %v424, 0
  %v836 = vsel %vm795, %v426, 0
  %v838 = vsel %vm795, %v428, 0
  %v840 = vsel %vm795, %v430, 0
  %v842 = vsel %vm795, %v432, 0
  %vm844 = vcmask 1045504
  %v846 = vsel %vm844, %v777, 0
  %v849 = vsel %vm844, %v778, 0
  %851 = vmatprep.subr.bf16.mxu0 %v762
  %852 = vmatpush1.bf16.msra.mxu0 %v761
  %853 = vmatprep.subr.bf16.mxu0 %v764
  %854 = vmatpush1.bf16.msra.mxu0 %v763
  %855 = vmatprep.subr.bf16.mxu0 %v766
  %856 = vmatpush1.bf16.msra.mxu0 %v765
  %857 = vmatprep.subr.bf16.mxu0 %v768
  %858 = vmatpush1.bf16.msra.mxu0 %v767
  %859 = vmatprep.subr.bf16.mxu0 %v770
  %860 = vmatpush1.bf16.msra.mxu0 %v769
  %861 = vmatprep.subr.bf16.mxu0 %v772
  %862 = vmatpush1.bf16.msra.mxu0 %v771
  %863 = vmatprep.subr.bf16.mxu0 %v774
  %864 = vmatpush1.bf16.msra.mxu0 %v773
  %865 = vmatprep.subr.bf16.mxu0 %v776
  %866 = vmatpush1.bf16.msra.mxu0 %v775
  %867 = vmatprep.subr.bf16.mxu0 %v849
  %868 = vmatpush1.bf16.msra.mxu0 %v846
  %869 = vmatprep.subr.bf16.mxu0 0
  %870 = vmatpush1.bf16.msra.mxu0 0
  %871 = vmatprep.subr.bf16.mxu0 0
  %872 = vmatpush1.bf16.msra.mxu0 0
  %873 = vmatprep.subr.bf16.mxu0 0
  %874 = vmatpush1.bf16.msra.mxu0 0
  %875 = vmatprep.subr.bf16.mxu0 0
  %876 = vmatpush1.bf16.msra.mxu0 0
  %877 = vmatprep.subr.bf16.mxu0 0
  %878 = vmatpush1.bf16.msra.mxu0 0
  %879 = vmatprep.subr.bf16.mxu0 0
  %880 = vmatpush1.bf16.msra.mxu0 0
  %881 = vmatprep.subr.bf16.mxu0 0
  %882 = vmatpush1.bf16.msra.mxu0 0
  %883 = vmatprep.mubr.bf16.mxu0 %v796
  %884 = vmatmul.mubr.bf16.gmra.mrb[0].mxu0 %v606
  %v885 = vpop.f32.mrb[0].mxu0
  %v886 = vadd.f32 %v700, %v885
  %v887 = vpop.f32.mrb[0].mxu0
  %v888 = vadd.f32 %v704, %v887
  %v889 = vpop.f32.mrb[0].mxu0
  %v890 = vadd.f32 %v700, %v889
  %v891 = vpop.f32.mrb[0].mxu0
  %v892 = vadd.f32 %v704, %v891
  %893 = vmatprep.mubr.bf16.mxu0 %v798
  %894 = vmatmul.mubr.bf16.gmra.mrb[0].mxu0 %v609
  %v895 = vpop.f32.mrb[0].mxu0
  %v896 = vadd.f32 %v700, %v895
  %v897 = vpop.f32.mrb[0].mxu0
  %v898 = vadd.f32 %v704, %v897
  %v899 = vpop.f32.mrb[0].mxu0
  %v900 = vadd.f32 %v700, %v899
  %v901 = vpop.f32.mrb[0].mxu0
  %v902 = vadd.f32 %v704, %v901
  %903 = vmatprep.mubr.bf16.mxu0 %v800
  %904 = vmatmul.mubr.bf16.gmra.mrb[0].mxu0 %v612
  %v905 = vpop.f32.mrb[0].mxu0
  %v906 = vadd.f32 %v700, %v905
  %v907 = vpop.f32.mrb[0].mxu0
  %v908 = vadd.f32 %v704, %v907
  %v909 = vpop.f32.mrb[0].mxu0
  %v910 = vadd.f32 %v700, %v909
  %v911 = vpop.f32.mrb[0].mxu0
  %v912 = vadd.f32 %v704, %v911
  %913 = vmatprep.mubr.bf16.mxu0 %v802
  %914 = vmatmul.mubr.bf16.gmra.mrb[0].mxu0 %v615
  %v915 = vpop.f32.mrb[0].mxu0
  %v916 = vadd.f32 %v700, %v915
  %v917 = vpop.f32.mrb[0].mxu0
  %v918 = vadd.f32 %v704, %v917
  %v919 = vpop.f32.mrb[0].mxu0
  %v920 = vadd.f32 %v700, %v919
  %v921 = vpop.f32.mrb[0].mxu0
  %v922 = vadd.f32 %v704, %v921
  %923 = vmatprep.mubr.bf16.mxu0 %v804
  %924 = vmatmul.mubr.bf16.gmra.mrb[0].mxu0 %v618
  %v925 = vpop.f32.mrb[0].mxu0
  %v926 = vadd.f32 %v700, %v925
  %v927 = vpop.f32.mrb[0].mxu0
  %v928 = vadd.f32 %v704, %v927
  %v929 = vpop.f32.mrb[0].mxu0
  %v930 = vadd.f32 %v700, %v929
  %v931 = vpop.f32.mrb[0].mxu0
  %v932 = vadd.f32 %v704, %v931
  %933 = vmatprep.mubr.bf16.mxu0 %v806
  %934 = vmatmul.mubr.bf16.gmra.mrb[0].mxu0 %v621
  %v935 = vpop.f32.mrb[0].mxu0
  %v936 = vadd.f32 %v700, %v935
  %v937 = vpop.f32.mrb[0].mxu0
  %v938 = vadd.f32 %v704, %v937
  %v939 = vpop.f32.mrb[0].mxu0
  %v940 = vadd.f32 %v700, %v939
  %v941 = vpop.f32.mrb[0].mxu0
  %v942 = vadd.f32 %v704, %v941
  %943 = vmatprep.mubr.bf16.mxu0 %v808
  %944 = vmatmul.mubr.bf16.gmra.mrb[0].mxu0 %v624
  %v945 = vpop.f32.mrb[0].mxu0
  %v946 = vadd.f32 %v700, %v945
  %v947 = vpop.f32.mrb[0].mxu0
  %v948 = vadd.f32 %v704, %v947
  %v949 = vpop.f32.mrb[0].mxu0
  %v950 = vadd.f32 %v700, %v949
  %v951 = vpop.f32.mrb[0].mxu0
  %v952 = vadd.f32 %v704, %v951
  %953 = vmatprep.mubr.bf16.mxu0 %v810
  %954 = vmatmul.mubr.bf16.gmra.mrb[0].mxu0 %v627
  %v955 = vpop.f32.mrb[0].mxu0
  %v956 = vadd.f32 %v700, %v955
  %v957 = vpop.f32.mrb[0].mxu0
  %v958 = vadd.f32 %v704, %v957
  %v959 = vpop.f32.mrb[0].mxu0
  %v960 = vadd.f32 %v700, %v959
  %v961 = vpop.f32.mrb[0].mxu0
  %v962 = vadd.f32 %v704, %v961
  %963 = vmatprep.mubr.bf16.mxu0 %v812
  %964 = vmatmul.mubr.bf16.gmra.mrb[0].mxu0 %v630
  %v965 = vpop.f32.mrb[0].mxu0
  %v966 = vadd.f32 %v700, %v965
  %v967 = vpop.f32.mrb[0].mxu0
  %v968 = vadd.f32 %v704, %v967
  %v969 = vpop.f32.mrb[0].mxu0
  %v970 = vadd.f32 %v700, %v969
  %v971 = vpop.f32.mrb[0].mxu0
  %v972 = vadd.f32 %v704, %v971
  %973 = vmatprep.mubr.bf16.mxu0 %v814
  %974 = vmatmul.mubr.bf16.gmra.mrb[0].mxu0 %v633
  %v975 = vpop.f32.mrb[0].mxu0
  %v976 = vadd.f32 %v700, %v975
  %v977 = vpop.f32.mrb[0].mxu0
  %v978 = vadd.f32 %v704, %v977
  %v979 = vpop.f32.mrb[0].mxu0
  %v980 = vadd.f32 %v700, %v979
  %v981 = vpop.f32.mrb[0].mxu0
  %v982 = vadd.f32 %v704, %v981
  %983 = vmatprep.mubr.bf16.mxu0 %v816
  %984 = vmatmul.mubr.bf16.gmra.mrb[0].mxu0 %v636
  %v985 = vpop.f32.mrb[0].mxu0
  %v986 = vadd.f32 %v700, %v985
  %v987 = vpop.f32.mrb[0].mxu0
  %v988 = vadd.f32 %v704, %v987
  %v989 = vpop.f32.mrb[0].mxu0
  %v990 = vadd.f32 %v700, %v989
  %v991 = vpop.f32.mrb[0].mxu0
  %v992 = vadd.f32 %v704, %v991
  %993 = vmatprep.mubr.bf16.mxu0 %v818
  %994 = vmatmul.mubr.bf16.gmra.mrb[0].mxu0 %v639
  %v995 = vpop.f32.mrb[0].mxu0
  %v996 = vadd.f32 %v700, %v995
  %v997 = vpop.f32.mrb[0].mxu0
  %v998 = vadd.f32 %v704, %v997
  %v999 = vpop.f32.mrb[0].mxu0
  %v1000 = vadd.f32 %v700, %v999
  %v1001 = vpop.f32.mrb[0].mxu0
  %v1002 = vadd.f32 %v704, %v1001
  %1003 = vmatprep.mubr.bf16.mxu0 %v820
  %1004 = vmatmul.mubr.bf16.gmra.mrb[0].mxu0 %v642
  %v1005 = vpop.f32.mrb[0].mxu0
  %v1006 = vadd.f32 %v700, %v1005
  %v1007 = vpop.f32.mrb[0].mxu0
  %v1008 = vadd.f32 %v704, %v1007
  %v1009 = vpop.f32.mrb[0].mxu0
  %v1010 = vadd.f32 %v700, %v1009
  %v1011 = vpop.f32.mrb[0].mxu0
  %v1012 = vadd.f32 %v704, %v1011
  %1013 = vmatprep.mubr.bf16.mxu0 %v822
  %1014 = vmatmul.mubr.bf16.gmra.mrb[0].mxu0 %v645
  %v1015 = vpop.f32.mrb[0].mxu0
  %v1016 = vadd.f32 %v700, %v1015
  %v1017 = vpop.f32.mrb[0].mxu0
  %v1018 = vadd.f32 %v704, %v1017
  %v1019 = vpop.f32.mrb[0].mxu0
  %v1020 = vadd.f32 %v700, %v1019
  %v1021 = vpop.f32.mrb[0].mxu0
  %v1022 = vadd.f32 %v704, %v1021
  %1023 = vmatprep.mubr.bf16.mxu0 %v824
  %1024 = vmatmul.mubr.bf16.gmra.mrb[0].mxu0 %v648
  %v1025 = vpop.f32.mrb[0].mxu0
  %v1026 = vadd.f32 %v700, %v1025
  %v1027 = vpop.f32.mrb[0].mxu0
  %v1028 = vadd.f32 %v704, %v1027
  %v1029 = vpop.f32.mrb[0].mxu0
  %v1030 = vadd.f32 %v700, %v1029
  %v1031 = vpop.f32.mrb[0].mxu0
  %v1032 = vadd.f32 %v704, %v1031
  %1033 = vmatprep.mubr.bf16.mxu0 %v826
  %1034 = vmatmul.mubr.bf16.gmra.mrb[0].mxu0 %v651
  %v1035 = vpop.f32.mrb[0].mxu0
  %v1036 = vadd.f32 %v700, %v1035
  %v1037 = vpop.f32.mrb[0].mxu0
  %v1038 = vadd.f32 %v704, %v1037
  %v1039 = vpop.f32.mrb[0].mxu0
  %v1040 = vadd.f32 %v700, %v1039
  %v1041 = vpop.f32.mrb[0].mxu0
  %v1042 = vadd.f32 %v704, %v1041
  %1043 = vmatprep.mubr.bf16.mxu0 %v828
  %1044 = vmatmul.mubr.bf16.gmra.mrb[0].mxu0 %v654
  %v1045 = vpop.f32.mrb[0].mxu0
  %v1046 = vadd.f32 %v700, %v1045
  %v1047 = vpop.f32.mrb[0].mxu0
  %v1048 = vadd.f32 %v704, %v1047
  %v1049 = vpop.f32.mrb[0].mxu0
  %v1050 = vadd.f32 %v700, %v1049
  %v1051 = vpop.f32.mrb[0].mxu0
  %v1052 = vadd.f32 %v704, %v1051
  %1053 = vmatprep.mubr.bf16.mxu0 %v830
  %1054 = vmatmul.mubr.bf16.gmra.mrb[0].mxu0 %v657
  %v1055 = vpop.f32.mrb[0].mxu0
  %v1056 = vadd.f32 %v700, %v1055
  %v1057 = vpop.f32.mrb[0].mxu0
  %v1058 = vadd.f32 %v704, %v1057
  %v1059 = vpop.f32.mrb[0].mxu0
  %v1060 = vadd.f32 %v700, %v1059
  %v1061 = vpop.f32.mrb[0].mxu0
  %v1062 = vadd.f32 %v704, %v1061
  %1063 = vmatprep.mubr.bf16.mxu0 %v832
  %1064 = vmatmul.mubr.bf16.gmra.mrb[0].mxu0 %v660
  %v1065 = vpop.f32.mrb[0].mxu0
  %v1066 = vadd.f32 %v700, %v1065
  %v1067 = vpop.f32.mrb[0].mxu0
  %v1068 = vadd.f32 %v704, %v1067
  %v1069 = vpop.f32.mrb[0].mxu0
  %v1070 = vadd.f32 %v700, %v1069
  %v1071 = vpop.f32.mrb[0].mxu0
  %v1072 = vadd.f32 %v704, %v1071
  %1073 = vmatprep.mubr.bf16.mxu0 %v834
  %1074 = vmatmul.mubr.bf16.gmra.mrb[0].mxu0 %v663
  %v1075 = vpop.f32.mrb[0].mxu0
  %v1076 = vadd.f32 %v700, %v1075
  %v1077 = vpop.f32.mrb[0].mxu0
  %v1078 = vadd.f32 %v704, %v1077
  %v1079 = vpop.f32.mrb[0].mxu0
  %v1080 = vadd.f32 %v700, %v1079
  %v1081 = vpop.f32.mrb[0].mxu0
  %v1082 = vadd.f32 %v704, %v1081
  %1083 = vmatprep.mubr.bf16.mxu0 %v836
  %1084 = vmatmul.mubr.bf16.gmra.mrb[0].mxu0 %v666
  %v1085 = vpop.f32.mrb[0].mxu0
  %v1086 = vadd.f32 %v700, %v1085
  %v1087 = vpop.f32.mrb[0].mxu0
  %v1088 = vadd.f32 %v704, %v1087
  %v1089 = vpop.f32.mrb[0].mxu0
  %v1090 = vadd.f32 %v700, %v1089
  %v1091 = vpop.f32.mrb[0].mxu0
  %v1092 = vadd.f32 %v704, %v1091
  %1093 = vmatprep.mubr.bf16.mxu0 %v838
  %1094 = vmatmul.mubr.bf16.gmra.mrb[0].mxu0 %v669
  %v1095 = vpop.f32.mrb[0].mxu0
  %v1096 = vadd.f32 %v700, %v1095
  %v1097 = vpop.f32.mrb[0].mxu0
  %v1098 = vadd.f32 %v704, %v1097
  %v1099 = vpop.f32.mrb[0].mxu0
  %v1100 = vadd.f32 %v700, %v1099
  %v1101 = vpop.f32.mrb[0].mxu0
  %v1102 = vadd.f32 %v704, %v1101
  %1103 = vmatprep.mubr.bf16.mxu0 %v840
  %1104 = vmatmul.mubr.bf16.gmra.mrb[0].mxu0 %v672
  %v1105 = vpop.f32.mrb[0].mxu0
  %v1106 = vadd.f32 %v700, %v1105
  %v1107 = vpop.f32.mrb[0].mxu0
  %v1108 = vadd.f32 %v704, %v1107
  %v1109 = vpop.f32.mrb[0].mxu0
  %v1110 = vadd.f32 %v700, %v1109
  %v1111 = vpop.f32.mrb[0].mxu0
  %v1112 = vadd.f32 %v704, %v1111
  %1113 = vmatprep.mubr.bf16.mxu0 %v842
  %1114 = vmatmul.mubr.bf16.gmra.mrb[0].mxu0 %v675
  %v1115 = vpop.f32.mrb[0].mxu0
  %v1116 = vadd.f32 %v700, %v1115
  %v1117 = vpop.f32.mrb[0].mxu0
  %v1118 = vadd.f32 %v704, %v1117
  %v1119 = vpop.f32.mrb[0].mxu0
  %v1120 = vadd.f32 %v700, %v1119
  %v1121 = vpop.f32.mrb[0].mxu0
  %v1122 = vadd.f32 %v704, %v1121
  %1123 = vdwg.mxu0
  %v1124 = vmax.f32 %v886, %v896
  %v1125 = vmax.f32 %v888, %v898
  %v1126 = vmax.f32 %v890, %v900
  %v1127 = vmax.f32 %v892, %v902
  %v1128 = vmax.f32 %v906, %v916
  %v1129 = vmax.f32 %v908, %v918
  %v1130 = vmax.f32 %v910, %v920
  %v1131 = vmax.f32 %v912, %v922
  %v1132 = vmax.f32 %v926, %v936
  %v1133 = vmax.f32 %v928, %v938
  %v1134 = vmax.f32 %v930, %v940
  %v1135 = vmax.f32 %v932, %v942
  %v1136 = vmax.f32 %v946, %v956
  %v1137 = vmax.f32 %v948, %v958
  %v1138 = vmax.f32 %v950, %v960
  %v1139 = vmax.f32 %v952, %v962
  %v1140 = vmax.f32 %v966, %v976
  %v1141 = vmax.f32 %v968, %v978
  %v1142 = vmax.f32 %v970, %v980
  %v1143 = vmax.f32 %v972, %v982
  %v1144 = vmax.f32 %v986, %v996
  %v1145 = vmax.f32 %v988, %v998
  %v1146 = vmax.f32 %v990, %v1000
  %v1147 = vmax.f32 %v992, %v1002
  %v1148 = vmax.f32 %v1006, %v1016
  %v1149 = vmax.f32 %v1008, %v1018
  %v1150 = vmax.f32 %v1010, %v1020
  %v1151 = vmax.f32 %v1012, %v1022
  %v1152 = vmax.f32 %v1026, %v1036
  %v1153 = vmax.f32 %v1028, %v1038
  %v1154 = vmax.f32 %v1030, %v1040
  %v1155 = vmax.f32 %v1032, %v1042
  %v1156 = vmax.f32 %v1046, %v1056
  %v1157 = vmax.f32 %v1048, %v1058
  %v1158 = vmax.f32 %v1050, %v1060
  %v1159 = vmax.f32 %v1052, %v1062
  %v1160 = vmax.f32 %v1066, %v1076
  %v1161 = vmax.f32 %v1068, %v1078
  %v1162 = vmax.f32 %v1070, %v1080
  %v1163 = vmax.f32 %v1072, %v1082
  %v1164 = vmax.f32 %v1086, %v1096
  %v1165 = vmax.f32 %v1088, %v1098
  %v1166 = vmax.f32 %v1090, %v1100
  %v1167 = vmax.f32 %v1092, %v1102
  %v1168 = vmax.f32 %v1106, %v1116
  %v1169 = vmax.f32 %v1108, %v1118
  %v1170 = vmax.f32 %v1110, %v1120
  %v1171 = vmax.f32 %v1112, %v1122
  %1220 = vrot.lane.b32.xlu0 %v1124, 118
  %v1221 = vpop.permute.xlu0 %1220
  %1222 = vrot.lane.b32.xlu0 %v1125, 118
  %v1223 = vpop.permute.xlu0 %1222
  %1224 = vrot.lane.b32.xlu0 %v1126, 118
  %v1225 = vpop.permute.xlu0 %1224
  %1226 = vrot.lane.b32.xlu0 %v1127, 118
  %v1227 = vpop.permute.xlu0 %1226
  %1228 = vrot.lane.b32.xlu0 %v1128, 118
  %v1229 = vpop.permute.xlu0 %1228
  %1230 = vrot.lane.b32.xlu0 %v1129, 118
  %v1231 = vpop.permute.xlu0 %1230
  %1232 = vrot.lane.b32.xlu0 %v1130, 118
  %v1233 = vpop.permute.xlu0 %1232
  %1234 = vrot.lane.b32.xlu0 %v1131, 118
  %v1235 = vpop.permute.xlu0 %1234
  %1236 = vrot.lane.b32.xlu0 %v1132, 118
  %v1237 = vpop.permute.xlu0 %1236
  %1238 = vrot.lane.b32.xlu0 %v1133, 118
  %v1239 = vpop.permute.xlu0 %1238
  %1240 = vrot.lane.b32.xlu0 %v1134, 118
  %v1241 = vpop.permute.xlu0 %1240
  %1242 = vrot.lane.b32.xlu0 %v1135, 118
  %v1243 = vpop.permute.xlu0 %1242
  %1244 = vrot.lane.b32.xlu0 %v1136, 118
  %v1245 = vpop.permute.xlu0 %1244
  %1246 = vrot.lane.b32.xlu0 %v1137, 118
  %v1247 = vpop.permute.xlu0 %1246
  %1248 = vrot.lane.b32.xlu0 %v1138, 118
  %v1249 = vpop.permute.xlu0 %1248
  %1250 = vrot.lane.b32.xlu0 %v1139, 118
  %v1251 = vpop.permute.xlu0 %1250
  %1252 = vrot.lane.b32.xlu0 %v1140, 118
  %v1253 = vpop.permute.xlu0 %1252
  %1254 = vrot.lane.b32.xlu0 %v1141, 118
  %v1255 = vpop.permute.xlu0 %1254
  %1256 = vrot.lane.b32.xlu0 %v1142, 118
  %v1257 = vpop.permute.xlu0 %1256
  %1258 = vrot.lane.b32.xlu0 %v1143, 118
  %v1259 = vpop.permute.xlu0 %1258
  %1260 = vrot.lane.b32.xlu0 %v1144, 118
  %v1261 = vpop.permute.xlu0 %1260
  %1262 = vrot.lane.b32.xlu0 %v1145, 118
  %v1263 = vpop.permute.xlu0 %1262
  %1264 = vrot.lane.b32.xlu0 %v1146, 118
  %v1265 = vpop.permute.xlu0 %1264
  %1266 = vrot.lane.b32.xlu0 %v1147, 118
  %v1267 = vpop.permute.xlu0 %1266
  %1268 = vrot.lane.b32.xlu0 %v1148, 118
  %v1269 = vpop.permute.xlu0 %1268
  %1270 = vrot.lane.b32.xlu0 %v1149, 118
  %v1271 = vpop.permute.xlu0 %1270
  %1272 = vrot.lane.b32.xlu0 %v1150, 118
  %v1273 = vpop.permute.xlu0 %1272
  %1274 = vrot.lane.b32.xlu0 %v1151, 118
  %v1275 = vpop.permute.xlu0 %1274
  %1276 = vrot.lane.b32.xlu0 %v1152, 118
  %v1277 = vpop.permute.xlu0 %1276
  %1278 = vrot.lane.b32.xlu0 %v1153, 118
  %v1279 = vpop.permute.xlu0 %1278
  %1280 = vrot.lane.b32.xlu0 %v1154, 118
  %v1281 = vpop.permute.xlu0 %1280
  %1282 = vrot.lane.b32.xlu0 %v1155, 118
  %v1283 = vpop.permute.xlu0 %1282
  %1284 = vrot.lane.b32.xlu0 %v1156, 118
  %v1285 = vpop.permute.xlu0 %1284
  %1286 = vrot.lane.b32.xlu0 %v1157, 118
  %v1287 = vpop.permute.xlu0 %1286
  %1288 = vrot.lane.b32.xlu0 %v1158, 118
  %v1289 = vpop.permute.xlu0 %1288
  %1290 = vrot.lane.b32.xlu0 %v1159, 118
  %v1291 = vpop.permute.xlu0 %1290
  %1292 = vrot.lane.b32.xlu0 %v1160, 118
  %v1293 = vpop.permute.xlu0 %1292
  %1294 = vrot.lane.b32.xlu0 %v1161, 118
  %v1295 = vpop.permute.xlu0 %1294
  %1296 = vrot.lane.b32.xlu0 %v1162, 118
  %v1297 = vpop.permute.xlu0 %1296
  %1298 = vrot.lane.b32.xlu0 %v1163, 118
  %v1299 = vpop.permute.xlu0 %1298
  %1300 = vrot.lane.b32.xlu0 %v1164, 118
  %v1301 = vpop.permute.xlu0 %1300
  %1302 = vrot.lane.b32.xlu0 %v1165, 118
  %v1303 = vpop.permute.xlu0 %1302
  %1304 = vrot.lane.b32.xlu0 %v1166, 118
  %v1305 = vpop.permute.xlu0 %1304
  %1306 = vrot.lane.b32.xlu0 %v1167, 118
  %v1307 = vpop.permute.xlu0 %1306
  %1308 = vrot.lane.b32.xlu0 %v1168, 118
  %v1309 = vpop.permute.xlu0 %1308
  %1310 = vrot.lane.b32.xlu0 %v1169, 118
  %v1311 = vpop.permute.xlu0 %1310
  %1312 = vrot.lane.b32.xlu0 %v1170, 118
  %v1313 = vpop.permute.xlu0 %1312
  %1314 = vrot.lane.b32.xlu0 %v1171, 118
  %v1315 = vpop.permute.xlu0 %1314
  %vm1316 = vcmask 965632
  %v1317 = vsel %vm1316, %v1221, %v1223
  %v1318 = vsel %vm1316, %v1225, %v1227
  %v1319 = vsel %vm1316, %v1229, %v1231
  %v1320 = vsel %vm1316, %v1233, %v1235
  %v1321 = vsel %vm1316, %v1237, %v1239
  %v1322 = vsel %vm1316, %v1241, %v1243
  %v1323 = vsel %vm1316, %v1245, %v1247
  %v1324 = vsel %vm1316, %v1249, %v1251
  %v1325 = vsel %vm1316, %v1253, %v1255
  %v1326 = vsel %vm1316, %v1257, %v1259
  %v1327 = vsel %vm1316, %v1261, %v1263
  %v1328 = vsel %vm1316, %v1265, %v1267
  %v1329 = vsel %vm1316, %v1269, %v1271
  %v1330 = vsel %vm1316, %v1273, %v1275
  %v1331 = vsel %vm1316, %v1277, %v1279
  %v1332 = vsel %vm1316, %v1281, %v1283
  %v1333 = vsel %vm1316, %v1285, %v1287
  %v1334 = vsel %vm1316, %v1289, %v1291
  %v1335 = vsel %vm1316, %v1293, %v1295
  %v1336 = vsel %vm1316, %v1297, %v1299
  %v1337 = vsel %vm1316, %v1301, %v1303
  %v1338 = vsel %vm1316, %v1305, %v1307
  %v1339 = vsel %vm1316, %v1309, %v1311
  %v1340 = vsel %vm1316, %v1313, %v1315
  %v1389 = vmax.f32 %v1124, %v1317
  %v1390 = vmax.f32 %v1125, %v1223
  %v1391 = vmax.f32 %v1126, %v1318
  %v1392 = vmax.f32 %v1127, %v1227
  %v1393 = vmax.f32 %v1128, %v1319
  %v1394 = vmax.f32 %v1129, %v1231
  %v1395 = vmax.f32 %v1130, %v1320
  %v1396 = vmax.f32 %v1131, %v1235
  %v1397 = vmax.f32 %v1132, %v1321
  %v1398 = vmax.f32 %v1133, %v1239
  %v1399 = vmax.f32 %v1134, %v1322
  %v1400 = vmax.f32 %v1135, %v1243
  %v1401 = vmax.f32 %v1136, %v1323
  %v1402 = vmax.f32 %v1137, %v1247
  %v1403 = vmax.f32 %v1138, %v1324
  %v1404 = vmax.f32 %v1139, %v1251
  %v1405 = vmax.f32 %v1140, %v1325
  %v1406 = vmax.f32 %v1141, %v1255
  %v1407 = vmax.f32 %v1142, %v1326
  %v1408 = vmax.f32 %v1143, %v1259
  %v1409 = vmax.f32 %v1144, %v1327
  %v1410 = vmax.f32 %v1145, %v1263
  %v1411 = vmax.f32 %v1146, %v1328
  %v1412 = vmax.f32 %v1147, %v1267
  %v1413 = vmax.f32 %v1148, %v1329
  %v1414 = vmax.f32 %v1149, %v1271
  %v1415 = vmax.f32 %v1150, %v1330
  %v1416 = vmax.f32 %v1151, %v1275
  %v1417 = vmax.f32 %v1152, %v1331
  %v1418 = vmax.f32 %v1153, %v1279
  %v1419 = vmax.f32 %v1154, %v1332
  %v1420 = vmax.f32 %v1155, %v1283
  %v1421 = vmax.f32 %v1156, %v1333
  %v1422 = vmax.f32 %v1157, %v1287
  %v1423 = vmax.f32 %v1158, %v1334
  %v1424 = vmax.f32 %v1159, %v1291
  %v1425 = vmax.f32 %v1160, %v1335
  %v1426 = vmax.f32 %v1161, %v1295
  %v1427 = vmax.f32 %v1162, %v1336
  %v1428 = vmax.f32 %v1163, %v1299
  %v1429 = vmax.f32 %v1164, %v1337
  %v1430 = vmax.f32 %v1165, %v1303
  %v1431 = vmax.f32 %v1166, %v1338
  %v1432 = vmax.f32 %v1167, %v1307
  %v1433 = vmax.f32 %v1168, %v1339
  %v1434 = vmax.f32 %v1169, %v1311
  %v1435 = vmax.f32 %v1170, %v1340
  %v1436 = vmax.f32 %v1171, %v1315
  %v1437 = vpack.c.bf16 %v1391, %v1389
  %v1438 = vpack.c.bf16 %v1392, %v1390
  %v1439 = vpack.c.bf16 %v1395, %v1393
  %v1440 = vpack.c.bf16 %v1396, %v1394
  %v1441 = vpack.c.bf16 %v1399, %v1397
  %v1442 = vpack.c.bf16 %v1400, %v1398
  %v1443 = vpack.c.bf16 %v1403, %v1401
  %v1444 = vpack.c.bf16 %v1404, %v1402
  %v1445 = vpack.c.bf16 %v1407, %v1405
  %v1446 = vpack.c.bf16 %v1408, %v1406
  %v1447 = vpack.c.bf16 %v1411, %v1409
  %v1448 = vpack.c.bf16 %v1412, %v1410
  %v1449 = vpack.c.bf16 %v1415, %v1413
  %v1450 = vpack.c.bf16 %v1416, %v1414
  %v1451 = vpack.c.bf16 %v1419, %v1417
  %v1452 = vpack.c.bf16 %v1420, %v1418
  %v1453 = vpack.c.bf16 %v1423, %v1421
  %v1454 = vpack.c.bf16 %v1424, %v1422
  %v1455 = vpack.c.bf16 %v1427, %v1425
  %v1456 = vpack.c.bf16 %v1428, %v1426
  %v1457 = vpack.c.bf16 %v1431, %v1429
  %v1458 = vpack.c.bf16 %v1432, %v1430
  %v1459 = vpack.c.bf16 %v1435, %v1433
  %v1460 = vpack.c.bf16 %v1436, %v1434
  %v1461 = vld [vmem:[%s3] sm:$0xf]
  %v1462 = vld [vmem:[%s3 + $0x4] sm:$0xf]
  %v1463 = vld [vmem:[%s3 + $0x8] sm:$0xf]
  %v1464 = vld [vmem:[%s3 + $0xc] sm:$0xf]
  %v1465 = vld [vmem:[%s3 + $0x10] sm:$0xf]
  %v1466 = vld [vmem:[%s3 + $0x14] sm:$0xf]
  %v1467 = vld [vmem:[%s3 + $0x18] sm:$0xf]
  %v1468 = vld [vmem:[%s3 + $0x1c] sm:$0xf]
  %v1469 = vld [vmem:[%s3 + $0x20] sm:$0xf]
  %v1470 = vld [vmem:[%s3 + $0x24] sm:$0xf]
  %v1471 = vld [vmem:[%s3 + $0x28] sm:$0xf]
  %v1472 = vld [vmem:[%s3 + $0x2c] sm:$0xf]
  %v1473 = vld [vmem:[%s3 + $0x30] sm:$0xf]
  %v1474 = vld [vmem:[%s3 + $0x34] sm:$0xf]
  %v1475 = vld [vmem:[%s3 + $0x38] sm:$0xf]
  %v1476 = vld [vmem:[%s3 + $0x3c] sm:$0xf]
  %v1477 = vld [vmem:[%s3 + $0x40] sm:$0xf]
  %v1478 = vld [vmem:[%s3 + $0x44] sm:$0xf]
  %v1479 = vld [vmem:[%s3 + $0x48] sm:$0xf]
  %v1480 = vld [vmem:[%s3 + $0x4c] sm:$0xf]
  %v1481 = vld [vmem:[%s3 + $0x50] sm:$0xf]
  %v1482 = vld [vmem:[%s3 + $0x54] sm:$0xf]
  %v1483 = vld [vmem:[%s3 + $0x58] sm:$0xf]
  %v1484 = vld [vmem:[%s3 + $0x5c] sm:$0xf]
  %v1485 = vld [vmem:[%s3 + $0x60] sm:$0xf]
  %v1486 = vld [vmem:[%s3 + $0x64] sm:$0xf]
  %v1487 = vld [vmem:[%s3 + $0x68] sm:$0xf]
  %v1488 = vld [vmem:[%s3 + $0x6c] sm:$0xf]
  %v1489 = vld [vmem:[%s3 + $0x70] sm:$0x7]
  %v1519 = vunpack.c.l.b16 %v1461
  %v1520 = vunpack.c.l.b16 %v1462
  %v1521 = vunpack.c.l.b16 %v1463
  %v1522 = vunpack.c.l.b16 %v1464
  %v1523 = vunpack.c.l.b16 %v1465
  %v1524 = vunpack.c.l.b16 %v1466
  %v1525 = vunpack.c.l.b16 %v1467
  %v1526 = vunpack.c.l.b16 %v1468
  %v1527 = vunpack.c.l.b16 %v1469
  %v1528 = vunpack.c.l.b16 %v1470
  %v1529 = vunpack.c.l.b16 %v1471
  %v1530 = vunpack.c.l.b16 %v1472
  %v1531 = vunpack.c.l.b16 %v1473
  %v1532 = vunpack.c.l.b16 %v1474
  %v1533 = vunpack.c.l.b16 %v1475
  %v1534 = vunpack.c.l.b16 %v1476
  %v1535 = vunpack.c.l.b16 %v1477
  %v1536 = vunpack.c.l.b16 %v1478
  %v1537 = vunpack.c.l.b16 %v1479
  %v1538 = vunpack.c.l.b16 %v1480
  %v1539 = vunpack.c.l.b16 %v1481
  %v1540 = vunpack.c.l.b16 %v1482
  %v1541 = vunpack.c.l.b16 %v1483
  %v1542 = vunpack.c.l.b16 %v1484
  %v1543 = vunpack.c.l.b16 %v1485
  %v1544 = vunpack.c.l.b16 %v1486
  %v1545 = vunpack.c.l.b16 %v1487
  %v1546 = vunpack.c.l.b16 %v1488
  %v1547 = vunpack.c.l.b16 %v1489
  %v1548 = vpack.c.b16 %v1520, %v1519
  %v1549 = vpack.c.b16 %v1522, %v1521
  %v1550 = vpack.c.b16 %v1524, %v1523
  %v1551 = vpack.c.b16 %v1526, %v1525
  %v1552 = vpack.c.b16 %v1528, %v1527
  %v1553 = vpack.c.b16 %v1530, %v1529
  %v1554 = vpack.c.b16 %v1532, %v1531
  %v1555 = vpack.c.b16 %v1534, %v1533
  %v1556 = vpack.c.b16 %v1536, %v1535
  %v1557 = vpack.c.b16 %v1538, %v1537
  %v1558 = vpack.c.b16 %v1540, %v1539
  %v1559 = vpack.c.b16 %v1542, %v1541
  %v1560 = vpack.c.b16 %v1544, %v1543
  %v1561 = vpack.c.b16 %v1546, %v1545
  %v1562 = vpack.c.b16 %v1547, %v1547
  %vm1577 = vcmask 834560
  %v1579 = vsel %vm1577, %v1438, 0
  %v1582 = vsel %vm1577, %v1440, 0
  %v1585 = vsel %vm1577, %v1442, 0
  %v1588 = vsel %vm1577, %v1444, 0
  %v1591 = vsel %vm1577, %v1446, 0
  %v1594 = vsel %vm1577, %v1448, 0
  %v1597 = vsel %vm1577, %v1450, 0
  %v1600 = vsel %vm1577, %v1452, 0
  %v1603 = vsel %vm1577, %v1454, 0
  %v1606 = vsel %vm1577, %v1456, 0
  %v1609 = vsel %vm1577, %v1458, 0
  %v1612 = vsel %vm1577, %v1460, 0
  %vm1614 = vcmask 1042432
  %v1616 = vsel %vm1614, %v1562, 0
  %1618 = vmatprep.subr.bf16.mxu0 0
  %1619 = vmatpush1.bf16.msra.mxu0 %v1548
  %1620 = vmatprep.subr.bf16.mxu0 0
  %1621 = vmatpush1.bf16.msra.mxu0 %v1549
  %1622 = vmatprep.subr.bf16.mxu0 0
  %1623 = vmatpush1.bf16.msra.mxu0 %v1550
  %1624 = vmatprep.subr.bf16.mxu0 0
  %1625 = vmatpush1.bf16.msra.mxu0 %v1551
  %1626 = vmatprep.subr.bf16.mxu0 0
  %1627 = vmatpush1.bf16.msra.mxu0 %v1552
  %1628 = vmatprep.subr.bf16.mxu0 0
  %1629 = vmatpush1.bf16.msra.mxu0 %v1553
  %1630 = vmatprep.subr.bf16.mxu0 0
  %1631 = vmatpush1.bf16.msra.mxu0 %v1554
  %1632 = vmatprep.subr.bf16.mxu0 0
  %1633 = vmatpush1.bf16.msra.mxu0 %v1555
  %1634 = vmatprep.subr.bf16.mxu0 0
  %1635 = vmatpush1.bf16.msra.mxu0 %v1556
  %1636 = vmatprep.subr.bf16.mxu0 0
  %1637 = vmatpush1.bf16.msra.mxu0 %v1557
  %1638 = vmatprep.subr.bf16.mxu0 0
  %1639 = vmatpush1.bf16.msra.mxu0 %v1558
  %1640 = vmatprep.subr.bf16.mxu0 0
  %1641 = vmatpush1.bf16.msra.mxu0 %v1559
  %1642 = vmatprep.subr.bf16.mxu0 0
  %1643 = vmatpush1.bf16.msra.mxu0 %v1560
  %1644 = vmatprep.subr.bf16.mxu0 0
  %1645 = vmatpush1.bf16.msra.mxu0 %v1561
  %1646 = vmatprep.subr.bf16.mxu0 0
  %1647 = vmatpush1.bf16.msra.mxu0 %v1616
  %1648 = vmatprep.subr.bf16.mxu0 0
  %1649 = vmatpush1.bf16.msra.mxu0 0
  %1650 = vmatprep.mubr.bf16.mxu0 %v1579
  %1651 = vmatmul.mubr.bf16.gmra.mrb[0].mxu0 %v1437
  %v1652 = vpop.f32.mrb[0].mxu0
  %v1653 = vadd.f32 0.0, %v1652
  %v1654 = vpop.f32.mrb[0].mxu0
  %v1655 = vpop.f32.mrb[0].mxu0
  %v1656 = vadd.f32 0.0, %v1655
  %v1657 = vpop.f32.mrb[0].mxu0
  %1658 = vmatprep.mubr.bf16.mxu0 %v1582
  %1659 = vmatmul.mubr.bf16.gmra.mrb[0].mxu0 %v1439
  %v1660 = vpop.f32.mrb[0].mxu0
  %v1661 = vadd.f32 0.0, %v1660
  %v1662 = vpop.f32.mrb[0].mxu0
  %v1663 = vpop.f32.mrb[0].mxu0
  %v1664 = vadd.f32 0.0, %v1663
  %v1665 = vpop.f32.mrb[0].mxu0
  %1666 = vmatprep.mubr.bf16.mxu0 %v1585
  %1667 = vmatmul.mubr.bf16.gmra.mrb[0].mxu0 %v1441
  %v1668 = vpop.f32.mrb[0].mxu0
  %v1669 = vadd.f32 0.0, %v1668
  %v1670 = vpop.f32.mrb[0].mxu0
  %v1671 = vpop.f32.mrb[0].mxu0
  %v1672 = vadd.f32 0.0, %v1671
  %v1673 = vpop.f32.mrb[0].mxu0
  %1674 = vmatprep.mubr.bf16.mxu0 %v1588
  %1675 = vmatmul.mubr.bf16.gmra.mrb[0].mxu0 %v1443
  %v1676 = vpop.f32.mrb[0].mxu0
  %v1677 = vadd.f32 0.0, %v1676
  %v1678 = vpop.f32.mrb[0].mxu0
  %v1679 = vpop.f32.mrb[0].mxu0
  %v1680 = vadd.f32 0.0, %v1679
  %v1681 = vpop.f32.mrb[0].mxu0
  %1682 = vmatprep.mubr.bf16.mxu0 %v1591
  %1683 = vmatmul.mubr.bf16.gmra.mrb[0].mxu0 %v1445
  %v1684 = vpop.f32.mrb[0].mxu0
  %v1685 = vadd.f32 0.0, %v1684
  %v1686 = vpop.f32.mrb[0].mxu0
  %v1687 = vpop.f32.mrb[0].mxu0
  %v1688 = vadd.f32 0.0, %v1687
  %v1689 = vpop.f32.mrb[0].mxu0
  %1690 = vmatprep.mubr.bf16.mxu0 %v1594
  %1691 = vmatmul.mubr.bf16.gmra.mrb[0].mxu0 %v1447
  %v1692 = vpop.f32.mrb[0].mxu0
  %v1693 = vadd.f32 0.0, %v1692
  %v1694 = vpop.f32.mrb[0].mxu0
  %v1695 = vpop.f32.mrb[0].mxu0
  %v1696 = vadd.f32 0.0, %v1695
  %v1697 = vpop.f32.mrb[0].mxu0
  %1698 = vmatprep.mubr.bf16.mxu0 %v1597
  %1699 = vmatmul.mubr.bf16.gmra.mrb[0].mxu0 %v1449
  %v1700 = vpop.f32.mrb[0].mxu0
  %v1701 = vadd.f32 0.0, %v1700
  %v1702 = vpop.f32.mrb[0].mxu0
  %v1703 = vpop.f32.mrb[0].mxu0
  %v1704 = vadd.f32 0.0, %v1703
  %v1705 = vpop.f32.mrb[0].mxu0
  %1706 = vmatprep.mubr.bf16.mxu0 %v1600
  %1707 = vmatmul.mubr.bf16.gmra.mrb[0].mxu0 %v1451
  %v1708 = vpop.f32.mrb[0].mxu0
  %v1709 = vadd.f32 0.0, %v1708
  %v1710 = vpop.f32.mrb[0].mxu0
  %v1711 = vpop.f32.mrb[0].mxu0
  %v1712 = vadd.f32 0.0, %v1711
  %v1713 = vpop.f32.mrb[0].mxu0
  %1714 = vmatprep.mubr.bf16.mxu0 %v1603
  %1715 = vmatmul.mubr.bf16.gmra.mrb[0].mxu0 %v1453
  %v1716 = vpop.f32.mrb[0].mxu0
  %v1717 = vadd.f32 0.0, %v1716
  %v1718 = vpop.f32.mrb[0].mxu0
  %v1719 = vpop.f32.mrb[0].mxu0
  %v1720 = vadd.f32 0.0, %v1719
  %v1721 = vpop.f32.mrb[0].mxu0
  %1722 = vmatprep.mubr.bf16.mxu0 %v1606
  %1723 = vmatmul.mubr.bf16.gmra.mrb[0].mxu0 %v1455
  %v1724 = vpop.f32.mrb[0].mxu0
  %v1725 = vadd.f32 0.0, %v1724
  %v1726 = vpop.f32.mrb[0].mxu0
  %v1727 = vpop.f32.mrb[0].mxu0
  %v1728 = vadd.f32 0.0, %v1727
  %v1729 = vpop.f32.mrb[0].mxu0
  %1730 = vmatprep.mubr.bf16.mxu0 %v1609
  %1731 = vmatmul.mubr.bf16.gmra.mrb[0].mxu0 %v1457
  %v1732 = vpop.f32.mrb[0].mxu0
  %v1733 = vadd.f32 0.0, %v1732
  %v1734 = vpop.f32.mrb[0].mxu0
  %v1735 = vpop.f32.mrb[0].mxu0
  %v1736 = vadd.f32 0.0, %v1735
  %v1737 = vpop.f32.mrb[0].mxu0
  %1738 = vmatprep.mubr.bf16.mxu0 %v1612
  %1739 = vmatmul.mubr.bf16.gmra.mrb[0].mxu0 %v1459
  %v1740 = vpop.f32.mrb[0].mxu0
  %v1741 = vadd.f32 0.0, %v1740
  %v1742 = vpop.f32.mrb[0].mxu0
  %v1743 = vpop.f32.mrb[0].mxu0
  %v1744 = vadd.f32 0.0, %v1743
  %v1745 = vpop.f32.mrb[0].mxu0
  %1746 = vdwg.mxu0
  %v1747 = vmax.f32 %v1653, 0.0
  %v1748 = vmax.f32 %v1656, 0.0
  %v1749 = vmax.f32 %v1661, 0.0
  %v1750 = vmax.f32 %v1664, 0.0
  %v1751 = vmax.f32 %v1669, 0.0
  %v1752 = vmax.f32 %v1672, 0.0
  %v1753 = vmax.f32 %v1677, 0.0
  %v1754 = vmax.f32 %v1680, 0.0
  %v1755 = vmax.f32 %v1685, 0.0
  %v1756 = vmax.f32 %v1688, 0.0
  %v1757 = vmax.f32 %v1693, 0.0
  %v1758 = vmax.f32 %v1696, 0.0
  %v1759 = vmax.f32 %v1701, 0.0
  %v1760 = vmax.f32 %v1704, 0.0
  %v1761 = vmax.f32 %v1709, 0.0
  %v1762 = vmax.f32 %v1712, 0.0
  %v1763 = vmax.f32 %v1717, 0.0
  %v1764 = vmax.f32 %v1720, 0.0
  %v1765 = vmax.f32 %v1725, 0.0
  %v1766 = vmax.f32 %v1728, 0.0
  %v1767 = vmax.f32 %v1733, 0.0
  %v1768 = vmax.f32 %v1736, 0.0
  %v1769 = vmax.f32 %v1741, 0.0
  %v1770 = vmax.f32 %v1744, 0.0
  %v1771 = vpack.c.bf16 %v1748, %v1747
  %v1772 = vpack.c.bf16 %v1750, %v1749
  %v1773 = vpack.c.bf16 %v1752, %v1751
  %v1774 = vpack.c.bf16 %v1754, %v1753
  %v1775 = vpack.c.bf16 %v1756, %v1755
  %v1776 = vpack.c.bf16 %v1758, %v1757
  %v1777 = vpack.c.bf16 %v1760, %v1759
  %v1778 = vpack.c.bf16 %v1762, %v1761
  %v1779 = vpack.c.bf16 %v1764, %v1763
  %v1780 = vpack.c.bf16 %v1766, %v1765
  %v1781 = vpack.c.bf16 %v1768, %v1767
  %v1782 = vpack.c.bf16 %v1770, %v1769
  %v1783 = vld [vmem:[%s5] sm:$0x3]
  %v1784 = vld [vmem:[%s4] sm:$0xff]
  %v1785 = vld [vmem:[%s4 + $0x8] sm:$0xff]
  %v1786 = vld [vmem:[%s4 + $0x10] sm:$0xff]
  %v1787 = vld [vmem:[%s4 + $0x18] sm:$0xff]
  %v1788 = vld [vmem:[%s4 + $0x20] sm:$0xff]
  %v1789 = vld [vmem:[%s4 + $0x28] sm:$0xff]
  %v1790 = vld [vmem:[%s4 + $0x30] sm:$0xff]
  %v1791 = vld [vmem:[%s4 + $0x38] sm:$0xff]
  %v1792 = vld [vmem:[%s4 + $0x40] sm:$0xff]
  %v1793 = vld [vmem:[%s4 + $0x48] sm:$0xff]
  %v1794 = vld [vmem:[%s4 + $0x50] sm:$0xff]
  %v1795 = vld [vmem:[%s4 + $0x58] sm:$0xff]
  %v1796 = vld [vmem:[%s4 + $0x60] sm:$0xff]
  %v1797 = vld [vmem:[%s4 + $0x68] sm:$0xff]
  %v1798 = vld [vmem:[%s4 + $0x70] sm:$0xff]
  %v1814 = vunpack.c.l.b16 %v1784
  %v1815 = vunpack.c.h.b16 %v1784
  %v1816 = vunpack.c.l.b16 %v1785
  %v1817 = vunpack.c.h.b16 %v1785
  %v1818 = vunpack.c.l.b16 %v1786
  %v1819 = vunpack.c.h.b16 %v1786
  %v1820 = vunpack.c.l.b16 %v1787
  %v1821 = vunpack.c.h.b16 %v1787
  %v1822 = vunpack.c.l.b16 %v1788
  %v1823 = vunpack.c.h.b16 %v1788
  %v1824 = vunpack.c.l.b16 %v1789
  %v1825 = vunpack.c.h.b16 %v1789
  %v1826 = vunpack.c.l.b16 %v1790
  %v1827 = vunpack.c.h.b16 %v1790
  %v1828 = vunpack.c.l.b16 %v1791
  %v1829 = vunpack.c.h.b16 %v1791
  %v1830 = vunpack.c.l.b16 %v1792
  %v1831 = vunpack.c.h.b16 %v1792
  %v1832 = vunpack.c.l.b16 %v1793
  %v1833 = vunpack.c.h.b16 %v1793
  %v1834 = vunpack.c.l.b16 %v1794
  %v1835 = vunpack.c.h.b16 %v1794
  %v1836 = vunpack.c.l.b16 %v1795
  %v1837 = vunpack.c.h.b16 %v1795
  %v1838 = vunpack.c.l.b16 %v1796
  %v1839 = vunpack.c.h.b16 %v1796
  %v1840 = vunpack.c.l.b16 %v1797
  %v1841 = vunpack.c.h.b16 %v1797
  %v1842 = vunpack.c.l.b16 %v1798
  %v1843 = vunpack.c.h.b16 %v1798
  %v1844 = vpack.c.b16 %v1816, %v1814
  %v1845 = vpack.c.b16 %v1817, %v1815
  %v1846 = vpack.c.b16 %v1820, %v1818
  %v1847 = vpack.c.b16 %v1821, %v1819
  %v1848 = vpack.c.b16 %v1824, %v1822
  %v1849 = vpack.c.b16 %v1825, %v1823
  %v1850 = vpack.c.b16 %v1828, %v1826
  %v1851 = vpack.c.b16 %v1829, %v1827
  %v1852 = vpack.c.b16 %v1832, %v1830
  %v1853 = vpack.c.b16 %v1833, %v1831
  %v1854 = vpack.c.b16 %v1836, %v1834
  %v1855 = vpack.c.b16 %v1837, %v1835
  %v1856 = vpack.c.b16 %v1840, %v1838
  %v1857 = vpack.c.b16 %v1841, %v1839
  %v1858 = vpack.c.b16 %v1842, %v1842
  %v1859 = vpack.c.b16 %v1843, %v1843
  %vm1874 = vcmask 982016
  %v1876 = vsel %vm1874, %v1771, 0
  %v1879 = vsel %vm1874, %v1772, 0
  %v1882 = vsel %vm1874, %v1773, 0
  %v1885 = vsel %vm1874, %v1774, 0
  %v1888 = vsel %vm1874, %v1775, 0
  %v1891 = vsel %vm1874, %v1776, 0
  %v1894 = vsel %vm1874, %v1777, 0
  %v1897 = vsel %vm1874, %v1778, 0
  %vm1899 = vcmask 1043456
  %v1901 = vsel %vm1899, %v1858, 0
  %v1904 = vsel %vm1899, %v1859, 0
  %1906 = vmatprep.subr.bf16.mxu0 %v1845
  %1907 = vmatpush1.bf16.msra.mxu0 %v1844
  %1908 = vmatprep.subr.bf16.mxu0 %v1847
  %1909 = vmatpush1.bf16.msra.mxu0 %v1846
  %1910 = vmatprep.subr.bf16.mxu0 %v1849
  %1911 = vmatpush1.bf16.msra.mxu0 %v1848
  %1912 = vmatprep.subr.bf16.mxu0 %v1851
  %1913 = vmatpush1.bf16.msra.mxu0 %v1850
  %1914 = vmatprep.subr.bf16.mxu0 %v1853
  %1915 = vmatpush1.bf16.msra.mxu0 %v1852
  %1916 = vmatprep.subr.bf16.mxu0 %v1855
  %1917 = vmatpush1.bf16.msra.mxu0 %v1854
  %1918 = vmatprep.subr.bf16.mxu0 %v1857
  %1919 = vmatpush1.bf16.msra.mxu0 %v1856
  %1920 = vmatprep.subr.bf16.mxu0 %v1904
  %1921 = vmatpush1.bf16.msra.mxu0 %v1901
  %1922 = vmatprep.subr.bf16.mxu0 0
  %1923 = vmatpush1.bf16.msra.mxu0 0
  %1924 = vmatprep.subr.bf16.mxu0 0
  %1925 = vmatpush1.bf16.msra.mxu0 0
  %1926 = vmatprep.subr.bf16.mxu0 0
  %1927 = vmatpush1.bf16.msra.mxu0 0
  %1928 = vmatprep.subr.bf16.mxu0 0
  %1929 = vmatpush1.bf16.msra.mxu0 0
  %1930 = vmatprep.subr.bf16.mxu0 0
  %1931 = vmatpush1.bf16.msra.mxu0 0
  %1932 = vmatprep.subr.bf16.mxu0 0
  %1933 = vmatpush1.bf16.msra.mxu0 0
  %1934 = vmatprep.subr.bf16.mxu0 0
  %1935 = vmatpush1.bf16.msra.mxu0 0
  %1936 = vmatprep.subr.bf16.mxu0 0
  %1937 = vmatpush1.bf16.msra.mxu0 0
  %1938 = vmatprep.mubr.bf16.mxu0 0
  %1939 = vmatmul.mubr.bf16.gmra.mrb[0].mxu0 %v1876
  %v1940 = vpop.f32.mrb[0].mxu0
  %v1941 = vadd.f32 0.0, %v1940
  %v1942 = vpop.f32.mrb[0].mxu0
  %v1943 = vadd.f32 0.0, %v1942
  %v1944 = vpop.f32.mrb[0].mxu0
  %v1945 = vadd.f32 0.0, %v1944
  %v1946 = vpop.f32.mrb[0].mxu0
  %v1947 = vadd.f32 0.0, %v1946
  %1948 = vmatprep.mubr.bf16.mxu0 0
  %1949 = vmatmul.mubr.bf16.gmra.mrb[0].mxu0 %v1879
  %v1950 = vpop.f32.mrb[0].mxu0
  %v1951 = vadd.f32 0.0, %v1950
  %v1952 = vpop.f32.mrb[0].mxu0
  %v1953 = vadd.f32 0.0, %v1952
  %v1954 = vpop.f32.mrb[0].mxu0
  %v1955 = vadd.f32 0.0, %v1954
  %v1956 = vpop.f32.mrb[0].mxu0
  %v1957 = vadd.f32 0.0, %v1956
  %1958 = vmatprep.mubr.bf16.mxu0 0
  %1959 = vmatmul.mubr.bf16.gmra.mrb[0].mxu0 %v1882
  %v1960 = vpop.f32.mrb[0].mxu0
  %v1961 = vadd.f32 0.0, %v1960
  %v1962 = vpop.f32.mrb[0].mxu0
  %v1963 = vadd.f32 0.0, %v1962
  %v1964 = vpop.f32.mrb[0].mxu0
  %v1965 = vadd.f32 0.0, %v1964
  %v1966 = vpop.f32.mrb[0].mxu0
  %v1967 = vadd.f32 0.0, %v1966
  %1968 = vmatprep.mubr.bf16.mxu0 0
  %1969 = vmatmul.mubr.bf16.gmra.mrb[0].mxu0 %v1885
  %v1970 = vpop.f32.mrb[0].mxu0
  %v1971 = vadd.f32 0.0, %v1970
  %v1972 = vpop.f32.mrb[0].mxu0
  %v1973 = vadd.f32 0.0, %v1972
  %v1974 = vpop.f32.mrb[0].mxu0
  %v1975 = vadd.f32 0.0, %v1974
  %v1976 = vpop.f32.mrb[0].mxu0
  %v1977 = vadd.f32 0.0, %v1976
  %1978 = vmatprep.mubr.bf16.mxu0 0
  %1979 = vmatmul.mubr.bf16.gmra.mrb[0].mxu0 %v1888
  %v1980 = vpop.f32.mrb[0].mxu0
  %v1981 = vadd.f32 0.0, %v1980
  %v1982 = vpop.f32.mrb[0].mxu0
  %v1983 = vadd.f32 0.0, %v1982
  %v1984 = vpop.f32.mrb[0].mxu0
  %v1985 = vadd.f32 0.0, %v1984
  %v1986 = vpop.f32.mrb[0].mxu0
  %v1987 = vadd.f32 0.0, %v1986
  %1988 = vmatprep.mubr.bf16.mxu0 0
  %1989 = vmatmul.mubr.bf16.gmra.mrb[0].mxu0 %v1891
  %v1990 = vpop.f32.mrb[0].mxu0
  %v1991 = vadd.f32 0.0, %v1990
  %v1992 = vpop.f32.mrb[0].mxu0
  %v1993 = vadd.f32 0.0, %v1992
  %v1994 = vpop.f32.mrb[0].mxu0
  %v1995 = vadd.f32 0.0, %v1994
  %v1996 = vpop.f32.mrb[0].mxu0
  %v1997 = vadd.f32 0.0, %v1996
  %1998 = vmatprep.mubr.bf16.mxu0 0
  %1999 = vmatmul.mubr.bf16.gmra.mrb[0].mxu0 %v1894
  %v2000 = vpop.f32.mrb[0].mxu0
  %v2001 = vadd.f32 0.0, %v2000
  %v2002 = vpop.f32.mrb[0].mxu0
  %v2003 = vadd.f32 0.0, %v2002
  %v2004 = vpop.f32.mrb[0].mxu0
  %v2005 = vadd.f32 0.0, %v2004
  %v2006 = vpop.f32.mrb[0].mxu0
  %v2007 = vadd.f32 0.0, %v2006
  %2008 = vmatprep.mubr.bf16.mxu0 0
  %2009 = vmatmul.mubr.bf16.gmra.mrb[0].mxu0 %v1897
  %v2010 = vpop.f32.mrb[0].mxu0
  %v2011 = vadd.f32 0.0, %v2010
  %v2012 = vpop.f32.mrb[0].mxu0
  %v2013 = vadd.f32 0.0, %v2012
  %v2014 = vpop.f32.mrb[0].mxu0
  %v2015 = vadd.f32 0.0, %v2014
  %v2016 = vpop.f32.mrb[0].mxu0
  %v2017 = vadd.f32 0.0, %v2016
  %2018 = vdwg.mxu0
  %v2020 = vlaneseq
  %v2021 = vshrl.u32 %v2020, 7
  %v2022 = vsub.s32 0, %v2021
  %v2023 = vrot.slane %v1783, %v2022
  %v2024 = vlaneseq
  %v2025 = vshrl.u32 %v2024, 7
  %v2026 = vsub.s32 1, %v2025
  %v2027 = vrot.slane %v1783, %v2026
  %v2030 = vadd.f32 %v2023, %v1941
  %v2031 = vadd.f32 %v2027, %v1943
  %v2032 = vadd.f32 %v2023, %v1945
  %v2033 = vadd.f32 %v2027, %v1947
  %v2034 = vadd.f32 %v2023, %v1951
  %v2035 = vadd.f32 %v2027, %v1953
  %v2036 = vadd.f32 %v2023, %v1955
  %v2037 = vadd.f32 %v2027, %v1957
  %v2038 = vadd.f32 %v2023, %v1961
  %v2039 = vadd.f32 %v2027, %v1963
  %v2040 = vadd.f32 %v2023, %v1965
  %v2041 = vadd.f32 %v2027, %v1967
  %v2042 = vadd.f32 %v2023, %v1971
  %v2043 = vadd.f32 %v2027, %v1973
  %v2044 = vadd.f32 %v2023, %v1975
  %v2045 = vadd.f32 %v2027, %v1977
  %v2046 = vadd.f32 %v2023, %v1981
  %v2047 = vadd.f32 %v2027, %v1983
  %v2048 = vadd.f32 %v2023, %v1985
  %v2049 = vadd.f32 %v2027, %v1987
  %v2050 = vadd.f32 %v2023, %v1991
  %v2051 = vadd.f32 %v2027, %v1993
  %v2052 = vadd.f32 %v2023, %v1995
  %v2053 = vadd.f32 %v2027, %v1997
  %v2054 = vadd.f32 %v2023, %v2001
  %v2055 = vadd.f32 %v2027, %v2003
  %v2056 = vadd.f32 %v2023, %v2005
  %v2057 = vadd.f32 %v2027, %v2007
  %v2058 = vadd.f32 %v2023, %v2011
  %v2059 = vadd.f32 %v2027, %v2013
  %v2060 = vadd.f32 %v2023, %v2015
  %v2061 = vadd.f32 %v2027, %v2017
  %s2062 = scalar_lea.vmem %s4, 120
  %v2063 = vld [vmem:[%s2062] sm:$0xff]
  %v2064 = vld [vmem:[%s2062 + $0x8] sm:$0xff]
  %v2065 = vld [vmem:[%s2062 + $0x10] sm:$0xff]
  %v2066 = vld [vmem:[%s2062 + $0x18] sm:$0xff]
  %v2067 = vld [vmem:[%s2062 + $0x20] sm:$0xff]
  %v2068 = vld [vmem:[%s2062 + $0x28] sm:$0xff]
  %v2069 = vld [vmem:[%s2062 + $0x30] sm:$0xff]
  %v2070 = vld [vmem:[%s2062 + $0x38] sm:$0xff]
  %v2071 = vld [vmem:[%s2062 + $0x40] sm:$0xff]
  %v2072 = vld [vmem:[%s2062 + $0x48] sm:$0xff]
  %v2073 = vld [vmem:[%s2062 + $0x50] sm:$0xff]
  %v2074 = vld [vmem:[%s2062 + $0x58] sm:$0xff]
  %v2075 = vld [vmem:[%s2062 + $0x60] sm:$0xff]
  %v2076 = vld [vmem:[%s2062 + $0x68] sm:$0xff]
  %v2077 = vld [vmem:[%s2062 + $0x70] sm:$0xff]
  %v2093 = vunpack.c.l.b16 %v2063
  %v2094 = vunpack.c.h.b16 %v2063
  %v2095 = vunpack.c.l.b16 %v2064
  %v2096 = vunpack.c.h.b16 %v2064
  %v2097 = vunpack.c.l.b16 %v2065
  %v2098 = vunpack.c.h.b16 %v2065
  %v2099 = vunpack.c.l.b16 %v2066
  %v2100 = vunpack.c.h.b16 %v2066
  %v2101 = vunpack.c.l.b16 %v2067
  %v2102 = vunpack.c.h.b16 %v2067
  %v2103 = vunpack.c.l.b16 %v2068
  %v2104 = vunpack.c.h.b16 %v2068
  %v2105 = vunpack.c.l.b16 %v2069
  %v2106 = vunpack.c.h.b16 %v2069
  %v2107 = vunpack.c.l.b16 %v2070
  %v2108 = vunpack.c.h.b16 %v2070
  %v2109 = vunpack.c.l.b16 %v2071
  %v2110 = vunpack.c.h.b16 %v2071
  %v2111 = vunpack.c.l.b16 %v2072
  %v2112 = vunpack.c.h.b16 %v2072
  %v2113 = vunpack.c.l.b16 %v2073
  %v2114 = vunpack.c.h.b16 %v2073
  %v2115 = vunpack.c.l.b16 %v2074
  %v2116 = vunpack.c.h.b16 %v2074
  %v2117 = vunpack.c.l.b16 %v2075
  %v2118 = vunpack.c.h.b16 %v2075
  %v2119 = vunpack.c.l.b16 %v2076
  %v2120 = vunpack.c.h.b16 %v2076
  %v2121 = vunpack.c.l.b16 %v2077
  %v2122 = vunpack.c.h.b16 %v2077
  %v2123 = vpack.c.b16 %v2095, %v2093
  %v2124 = vpack.c.b16 %v2096, %v2094
  %v2125 = vpack.c.b16 %v2099, %v2097
  %v2126 = vpack.c.b16 %v2100, %v2098
  %v2127 = vpack.c.b16 %v2103, %v2101
  %v2128 = vpack.c.b16 %v2104, %v2102
  %v2129 = vpack.c.b16 %v2107, %v2105
  %v2130 = vpack.c.b16 %v2108, %v2106
  %v2131 = vpack.c.b16 %v2111, %v2109
  %v2132 = vpack.c.b16 %v2112, %v2110
  %v2133 = vpack.c.b16 %v2115, %v2113
  %v2134 = vpack.c.b16 %v2116, %v2114
  %v2135 = vpack.c.b16 %v2119, %v2117
  %v2136 = vpack.c.b16 %v2120, %v2118
  %v2137 = vpack.c.b16 %v2121, %v2121
  %v2138 = vpack.c.b16 %v2122, %v2122
  %v2154 = vsel %vm1874, %v1779, 0
  %v2157 = vsel %vm1899, %v2137, 0
  %v2160 = vsel %vm1899, %v2138, 0
  %2162 = vmatprep.subr.bf16.mxu0 %v2124
  %2163 = vmatpush1.bf16.msra.mxu0 %v2123
  %2164 = vmatprep.subr.bf16.mxu0 %v2126
  %2165 = vmatpush1.bf16.msra.mxu0 %v2125
  %2166 = vmatprep.subr.bf16.mxu0 %v2128
  %2167 = vmatpush1.bf16.msra.mxu0 %v2127
  %2168 = vmatprep.subr.bf16.mxu0 %v2130
  %2169 = vmatpush1.bf16.msra.mxu0 %v2129
  %2170 = vmatprep.subr.bf16.mxu0 %v2132
  %2171 = vmatpush1.bf16.msra.mxu0 %v2131
  %2172 = vmatprep.subr.bf16.mxu0 %v2134
  %2173 = vmatpush1.bf16.msra.mxu0 %v2133
  %2174 = vmatprep.subr.bf16.mxu0 %v2136
  %2175 = vmatpush1.bf16.msra.mxu0 %v2135
  %2176 = vmatprep.subr.bf16.mxu0 %v2160
  %2177 = vmatpush1.bf16.msra.mxu0 %v2157
  %2178 = vmatprep.subr.bf16.mxu0 0
  %2179 = vmatpush1.bf16.msra.mxu0 0
  %2180 = vmatprep.subr.bf16.mxu0 0
  %2181 = vmatpush1.bf16.msra.mxu0 0
  %2182 = vmatprep.subr.bf16.mxu0 0
  %2183 = vmatpush1.bf16.msra.mxu0 0
  %2184 = vmatprep.subr.bf16.mxu0 0
  %2185 = vmatpush1.bf16.msra.mxu0 0
  %2186 = vmatprep.subr.bf16.mxu0 0
  %2187 = vmatpush1.bf16.msra.mxu0 0
  %2188 = vmatprep.subr.bf16.mxu0 0
  %2189 = vmatpush1.bf16.msra.mxu0 0
  %2190 = vmatprep.subr.bf16.mxu0 0
  %2191 = vmatpush1.bf16.msra.mxu0 0
  %2192 = vmatprep.subr.bf16.mxu0 0
  %2193 = vmatpush1.bf16.msra.mxu0 0
  %2194 = vmatprep.mubr.bf16.mxu0 0
  %2195 = vmatmul.mubr.bf16.gmra.mrb[0].mxu0 %v1879
  %v2196 = vpop.f32.mrb[0].mxu0
  %v2197 = vadd.f32 0.0, %v2196
  %v2198 = vpop.f32.mrb[0].mxu0
  %v2199 = vadd.f32 0.0, %v2198
  %v2200 = vpop.f32.mrb[0].mxu0
  %v2201 = vadd.f32 0.0, %v2200
  %v2202 = vpop.f32.mrb[0].mxu0
  %v2203 = vadd.f32 0.0, %v2202
  %2204 = vmatprep.mubr.bf16.mxu0 0
  %2205 = vmatmul.mubr.bf16.gmra.mrb[0].mxu0 %v1882
  %v2206 = vpop.f32.mrb[0].mxu0
  %v2207 = vadd.f32 0.0, %v2206
  %v2208 = vpop.f32.mrb[0].mxu0
  %v2209 = vadd.f32 0.0, %v2208
  %v2210 = vpop.f32.mrb[0].mxu0
  %v2211 = vadd.f32 0.0, %v2210
  %v2212 = vpop.f32.mrb[0].mxu0
  %v2213 = vadd.f32 0.0, %v2212
  %2214 = vmatprep.mubr.bf16.mxu0 0
  %2215 = vmatmul.mubr.bf16.gmra.mrb[0].mxu0 %v1885
  %v2216 = vpop.f32.mrb[0].mxu0
  %v2217 = vadd.f32 0.0, %v2216
  %v2218 = vpop.f32.mrb[0].mxu0
  %v2219 = vadd.f32 0.0, %v2218
  %v2220 = vpop.f32.mrb[0].mxu0
  %v2221 = vadd.f32 0.0, %v2220
  %v2222 = vpop.f32.mrb[0].mxu0
  %v2223 = vadd.f32 0.0, %v2222
  %2224 = vmatprep.mubr.bf16.mxu0 0
  %2225 = vmatmul.mubr.bf16.gmra.mrb[0].mxu0 %v1888
  %v2226 = vpop.f32.mrb[0].mxu0
  %v2227 = vadd.f32 0.0, %v2226
  %v2228 = vpop.f32.mrb[0].mxu0
  %v2229 = vadd.f32 0.0, %v2228
  %v2230 = vpop.f32.mrb[0].mxu0
  %v2231 = vadd.f32 0.0, %v2230
  %v2232 = vpop.f32.mrb[0].mxu0
  %v2233 = vadd.f32 0.0, %v2232
  %2234 = vmatprep.mubr.bf16.mxu0 0
  %2235 = vmatmul.mubr.bf16.gmra.mrb[0].mxu0 %v1891
  %v2236 = vpop.f32.mrb[0].mxu0
  %v2237 = vadd.f32 0.0, %v2236
  %v2238 = vpop.f32.mrb[0].mxu0
  %v2239 = vadd.f32 0.0, %v2238
  %v2240 = vpop.f32.mrb[0].mxu0
  %v2241 = vadd.f32 0.0, %v2240
  %v2242 = vpop.f32.mrb[0].mxu0
  %v2243 = vadd.f32 0.0, %v2242
  %2244 = vmatprep.mubr.bf16.mxu0 0
  %2245 = vmatmul.mubr.bf16.gmra.mrb[0].mxu0 %v1894
  %v2246 = vpop.f32.mrb[0].mxu0
  %v2247 = vadd.f32 0.0, %v2246
  %v2248 = vpop.f32.mrb[0].mxu0
  %v2249 = vadd.f32 0.0, %v2248
  %v2250 = vpop.f32.mrb[0].mxu0
  %v2251 = vadd.f32 0.0, %v2250
  %v2252 = vpop.f32.mrb[0].mxu0
  %v2253 = vadd.f32 0.0, %v2252
  %2254 = vmatprep.mubr.bf16.mxu0 0
  %2255 = vmatmul.mubr.bf16.gmra.mrb[0].mxu0 %v1897
  %v2256 = vpop.f32.mrb[0].mxu0
  %v2257 = vadd.f32 0.0, %v2256
  %v2258 = vpop.f32.mrb[0].mxu0
  %v2259 = vadd.f32 0.0, %v2258
  %v2260 = vpop.f32.mrb[0].mxu0
  %v2261 = vadd.f32 0.0, %v2260
  %v2262 = vpop.f32.mrb[0].mxu0
  %v2263 = vadd.f32 0.0, %v2262
  %2264 = vmatprep.mubr.bf16.mxu0 0
  %2265 = vmatmul.mubr.bf16.gmra.mrb[0].mxu0 %v2154
  %v2266 = vpop.f32.mrb[0].mxu0
  %v2267 = vadd.f32 0.0, %v2266
  %v2268 = vpop.f32.mrb[0].mxu0
  %v2269 = vadd.f32 0.0, %v2268
  %v2270 = vpop.f32.mrb[0].mxu0
  %v2271 = vadd.f32 0.0, %v2270
  %v2272 = vpop.f32.mrb[0].mxu0
  %v2273 = vadd.f32 0.0, %v2272
  %2274 = vdwg.mxu0
  %v2275 = vadd.f32 %v2030, %v2197
  %v2276 = vadd.f32 %v2031, %v2199
  %v2277 = vadd.f32 %v2032, %v2201
  %v2278 = vadd.f32 %v2033, %v2203
  %v2279 = vadd.f32 %v2034, %v2207
  %v2280 = vadd.f32 %v2035, %v2209
  %v2281 = vadd.f32 %v2036, %v2211
  %v2282 = vadd.f32 %v2037, %v2213
  %v2283 = vadd.f32 %v2038, %v2217
  %v2284 = vadd.f32 %v2039, %v2219
  %v2285 = vadd.f32 %v2040, %v2221
  %v2286 = vadd.f32 %v2041, %v2223
  %v2287 = vadd.f32 %v2042, %v2227
  %v2288 = vadd.f32 %v2043, %v2229
  %v2289 = vadd.f32 %v2044, %v2231
  %v2290 = vadd.f32 %v2045, %v2233
  %v2291 = vadd.f32 %v2046, %v2237
  %v2292 = vadd.f32 %v2047, %v2239
  %v2293 = vadd.f32 %v2048, %v2241
  %v2294 = vadd.f32 %v2049, %v2243
  %v2295 = vadd.f32 %v2050, %v2247
  %v2296 = vadd.f32 %v2051, %v2249
  %v2297 = vadd.f32 %v2052, %v2251
  %v2298 = vadd.f32 %v2053, %v2253
  %v2299 = vadd.f32 %v2054, %v2257
  %v2300 = vadd.f32 %v2055, %v2259
  %v2301 = vadd.f32 %v2056, %v2261
  %v2302 = vadd.f32 %v2057, %v2263
  %v2303 = vadd.f32 %v2058, %v2267
  %v2304 = vadd.f32 %v2059, %v2269
  %v2305 = vadd.f32 %v2060, %v2271
  %v2306 = vadd.f32 %v2061, %v2273
  %s2307 = scalar_lea.vmem %s4, 240
  %v2308 = vld [vmem:[%s2307] sm:$0xff]
  %v2309 = vld [vmem:[%s2307 + $0x8] sm:$0xff]
  %v2310 = vld [vmem:[%s2307 + $0x10] sm:$0xff]
  %v2311 = vld [vmem:[%s2307 + $0x18] sm:$0xff]
  %v2312 = vld [vmem:[%s2307 + $0x20] sm:$0xff]
  %v2313 = vld [vmem:[%s2307 + $0x28] sm:$0xff]
  %v2314 = vld [vmem:[%s2307 + $0x30] sm:$0xff]
  %v2315 = vld [vmem:[%s2307 + $0x38] sm:$0xff]
  %v2316 = vld [vmem:[%s2307 + $0x40] sm:$0xff]
  %v2317 = vld [vmem:[%s2307 + $0x48] sm:$0xff]
  %v2318 = vld [vmem:[%s2307 + $0x50] sm:$0xff]
  %v2319 = vld [vmem:[%s2307 + $0x58] sm:$0xff]
  %v2320 = vld [vmem:[%s2307 + $0x60] sm:$0xff]
  %v2321 = vld [vmem:[%s2307 + $0x68] sm:$0xff]
  %v2322 = vld [vmem:[%s2307 + $0x70] sm:$0xff]
  %v2338 = vunpack.c.l.b16 %v2308
  %v2339 = vunpack.c.h.b16 %v2308
  %v2340 = vunpack.c.l.b16 %v2309
  %v2341 = vunpack.c.h.b16 %v2309
  %v2342 = vunpack.c.l.b16 %v2310
  %v2343 = vunpack.c.h.b16 %v2310
  %v2344 = vunpack.c.l.b16 %v2311
  %v2345 = vunpack.c.h.b16 %v2311
  %v2346 = vunpack.c.l.b16 %v2312
  %v2347 = vunpack.c.h.b16 %v2312
  %v2348 = vunpack.c.l.b16 %v2313
  %v2349 = vunpack.c.h.b16 %v2313
  %v2350 = vunpack.c.l.b16 %v2314
  %v2351 = vunpack.c.h.b16 %v2314
  %v2352 = vunpack.c.l.b16 %v2315
  %v2353 = vunpack.c.h.b16 %v2315
  %v2354 = vunpack.c.l.b16 %v2316
  %v2355 = vunpack.c.h.b16 %v2316
  %v2356 = vunpack.c.l.b16 %v2317
  %v2357 = vunpack.c.h.b16 %v2317
  %v2358 = vunpack.c.l.b16 %v2318
  %v2359 = vunpack.c.h.b16 %v2318
  %v2360 = vunpack.c.l.b16 %v2319
  %v2361 = vunpack.c.h.b16 %v2319
  %v2362 = vunpack.c.l.b16 %v2320
  %v2363 = vunpack.c.h.b16 %v2320
  %v2364 = vunpack.c.l.b16 %v2321
  %v2365 = vunpack.c.h.b16 %v2321
  %v2366 = vunpack.c.l.b16 %v2322
  %v2367 = vunpack.c.h.b16 %v2322
  %v2368 = vpack.c.b16 %v2340, %v2338
  %v2369 = vpack.c.b16 %v2341, %v2339
  %v2370 = vpack.c.b16 %v2344, %v2342
  %v2371 = vpack.c.b16 %v2345, %v2343
  %v2372 = vpack.c.b16 %v2348, %v2346
  %v2373 = vpack.c.b16 %v2349, %v2347
  %v2374 = vpack.c.b16 %v2352, %v2350
  %v2375 = vpack.c.b16 %v2353, %v2351
  %v2376 = vpack.c.b16 %v2356, %v2354
  %v2377 = vpack.c.b16 %v2357, %v2355
  %v2378 = vpack.c.b16 %v2360, %v2358
  %v2379 = vpack.c.b16 %v2361, %v2359
  %v2380 = vpack.c.b16 %v2364, %v2362
  %v2381 = vpack.c.b16 %v2365, %v2363
  %v2382 = vpack.c.b16 %v2366, %v2366
  %v2383 = vpack.c.b16 %v2367, %v2367
  %v2399 = vsel %vm1874, %v1780, 0
  %v2402 = vsel %vm1899, %v2382, 0
  %v2405 = vsel %vm1899, %v2383, 0
  %2407 = vmatprep.subr.bf16.mxu0 %v2369
  %2408 = vmatpush1.bf16.msra.mxu0 %v2368
  %2409 = vmatprep.subr.bf16.mxu0 %v2371
  %2410 = vmatpush1.bf16.msra.mxu0 %v2370
  %2411 = vmatprep.subr.bf16.mxu0 %v2373
  %2412 = vmatpush1.bf16.msra.mxu0 %v2372
  %2413 = vmatprep.subr.bf16.mxu0 %v2375
  %2414 = vmatpush1.bf16.msra.mxu0 %v2374
  %2415 = vmatprep.subr.bf16.mxu0 %v2377
  %2416 = vmatpush1.bf16.msra.mxu0 %v2376
  %2417 = vmatprep.subr.bf16.mxu0 %v2379
  %2418 = vmatpush1.bf16.msra.mxu0 %v2378
  %2419 = vmatprep.subr.bf16.mxu0 %v2381
  %2420 = vmatpush1.bf16.msra.mxu0 %v2380
  %2421 = vmatprep.subr.bf16.mxu0 %v2405
  %2422 = vmatpush1.bf16.msra.mxu0 %v2402
  %2423 = vmatprep.subr.bf16.mxu0 0
  %2424 = vmatpush1.bf16.msra.mxu0 0
  %2425 = vmatprep.subr.bf16.mxu0 0
  %2426 = vmatpush1.bf16.msra.mxu0 0
  %2427 = vmatprep.subr.bf16.mxu0 0
  %2428 = vmatpush1.bf16.msra.mxu0 0
  %2429 = vmatprep.subr.bf16.mxu0 0
  %2430 = vmatpush1.bf16.msra.mxu0 0
  %2431 = vmatprep.subr.bf16.mxu0 0
  %2432 = vmatpush1.bf16.msra.mxu0 0
  %2433 = vmatprep.subr.bf16.mxu0 0
  %2434 = vmatpush1.bf16.msra.mxu0 0
  %2435 = vmatprep.subr.bf16.mxu0 0
  %2436 = vmatpush1.bf16.msra.mxu0 0
  %2437 = vmatprep.subr.bf16.mxu0 0
  %2438 = vmatpush1.bf16.msra.mxu0 0
  %2439 = vmatprep.mubr.bf16.mxu0 0
  %2440 = vmatmul.mubr.bf16.gmra.mrb[0].mxu0 %v1882
  %v2441 = vpop.f32.mrb[0].mxu0
  %v2442 = vadd.f32 0.0, %v2441
  %v2443 = vpop.f32.mrb[0].mxu0
  %v2444 = vadd.f32 0.0, %v2443
  %v2445 = vpop.f32.mrb[0].mxu0
  %v2446 = vadd.f32 0.0, %v2445
  %v2447 = vpop.f32.mrb[0].mxu0
  %v2448 = vadd.f32 0.0, %v2447
  %2449 = vmatprep.mubr.bf16.mxu0 0
  %2450 = vmatmul.mubr.bf16.gmra.mrb[0].mxu0 %v1885
  %v2451 = vpop.f32.mrb[0].mxu0
  %v2452 = vadd.f32 0.0, %v2451
  %v2453 = vpop.f32.mrb[0].mxu0
  %v2454 = vadd.f32 0.0, %v2453
  %v2455 = vpop.f32.mrb[0].mxu0
  %v2456 = vadd.f32 0.0, %v2455
  %v2457 = vpop.f32.mrb[0].mxu0
  %v2458 = vadd.f32 0.0, %v2457
  %2459 = vmatprep.mubr.bf16.mxu0 0
  %2460 = vmatmul.mubr.bf16.gmra.mrb[0].mxu0 %v1888
  %v2461 = vpop.f32.mrb[0].mxu0
  %v2462 = vadd.f32 0.0, %v2461
  %v2463 = vpop.f32.mrb[0].mxu0
  %v2464 = vadd.f32 0.0, %v2463
  %v2465 = vpop.f32.mrb[0].mxu0
  %v2466 = vadd.f32 0.0, %v2465
  %v2467 = vpop.f32.mrb[0].mxu0
  %v2468 = vadd.f32 0.0, %v2467
  %2469 = vmatprep.mubr.bf16.mxu0 0
  %2470 = vmatmul.mubr.bf16.gmra.mrb[0].mxu0 %v1891
  %v2471 = vpop.f32.mrb[0].mxu0
  %v2472 = vadd.f32 0.0, %v2471
  %v2473 = vpop.f32.mrb[0].mxu0
  %v2474 = vadd.f32 0.0, %v2473
  %v2475 = vpop.f32.mrb[0].mxu0
  %v2476 = vadd.f32 0.0, %v2475
  %v2477 = vpop.f32.mrb[0].mxu0
  %v2478 = vadd.f32 0.0, %v2477
  %2479 = vmatprep.mubr.bf16.mxu0 0
  %2480 = vmatmul.mubr.bf16.gmra.mrb[0].mxu0 %v1894
  %v2481 = vpop.f32.mrb[0].mxu0
  %v2482 = vadd.f32 0.0, %v2481
  %v2483 = vpop.f32.mrb[0].mxu0
  %v2484 = vadd.f32 0.0, %v2483
  %v2485 = vpop.f32.mrb[0].mxu0
  %v2486 = vadd.f32 0.0, %v2485
  %v2487 = vpop.f32.mrb[0].mxu0
  %v2488 = vadd.f32 0.0, %v2487
  %2489 = vmatprep.mubr.bf16.mxu0 0
  %2490 = vmatmul.mubr.bf16.gmra.mrb[0].mxu0 %v1897
  %v2491 = vpop.f32.mrb[0].mxu0
  %v2492 = vadd.f32 0.0, %v2491
  %v2493 = vpop.f32.mrb[0].mxu0
  %v2494 = vadd.f32 0.0, %v2493
  %v2495 = vpop.f32.mrb[0].mxu0
  %v2496 = vadd.f32 0.0, %v2495
  %v2497 = vpop.f32.mrb[0].mxu0
  %v2498 = vadd.f32 0.0, %v2497
  %2499 = vmatprep.mubr.bf16.mxu0 0
  %2500 = vmatmul.mubr.bf16.gmra.mrb[0].mxu0 %v2154
  %v2501 = vpop.f32.mrb[0].mxu0
  %v2502 = vadd.f32 0.0, %v2501
  %v2503 = vpop.f32.mrb[0].mxu0
  %v2504 = vadd.f32 0.0, %v2503
  %v2505 = vpop.f32.mrb[0].mxu0
  %v2506 = vadd.f32 0.0, %v2505
  %v2507 = vpop.f32.mrb[0].mxu0
  %v2508 = vadd.f32 0.0, %v2507
  %2509 = vmatprep.mubr.bf16.mxu0 0
  %2510 = vmatmul.mubr.bf16.gmra.mrb[0].mxu0 %v2399
  %v2511 = vpop.f32.mrb[0].mxu0
  %v2512 = vadd.f32 0.0, %v2511
  %v2513 = vpop.f32.mrb[0].mxu0
  %v2514 = vadd.f32 0.0, %v2513
  %v2515 = vpop.f32.mrb[0].mxu0
  %v2516 = vadd.f32 0.0, %v2515
  %v2517 = vpop.f32.mrb[0].mxu0
  %v2518 = vadd.f32 0.0, %v2517
  %2519 = vdwg.mxu0
  %v2520 = vadd.f32 %v2275, %v2442
  %v2521 = vadd.f32 %v2276, %v2444
  %v2522 = vadd.f32 %v2277, %v2446
  %v2523 = vadd.f32 %v2278, %v2448
  %v2524 = vadd.f32 %v2279, %v2452
  %v2525 = vadd.f32 %v2280, %v2454
  %v2526 = vadd.f32 %v2281, %v2456
  %v2527 = vadd.f32 %v2282, %v2458
  %v2528 = vadd.f32 %v2283, %v2462
  %v2529 = vadd.f32 %v2284, %v2464
  %v2530 = vadd.f32 %v2285, %v2466
  %v2531 = vadd.f32 %v2286, %v2468
  %v2532 = vadd.f32 %v2287, %v2472
  %v2533 = vadd.f32 %v2288, %v2474
  %v2534 = vadd.f32 %v2289, %v2476
  %v2535 = vadd.f32 %v2290, %v2478
  %v2536 = vadd.f32 %v2291, %v2482
  %v2537 = vadd.f32 %v2292, %v2484
  %v2538 = vadd.f32 %v2293, %v2486
  %v2539 = vadd.f32 %v2294, %v2488
  %v2540 = vadd.f32 %v2295, %v2492
  %v2541 = vadd.f32 %v2296, %v2494
  %v2542 = vadd.f32 %v2297, %v2496
  %v2543 = vadd.f32 %v2298, %v2498
  %v2544 = vadd.f32 %v2299, %v2502
  %v2545 = vadd.f32 %v2300, %v2504
  %v2546 = vadd.f32 %v2301, %v2506
  %v2547 = vadd.f32 %v2302, %v2508
  %v2548 = vadd.f32 %v2303, %v2512
  %v2549 = vadd.f32 %v2304, %v2514
  %v2550 = vadd.f32 %v2305, %v2516
  %v2551 = vadd.f32 %v2306, %v2518
  %s2552 = scalar_lea.vmem %s4, 360
  %v2553 = vld [vmem:[%s2552] sm:$0xff]
  %v2554 = vld [vmem:[%s2552 + $0x8] sm:$0xff]
  %v2555 = vld [vmem:[%s2552 + $0x10] sm:$0xff]
  %v2556 = vld [vmem:[%s2552 + $0x18] sm:$0xff]
  %v2557 = vld [vmem:[%s2552 + $0x20] sm:$0xff]
  %v2558 = vld [vmem:[%s2552 + $0x28] sm:$0xff]
  %v2559 = vld [vmem:[%s2552 + $0x30] sm:$0xff]
  %v2560 = vld [vmem:[%s2552 + $0x38] sm:$0xff]
  %v2561 = vld [vmem:[%s2552 + $0x40] sm:$0xff]
  %v2562 = vld [vmem:[%s2552 + $0x48] sm:$0xff]
  %v2563 = vld [vmem:[%s2552 + $0x50] sm:$0xff]
  %v2564 = vld [vmem:[%s2552 + $0x58] sm:$0xff]
  %v2565 = vld [vmem:[%s2552 + $0x60] sm:$0xff]
  %v2566 = vld [vmem:[%s2552 + $0x68] sm:$0xff]
  %v2567 = vld [vmem:[%s2552 + $0x70] sm:$0xff]
  %v2583 = vunpack.c.l.b16 %v2553
  %v2584 = vunpack.c.h.b16 %v2553
  %v2585 = vunpack.c.l.b16 %v2554
  %v2586 = vunpack.c.h.b16 %v2554
  %v2587 = vunpack.c.l.b16 %v2555
  %v2588 = vunpack.c.h.b16 %v2555
  %v2589 = vunpack.c.l.b16 %v2556
  %v2590 = vunpack.c.h.b16 %v2556
  %v2591 = vunpack.c.l.b16 %v2557
  %v2592 = vunpack.c.h.b16 %v2557
  %v2593 = vunpack.c.l.b16 %v2558
  %v2594 = vunpack.c.h.b16 %v2558
  %v2595 = vunpack.c.l.b16 %v2559
  %v2596 = vunpack.c.h.b16 %v2559
  %v2597 = vunpack.c.l.b16 %v2560
  %v2598 = vunpack.c.h.b16 %v2560
  %v2599 = vunpack.c.l.b16 %v2561
  %v2600 = vunpack.c.h.b16 %v2561
  %v2601 = vunpack.c.l.b16 %v2562
  %v2602 = vunpack.c.h.b16 %v2562
  %v2603 = vunpack.c.l.b16 %v2563
  %v2604 = vunpack.c.h.b16 %v2563
  %v2605 = vunpack.c.l.b16 %v2564
  %v2606 = vunpack.c.h.b16 %v2564
  %v2607 = vunpack.c.l.b16 %v2565
  %v2608 = vunpack.c.h.b16 %v2565
  %v2609 = vunpack.c.l.b16 %v2566
  %v2610 = vunpack.c.h.b16 %v2566
  %v2611 = vunpack.c.l.b16 %v2567
  %v2612 = vunpack.c.h.b16 %v2567
  %v2613 = vpack.c.b16 %v2585, %v2583
  %v2614 = vpack.c.b16 %v2586, %v2584
  %v2615 = vpack.c.b16 %v2589, %v2587
  %v2616 = vpack.c.b16 %v2590, %v2588
  %v2617 = vpack.c.b16 %v2593, %v2591
  %v2618 = vpack.c.b16 %v2594, %v2592
  %v2619 = vpack.c.b16 %v2597, %v2595
  %v2620 = vpack.c.b16 %v2598, %v2596
  %v2621 = vpack.c.b16 %v2601, %v2599
  %v2622 = vpack.c.b16 %v2602, %v2600
  %v2623 = vpack.c.b16 %v2605, %v2603
  %v2624 = vpack.c.b16 %v2606, %v2604
  %v2625 = vpack.c.b16 %v2609, %v2607
  %v2626 = vpack.c.b16 %v2610, %v2608
  %v2627 = vpack.c.b16 %v2611, %v2611
  %v2628 = vpack.c.b16 %v2612, %v2612
  %v2644 = vsel %vm1874, %v1781, 0
  %v2647 = vsel %vm1899, %v2627, 0
  %v2650 = vsel %vm1899, %v2628, 0
  %2652 = vmatprep.subr.bf16.mxu0 %v2614
  %2653 = vmatpush1.bf16.msra.mxu0 %v2613
  %2654 = vmatprep.subr.bf16.mxu0 %v2616
  %2655 = vmatpush1.bf16.msra.mxu0 %v2615
  %2656 = vmatprep.subr.bf16.mxu0 %v2618
  %2657 = vmatpush1.bf16.msra.mxu0 %v2617
  %2658 = vmatprep.subr.bf16.mxu0 %v2620
  %2659 = vmatpush1.bf16.msra.mxu0 %v2619
  %2660 = vmatprep.subr.bf16.mxu0 %v2622
  %2661 = vmatpush1.bf16.msra.mxu0 %v2621
  %2662 = vmatprep.subr.bf16.mxu0 %v2624
  %2663 = vmatpush1.bf16.msra.mxu0 %v2623
  %2664 = vmatprep.subr.bf16.mxu0 %v2626
  %2665 = vmatpush1.bf16.msra.mxu0 %v2625
  %2666 = vmatprep.subr.bf16.mxu0 %v2650
  %2667 = vmatpush1.bf16.msra.mxu0 %v2647
  %2668 = vmatprep.subr.bf16.mxu0 0
  %2669 = vmatpush1.bf16.msra.mxu0 0
  %2670 = vmatprep.subr.bf16.mxu0 0
  %2671 = vmatpush1.bf16.msra.mxu0 0
  %2672 = vmatprep.subr.bf16.mxu0 0
  %2673 = vmatpush1.bf16.msra.mxu0 0
  %2674 = vmatprep.subr.bf16.mxu0 0
  %2675 = vmatpush1.bf16.msra.mxu0 0
  %2676 = vmatprep.subr.bf16.mxu0 0
  %2677 = vmatpush1.bf16.msra.mxu0 0
  %2678 = vmatprep.subr.bf16.mxu0 0
  %2679 = vmatpush1.bf16.msra.mxu0 0
  %2680 = vmatprep.subr.bf16.mxu0 0
  %2681 = vmatpush1.bf16.msra.mxu0 0
  %2682 = vmatprep.subr.bf16.mxu0 0
  %2683 = vmatpush1.bf16.msra.mxu0 0
  %2684 = vmatprep.mubr.bf16.mxu0 0
  %2685 = vmatmul.mubr.bf16.gmra.mrb[0].mxu0 %v1885
  %v2686 = vpop.f32.mrb[0].mxu0
  %v2687 = vadd.f32 0.0, %v2686
  %v2688 = vpop.f32.mrb[0].mxu0
  %v2689 = vadd.f32 0.0, %v2688
  %v2690 = vpop.f32.mrb[0].mxu0
  %v2691 = vadd.f32 0.0, %v2690
  %v2692 = vpop.f32.mrb[0].mxu0
  %v2693 = vadd.f32 0.0, %v2692
  %2694 = vmatprep.mubr.bf16.mxu0 0
  %2695 = vmatmul.mubr.bf16.gmra.mrb[0].mxu0 %v1888
  %v2696 = vpop.f32.mrb[0].mxu0
  %v2697 = vadd.f32 0.0, %v2696
  %v2698 = vpop.f32.mrb[0].mxu0
  %v2699 = vadd.f32 0.0, %v2698
  %v2700 = vpop.f32.mrb[0].mxu0
  %v2701 = vadd.f32 0.0, %v2700
  %v2702 = vpop.f32.mrb[0].mxu0
  %v2703 = vadd.f32 0.0, %v2702
  %2704 = vmatprep.mubr.bf16.mxu0 0
  %2705 = vmatmul.mubr.bf16.gmra.mrb[0].mxu0 %v1891
  %v2706 = vpop.f32.mrb[0].mxu0
  %v2707 = vadd.f32 0.0, %v2706
  %v2708 = vpop.f32.mrb[0].mxu0
  %v2709 = vadd.f32 0.0, %v2708
  %v2710 = vpop.f32.mrb[0].mxu0
  %v2711 = vadd.f32 0.0, %v2710
  %v2712 = vpop.f32.mrb[0].mxu0
  %v2713 = vadd.f32 0.0, %v2712
  %2714 = vmatprep.mubr.bf16.mxu0 0
  %2715 = vmatmul.mubr.bf16.gmra.mrb[0].mxu0 %v1894
  %v2716 = vpop.f32.mrb[0].mxu0
  %v2717 = vadd.f32 0.0, %v2716
  %v2718 = vpop.f32.mrb[0].mxu0
  %v2719 = vadd.f32 0.0, %v2718
  %v2720 = vpop.f32.mrb[0].mxu0
  %v2721 = vadd.f32 0.0, %v2720
  %v2722 = vpop.f32.mrb[0].mxu0
  %v2723 = vadd.f32 0.0, %v2722
  %2724 = vmatprep.mubr.bf16.mxu0 0
  %2725 = vmatmul.mubr.bf16.gmra.mrb[0].mxu0 %v1897
  %v2726 = vpop.f32.mrb[0].mxu0
  %v2727 = vadd.f32 0.0, %v2726
  %v2728 = vpop.f32.mrb[0].mxu0
  %v2729 = vadd.f32 0.0, %v2728
  %v2730 = vpop.f32.mrb[0].mxu0
  %v2731 = vadd.f32 0.0, %v2730
  %v2732 = vpop.f32.mrb[0].mxu0
  %v2733 = vadd.f32 0.0, %v2732
  %2734 = vmatprep.mubr.bf16.mxu0 0
  %2735 = vmatmul.mubr.bf16.gmra.mrb[0].mxu0 %v2154
  %v2736 = vpop.f32.mrb[0].mxu0
  %v2737 = vadd.f32 0.0, %v2736
  %v2738 = vpop.f32.mrb[0].mxu0
  %v2739 = vadd.f32 0.0, %v2738
  %v2740 = vpop.f32.mrb[0].mxu0
  %v2741 = vadd.f32 0.0, %v2740
  %v2742 = vpop.f32.mrb[0].mxu0
  %v2743 = vadd.f32 0.0, %v2742
  %2744 = vmatprep.mubr.bf16.mxu0 0
  %2745 = vmatmul.mubr.bf16.gmra.mrb[0].mxu0 %v2399
  %v2746 = vpop.f32.mrb[0].mxu0
  %v2747 = vadd.f32 0.0, %v2746
  %v2748 = vpop.f32.mrb[0].mxu0
  %v2749 = vadd.f32 0.0, %v2748
  %v2750 = vpop.f32.mrb[0].mxu0
  %v2751 = vadd.f32 0.0, %v2750
  %v2752 = vpop.f32.mrb[0].mxu0
  %v2753 = vadd.f32 0.0, %v2752
  %2754 = vmatprep.mubr.bf16.mxu0 0
  %2755 = vmatmul.mubr.bf16.gmra.mrb[0].mxu0 %v2644
  %v2756 = vpop.f32.mrb[0].mxu0
  %v2757 = vadd.f32 0.0, %v2756
  %v2758 = vpop.f32.mrb[0].mxu0
  %v2759 = vadd.f32 0.0, %v2758
  %v2760 = vpop.f32.mrb[0].mxu0
  %v2761 = vadd.f32 0.0, %v2760
  %v2762 = vpop.f32.mrb[0].mxu0
  %v2763 = vadd.f32 0.0, %v2762
  %2764 = vdwg.mxu0
  %v2765 = vadd.f32 %v2520, %v2687
  %v2766 = vadd.f32 %v2521, %v2689
  %v2767 = vadd.f32 %v2522, %v2691
  %v2768 = vadd.f32 %v2523, %v2693
  %v2769 = vadd.f32 %v2524, %v2697
  %v2770 = vadd.f32 %v2525, %v2699
  %v2771 = vadd.f32 %v2526, %v2701
  %v2772 = vadd.f32 %v2527, %v2703
  %v2773 = vadd.f32 %v2528, %v2707
  %v2774 = vadd.f32 %v2529, %v2709
  %v2775 = vadd.f32 %v2530, %v2711
  %v2776 = vadd.f32 %v2531, %v2713
  %v2777 = vadd.f32 %v2532, %v2717
  %v2778 = vadd.f32 %v2533, %v2719
  %v2779 = vadd.f32 %v2534, %v2721
  %v2780 = vadd.f32 %v2535, %v2723
  %v2781 = vadd.f32 %v2536, %v2727
  %v2782 = vadd.f32 %v2537, %v2729
  %v2783 = vadd.f32 %v2538, %v2731
  %v2784 = vadd.f32 %v2539, %v2733
  %v2785 = vadd.f32 %v2540, %v2737
  %v2786 = vadd.f32 %v2541, %v2739
  %v2787 = vadd.f32 %v2542, %v2741
  %v2788 = vadd.f32 %v2543, %v2743
  %v2789 = vadd.f32 %v2544, %v2747
  %v2790 = vadd.f32 %v2545, %v2749
  %v2791 = vadd.f32 %v2546, %v2751
  %v2792 = vadd.f32 %v2547, %v2753
  %v2793 = vadd.f32 %v2548, %v2757
  %v2794 = vadd.f32 %v2549, %v2759
  %v2795 = vadd.f32 %v2550, %v2761
  %v2796 = vadd.f32 %v2551, %v2763
  %s2797 = scalar_lea.vmem %s4, 480
  %v2798 = vld [vmem:[%s2797] sm:$0xff]
  %v2799 = vld [vmem:[%s2797 + $0x8] sm:$0xff]
  %v2800 = vld [vmem:[%s2797 + $0x10] sm:$0xff]
  %v2801 = vld [vmem:[%s2797 + $0x18] sm:$0xff]
  %v2802 = vld [vmem:[%s2797 + $0x20] sm:$0xff]
  %v2803 = vld [vmem:[%s2797 + $0x28] sm:$0xff]
  %v2804 = vld [vmem:[%s2797 + $0x30] sm:$0xff]
  %v2805 = vld [vmem:[%s2797 + $0x38] sm:$0xff]
  %v2806 = vld [vmem:[%s2797 + $0x40] sm:$0xff]
  %v2807 = vld [vmem:[%s2797 + $0x48] sm:$0xff]
  %v2808 = vld [vmem:[%s2797 + $0x50] sm:$0xff]
  %v2809 = vld [vmem:[%s2797 + $0x58] sm:$0xff]
  %v2810 = vld [vmem:[%s2797 + $0x60] sm:$0xff]
  %v2811 = vld [vmem:[%s2797 + $0x68] sm:$0xff]
  %v2812 = vld [vmem:[%s2797 + $0x70] sm:$0xff]
  %v2828 = vunpack.c.l.b16 %v2798
  %v2829 = vunpack.c.h.b16 %v2798
  %v2830 = vunpack.c.l.b16 %v2799
  %v2831 = vunpack.c.h.b16 %v2799
  %v2832 = vunpack.c.l.b16 %v2800
  %v2833 = vunpack.c.h.b16 %v2800
  %v2834 = vunpack.c.l.b16 %v2801
  %v2835 = vunpack.c.h.b16 %v2801
  %v2836 = vunpack.c.l.b16 %v2802
  %v2837 = vunpack.c.h.b16 %v2802
  %v2838 = vunpack.c.l.b16 %v2803
  %v2839 = vunpack.c.h.b16 %v2803
  %v2840 = vunpack.c.l.b16 %v2804
  %v2841 = vunpack.c.h.b16 %v2804
  %v2842 = vunpack.c.l.b16 %v2805
  %v2843 = vunpack.c.h.b16 %v2805
  %v2844 = vunpack.c.l.b16 %v2806
  %v2845 = vunpack.c.h.b16 %v2806
  %v2846 = vunpack.c.l.b16 %v2807
  %v2847 = vunpack.c.h.b16 %v2807
  %v2848 = vunpack.c.l.b16 %v2808
  %v2849 = vunpack.c.h.b16 %v2808
  %v2850 = vunpack.c.l.b16 %v2809
  %v2851 = vunpack.c.h.b16 %v2809
  %v2852 = vunpack.c.l.b16 %v2810
  %v2853 = vunpack.c.h.b16 %v2810
  %v2854 = vunpack.c.l.b16 %v2811
  %v2855 = vunpack.c.h.b16 %v2811
  %v2856 = vunpack.c.l.b16 %v2812
  %v2857 = vunpack.c.h.b16 %v2812
  %v2858 = vpack.c.b16 %v2830, %v2828
  %v2859 = vpack.c.b16 %v2831, %v2829
  %v2860 = vpack.c.b16 %v2834, %v2832
  %v2861 = vpack.c.b16 %v2835, %v2833
  %v2862 = vpack.c.b16 %v2838, %v2836
  %v2863 = vpack.c.b16 %v2839, %v2837
  %v2864 = vpack.c.b16 %v2842, %v2840
  %v2865 = vpack.c.b16 %v2843, %v2841
  %v2866 = vpack.c.b16 %v2846, %v2844
  %v2867 = vpack.c.b16 %v2847, %v2845
  %v2868 = vpack.c.b16 %v2850, %v2848
  %v2869 = vpack.c.b16 %v2851, %v2849
  %v2870 = vpack.c.b16 %v2854, %v2852
  %v2871 = vpack.c.b16 %v2855, %v2853
  %v2872 = vpack.c.b16 %v2856, %v2856
  %v2873 = vpack.c.b16 %v2857, %v2857
  %v2889 = vsel %vm1874, %v1782, 0
  %v2892 = vsel %vm1899, %v2872, 0
  %v2895 = vsel %vm1899, %v2873, 0
  %2897 = vmatprep.subr.bf16.mxu0 %v2859
  %2898 = vmatpush1.bf16.msra.mxu0 %v2858
  %2899 = vmatprep.subr.bf16.mxu0 %v2861
  %2900 = vmatpush1.bf16.msra.mxu0 %v2860
  %2901 = vmatprep.subr.bf16.mxu0 %v2863
  %2902 = vmatpush1.bf16.msra.mxu0 %v2862
  %2903 = vmatprep.subr.bf16.mxu0 %v2865
  %2904 = vmatpush1.bf16.msra.mxu0 %v2864
  %2905 = vmatprep.subr.bf16.mxu0 %v2867
  %2906 = vmatpush1.bf16.msra.mxu0 %v2866
  %2907 = vmatprep.subr.bf16.mxu0 %v2869
  %2908 = vmatpush1.bf16.msra.mxu0 %v2868
  %2909 = vmatprep.subr.bf16.mxu0 %v2871
  %2910 = vmatpush1.bf16.msra.mxu0 %v2870
  %2911 = vmatprep.subr.bf16.mxu0 %v2895
  %2912 = vmatpush1.bf16.msra.mxu0 %v2892
  %2913 = vmatprep.subr.bf16.mxu0 0
  %2914 = vmatpush1.bf16.msra.mxu0 0
  %2915 = vmatprep.subr.bf16.mxu0 0
  %2916 = vmatpush1.bf16.msra.mxu0 0
  %2917 = vmatprep.subr.bf16.mxu0 0
  %2918 = vmatpush1.bf16.msra.mxu0 0
  %2919 = vmatprep.subr.bf16.mxu0 0
  %2920 = vmatpush1.bf16.msra.mxu0 0
  %2921 = vmatprep.subr.bf16.mxu0 0
  %2922 = vmatpush1.bf16.msra.mxu0 0
  %2923 = vmatprep.subr.bf16.mxu0 0
  %2924 = vmatpush1.bf16.msra.mxu0 0
  %2925 = vmatprep.subr.bf16.mxu0 0
  %2926 = vmatpush1.bf16.msra.mxu0 0
  %2927 = vmatprep.subr.bf16.mxu0 0
  %2928 = vmatpush1.bf16.msra.mxu0 0
  %2929 = vmatprep.mubr.bf16.mxu0 0
  %2930 = vmatmul.mubr.bf16.gmra.mrb[0].mxu0 %v1888
  %v2931 = vpop.f32.mrb[0].mxu0
  %v2932 = vadd.f32 0.0, %v2931
  %v2933 = vpop.f32.mrb[0].mxu0
  %v2934 = vadd.f32 0.0, %v2933
  %v2935 = vpop.f32.mrb[0].mxu0
  %v2936 = vadd.f32 0.0, %v2935
  %v2937 = vpop.f32.mrb[0].mxu0
  %v2938 = vadd.f32 0.0, %v2937
  %2939 = vmatprep.mubr.bf16.mxu0 0
  %2940 = vmatmul.mubr.bf16.gmra.mrb[0].mxu0 %v1891
  %v2941 = vpop.f32.mrb[0].mxu0
  %v2942 = vadd.f32 0.0, %v2941
  %v2943 = vpop.f32.mrb[0].mxu0
  %v2944 = vadd.f32 0.0, %v2943
  %v2945 = vpop.f32.mrb[0].mxu0
  %v2946 = vadd.f32 0.0, %v2945
  %v2947 = vpop.f32.mrb[0].mxu0
  %v2948 = vadd.f32 0.0, %v2947
  %2949 = vmatprep.mubr.bf16.mxu0 0
  %2950 = vmatmul.mubr.bf16.gmra.mrb[0].mxu0 %v1894
  %v2951 = vpop.f32.mrb[0].mxu0
  %v2952 = vadd.f32 0.0, %v2951
  %v2953 = vpop.f32.mrb[0].mxu0
  %v2954 = vadd.f32 0.0, %v2953
  %v2955 = vpop.f32.mrb[0].mxu0
  %v2956 = vadd.f32 0.0, %v2955
  %v2957 = vpop.f32.mrb[0].mxu0
  %v2958 = vadd.f32 0.0, %v2957
  %2959 = vmatprep.mubr.bf16.mxu0 0
  %2960 = vmatmul.mubr.bf16.gmra.mrb[0].mxu0 %v1897
  %v2961 = vpop.f32.mrb[0].mxu0
  %v2962 = vadd.f32 0.0, %v2961
  %v2963 = vpop.f32.mrb[0].mxu0
  %v2964 = vadd.f32 0.0, %v2963
  %v2965 = vpop.f32.mrb[0].mxu0
  %v2966 = vadd.f32 0.0, %v2965
  %v2967 = vpop.f32.mrb[0].mxu0
  %v2968 = vadd.f32 0.0, %v2967
  %2969 = vmatprep.mubr.bf16.mxu0 0
  %2970 = vmatmul.mubr.bf16.gmra.mrb[0].mxu0 %v2154
  %v2971 = vpop.f32.mrb[0].mxu0
  %v2972 = vadd.f32 0.0, %v2971
  %v2973 = vpop.f32.mrb[0].mxu0
  %v2974 = vadd.f32 0.0, %v2973
  %v2975 = vpop.f32.mrb[0].mxu0
  %v2976 = vadd.f32 0.0, %v2975
  %v2977 = vpop.f32.mrb[0].mxu0
  %v2978 = vadd.f32 0.0, %v2977
  %2979 = vmatprep.mubr.bf16.mxu0 0
  %2980 = vmatmul.mubr.bf16.gmra.mrb[0].mxu0 %v2399
  %v2981 = vpop.f32.mrb[0].mxu0
  %v2982 = vadd.f32 0.0, %v2981
  %v2983 = vpop.f32.mrb[0].mxu0
  %v2984 = vadd.f32 0.0, %v2983
  %v2985 = vpop.f32.mrb[0].mxu0
  %v2986 = vadd.f32 0.0, %v2985
  %v2987 = vpop.f32.mrb[0].mxu0
  %v2988 = vadd.f32 0.0, %v2987
  %2989 = vmatprep.mubr.bf16.mxu0 0
  %2990 = vmatmul.mubr.bf16.gmra.mrb[0].mxu0 %v2644
  %v2991 = vpop.f32.mrb[0].mxu0
  %v2992 = vadd.f32 0.0, %v2991
  %v2993 = vpop.f32.mrb[0].mxu0
  %v2994 = vadd.f32 0.0, %v2993
  %v2995 = vpop.f32.mrb[0].mxu0
  %v2996 = vadd.f32 0.0, %v2995
  %v2997 = vpop.f32.mrb[0].mxu0
  %v2998 = vadd.f32 0.0, %v2997
  %2999 = vmatprep.mubr.bf16.mxu0 0
  %3000 = vmatmul.mubr.bf16.gmra.mrb[0].mxu0 %v2889
  %v3001 = vpop.f32.mrb[0].mxu0
  %v3002 = vadd.f32 0.0, %v3001
  %v3003 = vpop.f32.mrb[0].mxu0
  %v3004 = vadd.f32 0.0, %v3003
  %v3005 = vpop.f32.mrb[0].mxu0
  %v3006 = vadd.f32 0.0, %v3005
  %v3007 = vpop.f32.mrb[0].mxu0
  %v3008 = vadd.f32 0.0, %v3007
  %3009 = vdwg.mxu0
  %v3010 = vadd.f32 %v2765, %v2932
  %v3011 = vadd.f32 %v2766, %v2934
  %v3012 = vadd.f32 %v2767, %v2936
  %v3013 = vadd.f32 %v2768, %v2938
  %v3014 = vadd.f32 %v2769, %v2942
  %v3015 = vadd.f32 %v2770, %v2944
  %v3016 = vadd.f32 %v2771, %v2946
  %v3017 = vadd.f32 %v2772, %v2948
  %v3018 = vadd.f32 %v2773, %v2952
  %v3019 = vadd.f32 %v2774, %v2954
  %v3020 = vadd.f32 %v2775, %v2956
  %v3021 = vadd.f32 %v2776, %v2958
  %v3022 = vadd.f32 %v2777, %v2962
  %v3023 = vadd.f32 %v2778, %v2964
  %v3024 = vadd.f32 %v2779, %v2966
  %v3025 = vadd.f32 %v2780, %v2968
  %v3026 = vadd.f32 %v2781, %v2972
  %v3027 = vadd.f32 %v2782, %v2974
  %v3028 = vadd.f32 %v2783, %v2976
  %v3029 = vadd.f32 %v2784, %v2978
  %v3030 = vadd.f32 %v2785, %v2982
  %v3031 = vadd.f32 %v2786, %v2984
  %v3032 = vadd.f32 %v2787, %v2986
  %v3033 = vadd.f32 %v2788, %v2988
  %v3034 = vadd.f32 %v2789, %v2992
  %v3035 = vadd.f32 %v2790, %v2994
  %v3036 = vadd.f32 %v2791, %v2996
  %v3037 = vadd.f32 %v2792, %v2998
  %v3038 = vadd.f32 %v2793, %v3002
  %v3039 = vadd.f32 %v2794, %v3004
  %v3040 = vadd.f32 %v2795, %v3006
  %v3041 = vadd.f32 %v2796, %v3008
  %v3042 = vmax.f32 %v3010, %v3014
  %v3043 = vmax.f32 %v3011, %v3015
  %v3044 = vmax.f32 %v3012, %v3016
  %v3045 = vmax.f32 %v3013, %v3017
  %v3046 = vmax.f32 %v3018, %v3022
  %v3047 = vmax.f32 %v3019, %v3023
  %v3048 = vmax.f32 %v3020, %v3024
  %v3049 = vmax.f32 %v3021, %v3025
  %v3050 = vmax.f32 %v3026, %v3030
  %v3051 = vmax.f32 %v3027, %v3031
  %v3052 = vmax.f32 %v3028, %v3032
  %v3053 = vmax.f32 %v3029, %v3033
  %v3054 = vmax.f32 %v3034, %v3038
  %v3055 = vmax.f32 %v3035, %v3039
  %v3056 = vmax.f32 %v3036, %v3040
  %v3057 = vmax.f32 %v3037, %v3041
  %3074 = vrot.lane.b32.xlu0 %v3042, 108
  %v3075 = vpop.permute.xlu0 %3074
  %3076 = vrot.lane.b32.xlu0 %v3043, 108
  %v3077 = vpop.permute.xlu0 %3076
  %3078 = vrot.lane.b32.xlu0 %v3044, 108
  %v3079 = vpop.permute.xlu0 %3078
  %3080 = vrot.lane.b32.xlu0 %v3045, 108
  %v3081 = vpop.permute.xlu0 %3080
  %3082 = vrot.lane.b32.xlu0 %v3046, 108
  %v3083 = vpop.permute.xlu0 %3082
  %3084 = vrot.lane.b32.xlu0 %v3047, 108
  %v3085 = vpop.permute.xlu0 %3084
  %3086 = vrot.lane.b32.xlu0 %v3048, 108
  %v3087 = vpop.permute.xlu0 %3086
  %3088 = vrot.lane.b32.xlu0 %v3049, 108
  %v3089 = vpop.permute.xlu0 %3088
  %3090 = vrot.lane.b32.xlu0 %v3050, 108
  %v3091 = vpop.permute.xlu0 %3090
  %3092 = vrot.lane.b32.xlu0 %v3051, 108
  %v3093 = vpop.permute.xlu0 %3092
  %3094 = vrot.lane.b32.xlu0 %v3052, 108
  %v3095 = vpop.permute.xlu0 %3094
  %3096 = vrot.lane.b32.xlu0 %v3053, 108
  %v3097 = vpop.permute.xlu0 %3096
  %3098 = vrot.lane.b32.xlu0 %v3054, 108
  %v3099 = vpop.permute.xlu0 %3098
  %3100 = vrot.lane.b32.xlu0 %v3055, 108
  %v3101 = vpop.permute.xlu0 %3100
  %3102 = vrot.lane.b32.xlu0 %v3056, 108
  %v3103 = vpop.permute.xlu0 %3102
  %3104 = vrot.lane.b32.xlu0 %v3057, 108
  %v3105 = vpop.permute.xlu0 %3104
  %vm3106 = vcmask 883712
  %v3107 = vsel %vm3106, %v3075, %v3077
  %v3108 = vsel %vm3106, %v3079, %v3081
  %v3109 = vsel %vm3106, %v3083, %v3085
  %v3110 = vsel %vm3106, %v3087, %v3089
  %v3111 = vsel %vm3106, %v3091, %v3093
  %v3112 = vsel %vm3106, %v3095, %v3097
  %v3113 = vsel %vm3106, %v3099, %v3101
  %v3114 = vsel %vm3106, %v3103, %v3105
  %v3131 = vmax.f32 %v3042, %v3107
  %v3132 = vmax.f32 %v3043, %v3077
  %v3133 = vmax.f32 %v3044, %v3108
  %v3134 = vmax.f32 %v3045, %v3081
  %v3135 = vmax.f32 %v3046, %v3109
  %v3136 = vmax.f32 %v3047, %v3085
  %v3137 = vmax.f32 %v3048, %v3110
  %v3138 = vmax.f32 %v3049, %v3089
  %v3139 = vmax.f32 %v3050, %v3111
  %v3140 = vmax.f32 %v3051, %v3093
  %v3141 = vmax.f32 %v3052, %v3112
  %v3142 = vmax.f32 %v3053, %v3097
  %v3143 = vmax.f32 %v3054, %v3113
  %v3144 = vmax.f32 %v3055, %v3101
  %v3145 = vmax.f32 %v3056, %v3114
  %v3146 = vmax.f32 %v3057, %v3105
  %v3147 = vpack.c.bf16 %v3133, %v3131
  %v3148 = vpack.c.bf16 %v3134, %v3132
  %v3149 = vpack.c.bf16 %v3137, %v3135
  %v3150 = vpack.c.bf16 %v3138, %v3136
  %v3151 = vpack.c.bf16 %v3141, %v3139
  %v3152 = vpack.c.bf16 %v3142, %v3140
  %v3153 = vpack.c.bf16 %v3145, %v3143
  %v3154 = vpack.c.bf16 %v3146, %v3144
  %v3155 = vld [vmem:[%s6] sm:$0xf]
  %v3156 = vld [vmem:[%s6 + $0x4] sm:$0xf]
  %v3157 = vld [vmem:[%s6 + $0x8] sm:$0xf]
  %v3158 = vld [vmem:[%s6 + $0xc] sm:$0xf]
  %v3159 = vld [vmem:[%s6 + $0x10] sm:$0xf]
  %v3160 = vld [vmem:[%s6 + $0x14] sm:$0xf]
  %v3161 = vld [vmem:[%s6 + $0x18] sm:$0xf]
  %v3162 = vld [vmem:[%s6 + $0x1c] sm:$0xf]
  %v3163 = vld [vmem:[%s6 + $0x20] sm:$0xf]
  %v3164 = vld [vmem:[%s6 + $0x24] sm:$0xf]
  %v3165 = vld [vmem:[%s6 + $0x28] sm:$0xf]
  %v3166 = vld [vmem:[%s6 + $0x2c] sm:$0xf]
  %v3167 = vld [vmem:[%s6 + $0x30] sm:$0xf]
  %v3168 = vld [vmem:[%s6 + $0x34] sm:$0xf]
  %v3169 = vld [vmem:[%s6 + $0x38] sm:$0xf]
  %v3170 = vld [vmem:[%s6 + $0x3c] sm:$0xf]
  %v3171 = vld [vmem:[%s6 + $0x40] sm:$0xf]
  %v3172 = vld [vmem:[%s6 + $0x44] sm:$0x3]
  %v3191 = vunpack.c.l.b16 %v3155
  %v3192 = vunpack.c.l.b16 %v3156
  %v3193 = vunpack.c.l.b16 %v3157
  %v3194 = vunpack.c.l.b16 %v3158
  %v3195 = vunpack.c.l.b16 %v3159
  %v3196 = vunpack.c.l.b16 %v3160
  %v3197 = vunpack.c.l.b16 %v3161
  %v3198 = vunpack.c.l.b16 %v3162
  %v3199 = vunpack.c.l.b16 %v3163
  %v3200 = vunpack.c.l.b16 %v3164
  %v3201 = vunpack.c.l.b16 %v3165
  %v3202 = vunpack.c.l.b16 %v3166
  %v3203 = vunpack.c.l.b16 %v3167
  %v3204 = vunpack.c.l.b16 %v3168
  %v3205 = vunpack.c.l.b16 %v3169
  %v3206 = vunpack.c.l.b16 %v3170
  %v3207 = vunpack.c.l.b16 %v3171
  %v3208 = vunpack.c.l.b16 %v3172
  %v3209 = vpack.c.b16 %v3192, %v3191
  %v3210 = vpack.c.b16 %v3194, %v3193
  %v3211 = vpack.c.b16 %v3196, %v3195
  %v3212 = vpack.c.b16 %v3198, %v3197
  %v3213 = vpack.c.b16 %v3200, %v3199
  %v3214 = vpack.c.b16 %v3202, %v3201
  %v3215 = vpack.c.b16 %v3204, %v3203
  %v3216 = vpack.c.b16 %v3206, %v3205
  %v3217 = vpack.c.b16 %v3208, %v3207
  %v3227 = vsel %vm795, %v3148, 0
  %v3230 = vsel %vm795, %v3150, 0
  %v3233 = vsel %vm795, %v3152, 0
  %v3236 = vsel %vm795, %v3154, 0
  %v3239 = vsel %vm844, %v3217, 0
  %3241 = vmatprep.subr.bf16.mxu0 0
  %3242 = vmatpush1.bf16.msra.mxu0 %v3209
  %3243 = vmatprep.subr.bf16.mxu0 0
  %3244 = vmatpush1.bf16.msra.mxu0 %v3210
  %3245 = vmatprep.subr.bf16.mxu0 0
  %3246 = vmatpush1.bf16.msra.mxu0 %v3211
  %3247 = vmatprep.subr.bf16.mxu0 0
  %3248 = vmatpush1.bf16.msra.mxu0 %v3212
  %3249 = vmatprep.subr.bf16.mxu0 0
  %3250 = vmatpush1.bf16.msra.mxu0 %v3213
  %3251 = vmatprep.subr.bf16.mxu0 0
  %3252 = vmatpush1.bf16.msra.mxu0 %v3214
  %3253 = vmatprep.subr.bf16.mxu0 0
  %3254 = vmatpush1.bf16.msra.mxu0 %v3215
  %3255 = vmatprep.subr.bf16.mxu0 0
  %3256 = vmatpush1.bf16.msra.mxu0 %v3216
  %3257 = vmatprep.subr.bf16.mxu0 0
  %3258 = vmatpush1.bf16.msra.mxu0 %v3239
  %3259 = vmatprep.subr.bf16.mxu0 0
  %3260 = vmatpush1.bf16.msra.mxu0 0
  %3261 = vmatprep.subr.bf16.mxu0 0
  %3262 = vmatpush1.bf16.msra.mxu0 0
  %3263 = vmatprep.subr.bf16.mxu0 0
  %3264 = vmatpush1.bf16.msra.mxu0 0
  %3265 = vmatprep.subr.bf16.mxu0 0
  %3266 = vmatpush1.bf16.msra.mxu0 0
  %3267 = vmatprep.subr.bf16.mxu0 0
  %3268 = vmatpush1.bf16.msra.mxu0 0
  %3269 = vmatprep.subr.bf16.mxu0 0
  %3270 = vmatpush1.bf16.msra.mxu0 0
  %3271 = vmatprep.subr.bf16.mxu0 0
  %3272 = vmatpush1.bf16.msra.mxu0 0
  %3273 = vmatprep.mubr.bf16.mxu0 %v3227
  %3274 = vmatmul.mubr.bf16.gmra.mrb[0].mxu0 %v3147
  %v3275 = vpop.f32.mrb[0].mxu0
  %v3276 = vadd.f32 0.0, %v3275
  %v3277 = vpop.f32.mrb[0].mxu0
  %v3278 = vpop.f32.mrb[0].mxu0
  %v3279 = vadd.f32 0.0, %v3278
  %v3280 = vpop.f32.mrb[0].mxu0
  %3281 = vmatprep.mubr.bf16.mxu0 %v3230
  %3282 = vmatmul.mubr.bf16.gmra.mrb[0].mxu0 %v3149
  %v3283 = vpop.f32.mrb[0].mxu0
  %v3284 = vadd.f32 0.0, %v3283
  %v3285 = vpop.f32.mrb[0].mxu0
  %v3286 = vpop.f32.mrb[0].mxu0
  %v3287 = vadd.f32 0.0, %v3286
  %v3288 = vpop.f32.mrb[0].mxu0
  %3289 = vmatprep.mubr.bf16.mxu0 %v3233
  %3290 = vmatmul.mubr.bf16.gmra.mrb[0].mxu0 %v3151
  %v3291 = vpop.f32.mrb[0].mxu0
  %v3292 = vadd.f32 0.0, %v3291
  %v3293 = vpop.f32.mrb[0].mxu0
  %v3294 = vpop.f32.mrb[0].mxu0
  %v3295 = vadd.f32 0.0, %v3294
  %v3296 = vpop.f32.mrb[0].mxu0
  %3297 = vmatprep.mubr.bf16.mxu0 %v3236
  %3298 = vmatmul.mubr.bf16.gmra.mrb[0].mxu0 %v3153
  %v3299 = vpop.f32.mrb[0].mxu0
  %v3300 = vadd.f32 0.0, %v3299
  %v3301 = vpop.f32.mrb[0].mxu0
  %v3302 = vpop.f32.mrb[0].mxu0
  %v3303 = vadd.f32 0.0, %v3302
  %v3304 = vpop.f32.mrb[0].mxu0
  %3305 = vdwg.mxu0
  %v3306 = vmax.f32 %v3276, 0.0
  %v3307 = vmax.f32 %v3279, 0.0
  %v3308 = vmax.f32 %v3284, 0.0
  %v3309 = vmax.f32 %v3287, 0.0
  %v3310 = vmax.f32 %v3292, 0.0
  %v3311 = vmax.f32 %v3295, 0.0
  %v3312 = vmax.f32 %v3300, 0.0
  %v3313 = vmax.f32 %v3303, 0.0
  %v3314 = vpack.c.bf16 %v3307, %v3306
  %v3315 = vpack.c.bf16 %v3309, %v3308
  %v3316 = vpack.c.bf16 %v3311, %v3310
  %v3317 = vpack.c.bf16 %v3313, %v3312
  %v3318 = vld [vmem:[%s8] sm:$0x1]
  %v3319 = vld [vmem:[%s7] sm:$0xf]
  %v3320 = vld [vmem:[%s7 + $0x4] sm:$0xf]
  %v3321 = vld [vmem:[%s7 + $0x8] sm:$0xf]
  %v3322 = vld [vmem:[%s7 + $0xc] sm:$0xf]
  %v3323 = vld [vmem:[%s7 + $0x10] sm:$0xf]
  %v3324 = vld [vmem:[%s7 + $0x14] sm:$0xf]
  %v3325 = vld [vmem:[%s7 + $0x18] sm:$0xf]
  %v3326 = vld [vmem:[%s7 + $0x1c] sm:$0xf]
  %v3327 = vld [vmem:[%s7 + $0x20] sm:$0xf]
  %v3328 = vld [vmem:[%s7 + $0x24] sm:$0xf]
  %v3339 = vunpack.c.l.b16 %v3319
  %v3340 = vunpack.c.l.b16 %v3320
  %v3341 = vunpack.c.l.b16 %v3321
  %v3342 = vunpack.c.l.b16 %v3322
  %v3343 = vunpack.c.l.b16 %v3323
  %v3344 = vunpack.c.l.b16 %v3324
  %v3345 = vunpack.c.l.b16 %v3325
  %v3346 = vunpack.c.l.b16 %v3326
  %v3347 = vunpack.c.l.b16 %v3327
  %v3348 = vunpack.c.l.b16 %v3328
  %v3349 = vpack.c.b16 %v3340, %v3339
  %v3350 = vpack.c.b16 %v3342, %v3341
  %v3351 = vpack.c.b16 %v3344, %v3343
  %v3352 = vpack.c.b16 %v3346, %v3345
  %v3353 = vpack.c.b16 %v3348, %v3347
  %vm3359 = vcmask 654336
  %v3361 = vsel %vm3359, %v3314, 0
  %3363 = vmatprep.subr.bf16.mxu0 0
  %3364 = vmatpush1.bf16.msra.mxu0 %v3349
  %3365 = vmatprep.subr.bf16.mxu0 0
  %3366 = vmatpush1.bf16.msra.mxu0 %v3350
  %3367 = vmatprep.subr.bf16.mxu0 0
  %3368 = vmatpush1.bf16.msra.mxu0 %v3351
  %3369 = vmatprep.subr.bf16.mxu0 0
  %3370 = vmatpush1.bf16.msra.mxu0 %v3352
  %3371 = vmatprep.subr.bf16.mxu0 0
  %3372 = vmatpush1.bf16.msra.mxu0 %v3353
  %3373 = vmatprep.subr.bf16.mxu0 0
  %3374 = vmatpush1.bf16.msra.mxu0 0
  %3375 = vmatprep.subr.bf16.mxu0 0
  %3376 = vmatpush1.bf16.msra.mxu0 0
  %3377 = vmatprep.subr.bf16.mxu0 0
  %3378 = vmatpush1.bf16.msra.mxu0 0
  %3379 = vmatprep.subr.bf16.mxu0 0
  %3380 = vmatpush1.bf16.msra.mxu0 0
  %3381 = vmatprep.subr.bf16.mxu0 0
  %3382 = vmatpush1.bf16.msra.mxu0 0
  %3383 = vmatprep.subr.bf16.mxu0 0
  %3384 = vmatpush1.bf16.msra.mxu0 0
  %3385 = vmatprep.subr.bf16.mxu0 0
  %3386 = vmatpush1.bf16.msra.mxu0 0
  %3387 = vmatprep.subr.bf16.mxu0 0
  %3388 = vmatpush1.bf16.msra.mxu0 0
  %3389 = vmatprep.subr.bf16.mxu0 0
  %3390 = vmatpush1.bf16.msra.mxu0 0
  %3391 = vmatprep.subr.bf16.mxu0 0
  %3392 = vmatpush1.bf16.msra.mxu0 0
  %3393 = vmatprep.subr.bf16.mxu0 0
  %3394 = vmatpush1.bf16.msra.mxu0 0
  %3395 = vmatprep.mubr.bf16.mxu0 0
  %3396 = vmatmul.mubr.bf16.gmra.mrb[0].mxu0 %v3361
  %v3397 = vpop.f32.mrb[0].mxu0
  %v3398 = vadd.f32 0.0, %v3397
  %v3399 = vpop.f32.mrb[0].mxu0
  %v3400 = vpop.f32.mrb[0].mxu0
  %v3401 = vadd.f32 0.0, %v3400
  %v3402 = vpop.f32.mrb[0].mxu0
  %3403 = vdwg.mxu0
  %v3405 = vlaneseq
  %v3406 = vshrl.u32 %v3405, 7
  %v3407 = vsub.s32 0, %v3406
  %v3408 = vrot.slane %v3318, %v3407
  %v3410 = vadd.f32 %v3408, %v3398
  %v3411 = vadd.f32 %v3408, %v3401
  %s3412 = scalar_lea.vmem %s7, 40
  %v3413 = vld [vmem:[%s3412] sm:$0xf]
  %v3414 = vld [vmem:[%s3412 + $0x4] sm:$0xf]
  %v3415 = vld [vmem:[%s3412 + $0x8] sm:$0xf]
  %v3416 = vld [vmem:[%s3412 + $0xc] sm:$0xf]
  %v3417 = vld [vmem:[%s3412 + $0x10] sm:$0xf]
  %v3418 = vld [vmem:[%s3412 + $0x14] sm:$0xf]
  %v3419 = vld [vmem:[%s3412 + $0x18] sm:$0xf]
  %v3420 = vld [vmem:[%s3412 + $0x1c] sm:$0xf]
  %v3421 = vld [vmem:[%s3412 + $0x20] sm:$0xf]
  %v3422 = vld [vmem:[%s3412 + $0x24] sm:$0xf]
  %v3433 = vunpack.c.l.b16 %v3413
  %v3434 = vunpack.c.l.b16 %v3414
  %v3435 = vunpack.c.l.b16 %v3415
  %v3436 = vunpack.c.l.b16 %v3416
  %v3437 = vunpack.c.l.b16 %v3417
  %v3438 = vunpack.c.l.b16 %v3418
  %v3439 = vunpack.c.l.b16 %v3419
  %v3440 = vunpack.c.l.b16 %v3420
  %v3441 = vunpack.c.l.b16 %v3421
  %v3442 = vunpack.c.l.b16 %v3422
  %v3443 = vpack.c.b16 %v3434, %v3433
  %v3444 = vpack.c.b16 %v3436, %v3435
  %v3445 = vpack.c.b16 %v3438, %v3437
  %v3446 = vpack.c.b16 %v3440, %v3439
  %v3447 = vpack.c.b16 %v3442, %v3441
  %v3454 = vsel %vm3359, %v3315, 0
  %3456 = vmatprep.subr.bf16.mxu0 0
  %3457 = vmatpush1.bf16.msra.mxu0 %v3443
  %3458 = vmatprep.subr.bf16.mxu0 0
  %3459 = vmatpush1.bf16.msra.mxu0 %v3444
  %3460 = vmatprep.subr.bf16.mxu0 0
  %3461 = vmatpush1.bf16.msra.mxu0 %v3445
  %3462 = vmatprep.subr.bf16.mxu0 0
  %3463 = vmatpush1.bf16.msra.mxu0 %v3446
  %3464 = vmatprep.subr.bf16.mxu0 0
  %3465 = vmatpush1.bf16.msra.mxu0 %v3447
  %3466 = vmatprep.subr.bf16.mxu0 0
  %3467 = vmatpush1.bf16.msra.mxu0 0
  %3468 = vmatprep.subr.bf16.mxu0 0
  %3469 = vmatpush1.bf16.msra.mxu0 0
  %3470 = vmatprep.subr.bf16.mxu0 0
  %3471 = vmatpush1.bf16.msra.mxu0 0
  %3472 = vmatprep.subr.bf16.mxu0 0
  %3473 = vmatpush1.bf16.msra.mxu0 0
  %3474 = vmatprep.subr.bf16.mxu0 0
  %3475 = vmatpush1.bf16.msra.mxu0 0
  %3476 = vmatprep.subr.bf16.mxu0 0
  %3477 = vmatpush1.bf16.msra.mxu0 0
  %3478 = vmatprep.subr.bf16.mxu0 0
  %3479 = vmatpush1.bf16.msra.mxu0 0
  %3480 = vmatprep.subr.bf16.mxu0 0
  %3481 = vmatpush1.bf16.msra.mxu0 0
  %3482 = vmatprep.subr.bf16.mxu0 0
  %3483 = vmatpush1.bf16.msra.mxu0 0
  %3484 = vmatprep.subr.bf16.mxu0 0
  %3485 = vmatpush1.bf16.msra.mxu0 0
  %3486 = vmatprep.subr.bf16.mxu0 0
  %3487 = vmatpush1.bf16.msra.mxu0 0
  %3488 = vmatprep.mubr.bf16.mxu0 0
  %3489 = vmatmul.mubr.bf16.gmra.mrb[0].mxu0 %v3454
  %v3490 = vpop.f32.mrb[0].mxu0
  %v3491 = vadd.f32 0.0, %v3490
  %v3492 = vpop.f32.mrb[0].mxu0
  %v3493 = vpop.f32.mrb[0].mxu0
  %v3494 = vadd.f32 0.0, %v3493
  %v3495 = vpop.f32.mrb[0].mxu0
  %3496 = vdwg.mxu0
  %v3497 = vadd.f32 %v3410, %v3491
  %v3498 = vadd.f32 %v3411, %v3494
  %s3499 = scalar_lea.vmem %s7, 80
  %v3500 = vld [vmem:[%s3499] sm:$0xf]
  %v3501 = vld [vmem:[%s3499 + $0x4] sm:$0xf]
  %v3502 = vld [vmem:[%s3499 + $0x8] sm:$0xf]
  %v3503 = vld [vmem:[%s3499 + $0xc] sm:$0xf]
  %v3504 = vld [vmem:[%s3499 + $0x10] sm:$0xf]
  %v3505 = vld [vmem:[%s3499 + $0x14] sm:$0xf]
  %v3506 = vld [vmem:[%s3499 + $0x18] sm:$0xf]
  %v3507 = vld [vmem:[%s3499 + $0x1c] sm:$0xf]
  %v3508 = vld [vmem:[%s3499 + $0x20] sm:$0xf]
  %v3509 = vld [vmem:[%s3499 + $0x24] sm:$0xf]
  %v3520 = vunpack.c.l.b16 %v3500
  %v3521 = vunpack.c.l.b16 %v3501
  %v3522 = vunpack.c.l.b16 %v3502
  %v3523 = vunpack.c.l.b16 %v3503
  %v3524 = vunpack.c.l.b16 %v3504
  %v3525 = vunpack.c.l.b16 %v3505
  %v3526 = vunpack.c.l.b16 %v3506
  %v3527 = vunpack.c.l.b16 %v3507
  %v3528 = vunpack.c.l.b16 %v3508
  %v3529 = vunpack.c.l.b16 %v3509
  %v3530 = vpack.c.b16 %v3521, %v3520
  %v3531 = vpack.c.b16 %v3523, %v3522
  %v3532 = vpack.c.b16 %v3525, %v3524
  %v3533 = vpack.c.b16 %v3527, %v3526
  %v3534 = vpack.c.b16 %v3529, %v3528
  %v3541 = vsel %vm3359, %v3316, 0
  %3543 = vmatprep.subr.bf16.mxu0 0
  %3544 = vmatpush1.bf16.msra.mxu0 %v3530
  %3545 = vmatprep.subr.bf16.mxu0 0
  %3546 = vmatpush1.bf16.msra.mxu0 %v3531
  %3547 = vmatprep.subr.bf16.mxu0 0
  %3548 = vmatpush1.bf16.msra.mxu0 %v3532
  %3549 = vmatprep.subr.bf16.mxu0 0
  %3550 = vmatpush1.bf16.msra.mxu0 %v3533
  %3551 = vmatprep.subr.bf16.mxu0 0
  %3552 = vmatpush1.bf16.msra.mxu0 %v3534
  %3553 = vmatprep.subr.bf16.mxu0 0
  %3554 = vmatpush1.bf16.msra.mxu0 0
  %3555 = vmatprep.subr.bf16.mxu0 0
  %3556 = vmatpush1.bf16.msra.mxu0 0
  %3557 = vmatprep.subr.bf16.mxu0 0
  %3558 = vmatpush1.bf16.msra.mxu0 0
  %3559 = vmatprep.subr.bf16.mxu0 0
  %3560 = vmatpush1.bf16.msra.mxu0 0
  %3561 = vmatprep.subr.bf16.mxu0 0
  %3562 = vmatpush1.bf16.msra.mxu0 0
  %3563 = vmatprep.subr.bf16.mxu0 0
  %3564 = vmatpush1.bf16.msra.mxu0 0
  %3565 = vmatprep.subr.bf16.mxu0 0
  %3566 = vmatpush1.bf16.msra.mxu0 0
  %3567 = vmatprep.subr.bf16.mxu0 0
  %3568 = vmatpush1.bf16.msra.mxu0 0
  %3569 = vmatprep.subr.bf16.mxu0 0
  %3570 = vmatpush1.bf16.msra.mxu0 0
  %3571 = vmatprep.subr.bf16.mxu0 0
  %3572 = vmatpush1.bf16.msra.mxu0 0
  %3573 = vmatprep.subr.bf16.mxu0 0
  %3574 = vmatpush1.bf16.msra.mxu0 0
  %3575 = vmatprep.mubr.bf16.mxu0 0
  %3576 = vmatmul.mubr.bf16.gmra.mrb[0].mxu0 %v3541
  %v3577 = vpop.f32.mrb[0].mxu0
  %v3578 = vadd.f32 0.0, %v3577
  %v3579 = vpop.f32.mrb[0].mxu0
  %v3580 = vpop.f32.mrb[0].mxu0
  %v3581 = vadd.f32 0.0, %v3580
  %v3582 = vpop.f32.mrb[0].mxu0
  %3583 = vdwg.mxu0
  %v3584 = vadd.f32 %v3497, %v3578
  %v3585 = vadd.f32 %v3498, %v3581
  %s3586 = scalar_lea.vmem %s7, 120
  %v3587 = vld [vmem:[%s3586] sm:$0xf]
  %v3588 = vld [vmem:[%s3586 + $0x4] sm:$0xf]
  %v3589 = vld [vmem:[%s3586 + $0x8] sm:$0xf]
  %v3590 = vld [vmem:[%s3586 + $0xc] sm:$0xf]
  %v3591 = vld [vmem:[%s3586 + $0x10] sm:$0xf]
  %v3592 = vld [vmem:[%s3586 + $0x14] sm:$0xf]
  %v3593 = vld [vmem:[%s3586 + $0x18] sm:$0xf]
  %v3594 = vld [vmem:[%s3586 + $0x1c] sm:$0xf]
  %v3595 = vld [vmem:[%s3586 + $0x20] sm:$0xf]
  %v3596 = vld [vmem:[%s3586 + $0x24] sm:$0xf]
  %v3607 = vunpack.c.l.b16 %v3587
  %v3608 = vunpack.c.l.b16 %v3588
  %v3609 = vunpack.c.l.b16 %v3589
  %v3610 = vunpack.c.l.b16 %v3590
  %v3611 = vunpack.c.l.b16 %v3591
  %v3612 = vunpack.c.l.b16 %v3592
  %v3613 = vunpack.c.l.b16 %v3593
  %v3614 = vunpack.c.l.b16 %v3594
  %v3615 = vunpack.c.l.b16 %v3595
  %v3616 = vunpack.c.l.b16 %v3596
  %v3617 = vpack.c.b16 %v3608, %v3607
  %v3618 = vpack.c.b16 %v3610, %v3609
  %v3619 = vpack.c.b16 %v3612, %v3611
  %v3620 = vpack.c.b16 %v3614, %v3613
  %v3621 = vpack.c.b16 %v3616, %v3615
  %v3628 = vsel %vm3359, %v3317, 0
  %3630 = vmatprep.subr.bf16.mxu0 0
  %3631 = vmatpush1.bf16.msra.mxu0 %v3617
  %3632 = vmatprep.subr.bf16.mxu0 0
  %3633 = vmatpush1.bf16.msra.mxu0 %v3618
  %3634 = vmatprep.subr.bf16.mxu0 0
  %3635 = vmatpush1.bf16.msra.mxu0 %v3619
  %3636 = vmatprep.subr.bf16.mxu0 0
  %3637 = vmatpush1.bf16.msra.mxu0 %v3620
  %3638 = vmatprep.subr.bf16.mxu0 0
  %3639 = vmatpush1.bf16.msra.mxu0 %v3621
  %3640 = vmatprep.subr.bf16.mxu0 0
  %3641 = vmatpush1.bf16.msra.mxu0 0
  %3642 = vmatprep.subr.bf16.mxu0 0
  %3643 = vmatpush1.bf16.msra.mxu0 0
  %3644 = vmatprep.subr.bf16.mxu0 0
  %3645 = vmatpush1.bf16.msra.mxu0 0
  %3646 = vmatprep.subr.bf16.mxu0 0
  %3647 = vmatpush1.bf16.msra.mxu0 0
  %3648 = vmatprep.subr.bf16.mxu0 0
  %3649 = vmatpush1.bf16.msra.mxu0 0
  %3650 = vmatprep.subr.bf16.mxu0 0
  %3651 = vmatpush1.bf16.msra.mxu0 0
  %3652 = vmatprep.subr.bf16.mxu0 0
  %3653 = vmatpush1.bf16.msra.mxu0 0
  %3654 = vmatprep.subr.bf16.mxu0 0
  %3655 = vmatpush1.bf16.msra.mxu0 0
  %3656 = vmatprep.subr.bf16.mxu0 0
  %3657 = vmatpush1.bf16.msra.mxu0 0
  %3658 = vmatprep.subr.bf16.mxu0 0
  %3659 = vmatpush1.bf16.msra.mxu0 0
  %3660 = vmatprep.subr.bf16.mxu0 0
  %3661 = vmatpush1.bf16.msra.mxu0 0
  %3662 = vmatprep.mubr.bf16.mxu0 0
  %3663 = vmatmul.mubr.bf16.gmra.mrb[0].mxu0 %v3628
  %v3664 = vpop.f32.mrb[0].mxu0
  %v3665 = vadd.f32 0.0, %v3664
  %v3666 = vpop.f32.mrb[0].mxu0
  %v3667 = vpop.f32.mrb[0].mxu0
  %v3668 = vadd.f32 0.0, %v3667
  %v3669 = vpop.f32.mrb[0].mxu0
  %3670 = vdwg.mxu0
  %v3671 = vadd.f32 %v3584, %v3665
  %v3672 = vadd.f32 %v3585, %v3668
  %v3673 = vtanh.pop %v3671
  %v3674 = vtanh.pop %v3672
  %v3675 = vpack.c.bf16 %v3674, %v3673
  %v3676 = vld [vmem:[%s9] sm:$0xf]
  %v3677 = vld [vmem:[%s9 + $0x4] sm:$0xf]
  %v3678 = vld [vmem:[%s9 + $0x8] sm:$0xf]
  %v3679 = vld [vmem:[%s9 + $0xc] sm:$0xf]
  %v3680 = vld [vmem:[%s9 + $0x10] sm:$0xf]
  %v3681 = vld [vmem:[%s9 + $0x14] sm:$0xf]
  %v3682 = vld [vmem:[%s9 + $0x18] sm:$0x1]
  %v3683 = vld [vmem:[%s10] sm:$0x1]
  %v3685 = vlaneseq
  %v3686 = vshrl.u32 %v3685, 7
  %v3687 = vsub.s32 0, %v3686
  %v3688 = vrot.slane %v3683, %v3687
  %v3697 = vunpack.c.l.b16 %v3676
  %v3698 = vunpack.c.l.b16 %v3677
  %v3699 = vunpack.c.l.b16 %v3678
  %v3700 = vunpack.c.l.b16 %v3679
  %v3701 = vunpack.c.l.b16 %v3680
  %v3702 = vunpack.c.l.b16 %v3681
  %v3703 = vunpack.c.l.b16 %v3682
  %v3704 = vpack.c.b16 %v3698, %v3697
  %v3705 = vpack.c.b16 %v3700, %v3699
  %v3706 = vpack.c.b16 %v3702, %v3701
  %v3707 = vpack.c.b16 %v3703, %v3703
  %vm3711 = vcmask 408576
  %v3713 = vsel %vm3711, %v3675, 0
  %vm3715 = vcmask 1040384
  %v3717 = vsel %vm3715, %v3707, 0
  %3719 = vmatprep.subr.bf16.mxu0 0
  %3720 = vmatpush1.bf16.msra.mxu0 %v3704
  %3721 = vmatprep.subr.bf16.mxu0 0
  %3722 = vmatpush1.bf16.msra.mxu0 %v3705
  %3723 = vmatprep.subr.bf16.mxu0 0
  %3724 = vmatpush1.bf16.msra.mxu0 %v3706
  %3725 = vmatprep.subr.bf16.mxu0 0
  %3726 = vmatpush1.bf16.msra.mxu0 %v3717
  %3727 = vmatprep.subr.bf16.mxu0 0
  %3728 = vmatpush1.bf16.msra.mxu0 0
  %3729 = vmatprep.subr.bf16.mxu0 0
  %3730 = vmatpush1.bf16.msra.mxu0 0
  %3731 = vmatprep.subr.bf16.mxu0 0
  %3732 = vmatpush1.bf16.msra.mxu0 0
  %3733 = vmatprep.subr.bf16.mxu0 0
  %3734 = vmatpush1.bf16.msra.mxu0 0
  %3735 = vmatprep.subr.bf16.mxu0 0
  %3736 = vmatpush1.bf16.msra.mxu0 0
  %3737 = vmatprep.subr.bf16.mxu0 0
  %3738 = vmatpush1.bf16.msra.mxu0 0
  %3739 = vmatprep.subr.bf16.mxu0 0
  %3740 = vmatpush1.bf16.msra.mxu0 0
  %3741 = vmatprep.subr.bf16.mxu0 0
  %3742 = vmatpush1.bf16.msra.mxu0 0
  %3743 = vmatprep.subr.bf16.mxu0 0
  %3744 = vmatpush1.bf16.msra.mxu0 0
  %3745 = vmatprep.subr.bf16.mxu0 0
  %3746 = vmatpush1.bf16.msra.mxu0 0
  %3747 = vmatprep.subr.bf16.mxu0 0
  %3748 = vmatpush1.bf16.msra.mxu0 0
  %3749 = vmatprep.subr.bf16.mxu0 0
  %3750 = vmatpush1.bf16.msra.mxu0 0
  %3751 = vmatprep.mubr.bf16.mxu0 0
  %3752 = vmatmul.mubr.bf16.gmra.mrb[0].mxu0 %v3713
  %v3753 = vpop.f32.mrb[0].mxu0
  %v3754 = vadd.f32 %v3688, %v3753
  %v3755 = vpop.f32.mrb[0].mxu0
  %v3756 = vpop.f32.mrb[0].mxu0
  %v3757 = vadd.f32 %v3688, %v3756
  %v3758 = vpop.f32.mrb[0].mxu0
  %3759 = vdwg.mxu0
  %v3760 = vtanh.pop %v3754
  %v3761 = vtanh.pop %v3757
  %v3762 = vpack.c.bf16 %v3761, %v3760
  %s3763 = scalar_lea.vmem %s9, 28
  %v3764 = vld [vmem:[%s3763] sm:$0xf]
  %v3765 = vld [vmem:[%s3763 + $0x4] sm:$0xf]
  %v3766 = vld [vmem:[%s3763 + $0x8] sm:$0xf]
  %v3767 = vld [vmem:[%s3763 + $0xc] sm:$0xf]
  %v3768 = vld [vmem:[%s3763 + $0x10] sm:$0xf]
  %v3769 = vld [vmem:[%s3763 + $0x14] sm:$0xf]
  %v3770 = vld [vmem:[%s3763 + $0x18] sm:$0x1]
  %s3771 = scalar_lea.vmem %s10, 1
  %v3772 = vld [vmem:[%s3771] sm:$0x1]
  %v3774 = vlaneseq
  %v3775 = vshrl.u32 %v3774, 7
  %v3776 = vsub.s32 0, %v3775
  %v3777 = vrot.slane %v3772, %v3776
  %v3786 = vunpack.c.l.b16 %v3764
  %v3787 = vunpack.c.l.b16 %v3765
  %v3788 = vunpack.c.l.b16 %v3766
  %v3789 = vunpack.c.l.b16 %v3767
  %v3790 = vunpack.c.l.b16 %v3768
  %v3791 = vunpack.c.l.b16 %v3769
  %v3792 = vunpack.c.l.b16 %v3770
  %v3793 = vpack.c.b16 %v3787, %v3786
  %v3794 = vpack.c.b16 %v3789, %v3788
  %v3795 = vpack.c.b16 %v3791, %v3790
  %v3796 = vpack.c.b16 %v3792, %v3792
  %v3801 = vsel %vm3711, %v3762, 0
  %v3804 = vsel %vm3715, %v3796, 0
  %3806 = vmatprep.subr.bf16.mxu0 0
  %3807 = vmatpush1.bf16.msra.mxu0 %v3793
  %3808 = vmatprep.subr.bf16.mxu0 0
  %3809 = vmatpush1.bf16.msra.mxu0 %v3794
  %3810 = vmatprep.subr.bf16.mxu0 0
  %3811 = vmatpush1.bf16.msra.mxu0 %v3795
  %3812 = vmatprep.subr.bf16.mxu0 0
  %3813 = vmatpush1.bf16.msra.mxu0 %v3804
  %3814 = vmatprep.subr.bf16.mxu0 0
  %3815 = vmatpush1.bf16.msra.mxu0 0
  %3816 = vmatprep.subr.bf16.mxu0 0
  %3817 = vmatpush1.bf16.msra.mxu0 0
  %3818 = vmatprep.subr.bf16.mxu0 0
  %3819 = vmatpush1.bf16.msra.mxu0 0
  %3820 = vmatprep.subr.bf16.mxu0 0
  %3821 = vmatpush1.bf16.msra.mxu0 0
  %3822 = vmatprep.subr.bf16.mxu0 0
  %3823 = vmatpush1.bf16.msra.mxu0 0
  %3824 = vmatprep.subr.bf16.mxu0 0
  %3825 = vmatpush1.bf16.msra.mxu0 0
  %3826 = vmatprep.subr.bf16.mxu0 0
  %3827 = vmatpush1.bf16.msra.mxu0 0
  %3828 = vmatprep.subr.bf16.mxu0 0
  %3829 = vmatpush1.bf16.msra.mxu0 0
  %3830 = vmatprep.subr.bf16.mxu0 0
  %3831 = vmatpush1.bf16.msra.mxu0 0
  %3832 = vmatprep.subr.bf16.mxu0 0
  %3833 = vmatpush1.bf16.msra.mxu0 0
  %3834 = vmatprep.subr.bf16.mxu0 0
  %3835 = vmatpush1.bf16.msra.mxu0 0
  %3836 = vmatprep.subr.bf16.mxu0 0
  %3837 = vmatpush1.bf16.msra.mxu0 0
  %3838 = vmatprep.mubr.bf16.mxu0 0
  %3839 = vmatmul.mubr.bf16.gmra.mrb[0].mxu0 %v3801
  %v3840 = vpop.f32.mrb[0].mxu0
  %v3841 = vadd.f32 %v3777, %v3840
  %v3842 = vpop.f32.mrb[0].mxu0
  %v3843 = vpop.f32.mrb[0].mxu0
  %v3844 = vadd.f32 %v3777, %v3843
  %v3845 = vpop.f32.mrb[0].mxu0
  %3846 = vdwg.mxu0
  %v3847 = vtanh.pop %v3841
  %v3848 = vtanh.pop %v3844
  %v3849 = vpack.c.bf16 %v3848, %v3847
  %s3850 = scalar_lea.vmem %s9, 56
  %v3851 = vld [vmem:[%s3850] sm:$0xf]
  %v3852 = vld [vmem:[%s3850 + $0x4] sm:$0xf]
  %v3853 = vld [vmem:[%s3850 + $0x8] sm:$0xf]
  %v3854 = vld [vmem:[%s3850 + $0xc] sm:$0xf]
  %v3855 = vld [vmem:[%s3850 + $0x10] sm:$0xf]
  %v3856 = vld [vmem:[%s3850 + $0x14] sm:$0xf]
  %v3857 = vld [vmem:[%s3850 + $0x18] sm:$0x1]
  %s3858 = scalar_lea.vmem %s10, 2
  %v3859 = vld [vmem:[%s3858] sm:$0x1]
  %v3861 = vlaneseq
  %v3862 = vshrl.u32 %v3861, 7
  %v3863 = vsub.s32 0, %v3862
  %v3864 = vrot.slane %v3859, %v3863
  %v3873 = vunpack.c.l.b16 %v3851
  %v3874 = vunpack.c.l.b16 %v3852
  %v3875 = vunpack.c.l.b16 %v3853
  %v3876 = vunpack.c.l.b16 %v3854
  %v3877 = vunpack.c.l.b16 %v3855
  %v3878 = vunpack.c.l.b16 %v3856
  %v3879 = vunpack.c.l.b16 %v3857
  %v3880 = vpack.c.b16 %v3874, %v3873
  %v3881 = vpack.c.b16 %v3876, %v3875
  %v3882 = vpack.c.b16 %v3878, %v3877
  %v3883 = vpack.c.b16 %v3879, %v3879
  %v3888 = vsel %vm3711, %v3849, 0
  %v3891 = vsel %vm3715, %v3883, 0
  %3893 = vmatprep.subr.bf16.mxu0 0
  %3894 = vmatpush1.bf16.msra.mxu0 %v3880
  %3895 = vmatprep.subr.bf16.mxu0 0
  %3896 = vmatpush1.bf16.msra.mxu0 %v3881
  %3897 = vmatprep.subr.bf16.mxu0 0
  %3898 = vmatpush1.bf16.msra.mxu0 %v3882
  %3899 = vmatprep.subr.bf16.mxu0 0
  %3900 = vmatpush1.bf16.msra.mxu0 %v3891
  %3901 = vmatprep.subr.bf16.mxu0 0
  %3902 = vmatpush1.bf16.msra.mxu0 0
  %3903 = vmatprep.subr.bf16.mxu0 0
  %3904 = vmatpush1.bf16.msra.mxu0 0
  %3905 = vmatprep.subr.bf16.mxu0 0
  %3906 = vmatpush1.bf16.msra.mxu0 0
  %3907 = vmatprep.subr.bf16.mxu0 0
  %3908 = vmatpush1.bf16.msra.mxu0 0
  %3909 = vmatprep.subr.bf16.mxu0 0
  %3910 = vmatpush1.bf16.msra.mxu0 0
  %3911 = vmatprep.subr.bf16.mxu0 0
  %3912 = vmatpush1.bf16.msra.mxu0 0
  %3913 = vmatprep.subr.bf16.mxu0 0
  %3914 = vmatpush1.bf16.msra.mxu0 0
  %3915 = vmatprep.subr.bf16.mxu0 0
  %3916 = vmatpush1.bf16.msra.mxu0 0
  %3917 = vmatprep.subr.bf16.mxu0 0
  %3918 = vmatpush1.bf16.msra.mxu0 0
  %3919 = vmatprep.subr.bf16.mxu0 0
  %3920 = vmatpush1.bf16.msra.mxu0 0
  %3921 = vmatprep.subr.bf16.mxu0 0
  %3922 = vmatpush1.bf16.msra.mxu0 0
  %3923 = vmatprep.subr.bf16.mxu0 0
  %3924 = vmatpush1.bf16.msra.mxu0 0
  %3925 = vmatprep.mubr.bf16.mxu0 0
  %3926 = vmatmul.mubr.bf16.gmra.mrb[0].mxu0 %v3888
  %v3927 = vpop.f32.mrb[0].mxu0
  %v3928 = vadd.f32 %v3864, %v3927
  %v3929 = vpop.f32.mrb[0].mxu0
  %v3930 = vpop.f32.mrb[0].mxu0
  %v3931 = vadd.f32 %v3864, %v3930
  %v3932 = vpop.f32.mrb[0].mxu0
  %3933 = vdwg.mxu0
  %v3934 = vtanh.pop %v3928
  %v3935 = vtanh.pop %v3931
  %v3936 = vpack.c.bf16 %v3935, %v3934
  %s3937 = scalar_lea.vmem %s9, 84
  %v3938 = vld [vmem:[%s3937] sm:$0xf]
  %v3939 = vld [vmem:[%s3937 + $0x4] sm:$0xf]
  %v3940 = vld [vmem:[%s3937 + $0x8] sm:$0xf]
  %v3941 = vld [vmem:[%s3937 + $0xc] sm:$0xf]
  %v3942 = vld [vmem:[%s3937 + $0x10] sm:$0xf]
  %v3943 = vld [vmem:[%s3937 + $0x14] sm:$0xf]
  %v3944 = vld [vmem:[%s3937 + $0x18] sm:$0x1]
  %s3945 = scalar_lea.vmem %s10, 3
  %v3946 = vld [vmem:[%s3945] sm:$0x1]
  %v3948 = vlaneseq
  %v3949 = vshrl.u32 %v3948, 7
  %v3950 = vsub.s32 0, %v3949
  %v3951 = vrot.slane %v3946, %v3950
  %v3960 = vunpack.c.l.b16 %v3938
  %v3961 = vunpack.c.l.b16 %v3939
  %v3962 = vunpack.c.l.b16 %v3940
  %v3963 = vunpack.c.l.b16 %v3941
  %v3964 = vunpack.c.l.b16 %v3942
  %v3965 = vunpack.c.l.b16 %v3943
  %v3966 = vunpack.c.l.b16 %v3944
  %v3967 = vpack.c.b16 %v3961, %v3960
  %v3968 = vpack.c.b16 %v3963, %v3962
  %v3969 = vpack.c.b16 %v3965, %v3964
  %v3970 = vpack.c.b16 %v3966, %v3966
  %v3975 = vsel %vm3711, %v3936, 0
  %v3978 = vsel %vm3715, %v3970, 0
  %3980 = vmatprep.subr.bf16.mxu0 0
  %3981 = vmatpush1.bf16.msra.mxu0 %v3967
  %3982 = vmatprep.subr.bf16.mxu0 0
  %3983 = vmatpush1.bf16.msra.mxu0 %v3968
  %3984 = vmatprep.subr.bf16.mxu0 0
  %3985 = vmatpush1.bf16.msra.mxu0 %v3969
  %3986 = vmatprep.subr.bf16.mxu0 0
  %3987 = vmatpush1.bf16.msra.mxu0 %v3978
  %3988 = vmatprep.subr.bf16.mxu0 0
  %3989 = vmatpush1.bf16.msra.mxu0 0
  %3990 = vmatprep.subr.bf16.mxu0 0
  %3991 = vmatpush1.bf16.msra.mxu0 0
  %3992 = vmatprep.subr.bf16.mxu0 0
  %3993 = vmatpush1.bf16.msra.mxu0 0
  %3994 = vmatprep.subr.bf16.mxu0 0
  %3995 = vmatpush1.bf16.msra.mxu0 0
  %3996 = vmatprep.subr.bf16.mxu0 0
  %3997 = vmatpush1.bf16.msra.mxu0 0
  %3998 = vmatprep.subr.bf16.mxu0 0
  %3999 = vmatpush1.bf16.msra.mxu0 0
  %4000 = vmatprep.subr.bf16.mxu0 0
  %4001 = vmatpush1.bf16.msra.mxu0 0
  %4002 = vmatprep.subr.bf16.mxu0 0
  %4003 = vmatpush1.bf16.msra.mxu0 0
  %4004 = vmatprep.subr.bf16.mxu0 0
  %4005 = vmatpush1.bf16.msra.mxu0 0
  %4006 = vmatprep.subr.bf16.mxu0 0
  %4007 = vmatpush1.bf16.msra.mxu0 0
  %4008 = vmatprep.subr.bf16.mxu0 0
  %4009 = vmatpush1.bf16.msra.mxu0 0
  %4010 = vmatprep.subr.bf16.mxu0 0
  %4011 = vmatpush1.bf16.msra.mxu0 0
  %4012 = vmatprep.mubr.bf16.mxu0 0
  %4013 = vmatmul.mubr.bf16.gmra.mrb[0].mxu0 %v3975
  %v4014 = vpop.f32.mrb[0].mxu0
  %v4015 = vadd.f32 %v3951, %v4014
  %v4016 = vpop.f32.mrb[0].mxu0
  %v4017 = vpop.f32.mrb[0].mxu0
  %v4018 = vadd.f32 %v3951, %v4017
  %v4019 = vpop.f32.mrb[0].mxu0
  %4020 = vdwg.mxu0
  %v4021 = vtanh.pop %v4015
  %v4022 = vtanh.pop %v4018
  %v4023 = vpack.c.bf16 %v4022, %v4021
  %s4024 = scalar_lea.vmem %s9, 112
  %v4025 = vld [vmem:[%s4024] sm:$0xf]
  %v4026 = vld [vmem:[%s4024 + $0x4] sm:$0xf]
  %v4027 = vld [vmem:[%s4024 + $0x8] sm:$0xf]
  %v4028 = vld [vmem:[%s4024 + $0xc] sm:$0xf]
  %v4029 = vld [vmem:[%s4024 + $0x10] sm:$0xf]
  %v4030 = vld [vmem:[%s4024 + $0x14] sm:$0xf]
  %v4031 = vld [vmem:[%s4024 + $0x18] sm:$0x1]
  %s4032 = scalar_lea.vmem %s10, 4
  %v4033 = vld [vmem:[%s4032] sm:$0x1]
  %v4035 = vlaneseq
  %v4036 = vshrl.u32 %v4035, 7
  %v4037 = vsub.s32 0, %v4036
  %v4038 = vrot.slane %v4033, %v4037
  %v4047 = vunpack.c.l.b16 %v4025
  %v4048 = vunpack.c.l.b16 %v4026
  %v4049 = vunpack.c.l.b16 %v4027
  %v4050 = vunpack.c.l.b16 %v4028
  %v4051 = vunpack.c.l.b16 %v4029
  %v4052 = vunpack.c.l.b16 %v4030
  %v4053 = vunpack.c.l.b16 %v4031
  %v4054 = vpack.c.b16 %v4048, %v4047
  %v4055 = vpack.c.b16 %v4050, %v4049
  %v4056 = vpack.c.b16 %v4052, %v4051
  %v4057 = vpack.c.b16 %v4053, %v4053
  %v4062 = vsel %vm3711, %v4023, 0
  %v4065 = vsel %vm3715, %v4057, 0
  %4067 = vmatprep.subr.bf16.mxu0 0
  %4068 = vmatpush1.bf16.msra.mxu0 %v4054
  %4069 = vmatprep.subr.bf16.mxu0 0
  %4070 = vmatpush1.bf16.msra.mxu0 %v4055
  %4071 = vmatprep.subr.bf16.mxu0 0
  %4072 = vmatpush1.bf16.msra.mxu0 %v4056
  %4073 = vmatprep.subr.bf16.mxu0 0
  %4074 = vmatpush1.bf16.msra.mxu0 %v4065
  %4075 = vmatprep.subr.bf16.mxu0 0
  %4076 = vmatpush1.bf16.msra.mxu0 0
  %4077 = vmatprep.subr.bf16.mxu0 0
  %4078 = vmatpush1.bf16.msra.mxu0 0
  %4079 = vmatprep.subr.bf16.mxu0 0
  %4080 = vmatpush1.bf16.msra.mxu0 0
  %4081 = vmatprep.subr.bf16.mxu0 0
  %4082 = vmatpush1.bf16.msra.mxu0 0
  %4083 = vmatprep.subr.bf16.mxu0 0
  %4084 = vmatpush1.bf16.msra.mxu0 0
  %4085 = vmatprep.subr.bf16.mxu0 0
  %4086 = vmatpush1.bf16.msra.mxu0 0
  %4087 = vmatprep.subr.bf16.mxu0 0
  %4088 = vmatpush1.bf16.msra.mxu0 0
  %4089 = vmatprep.subr.bf16.mxu0 0
  %4090 = vmatpush1.bf16.msra.mxu0 0
  %4091 = vmatprep.subr.bf16.mxu0 0
  %4092 = vmatpush1.bf16.msra.mxu0 0
  %4093 = vmatprep.subr.bf16.mxu0 0
  %4094 = vmatpush1.bf16.msra.mxu0 0
  %4095 = vmatprep.subr.bf16.mxu0 0
  %4096 = vmatpush1.bf16.msra.mxu0 0
  %4097 = vmatprep.subr.bf16.mxu0 0
  %4098 = vmatpush1.bf16.msra.mxu0 0
  %4099 = vmatprep.mubr.bf16.mxu0 0
  %4100 = vmatmul.mubr.bf16.gmra.mrb[0].mxu0 %v4062
  %v4101 = vpop.f32.mrb[0].mxu0
  %v4102 = vadd.f32 %v4038, %v4101
  %v4103 = vpop.f32.mrb[0].mxu0
  %v4104 = vpop.f32.mrb[0].mxu0
  %v4105 = vadd.f32 %v4038, %v4104
  %v4106 = vpop.f32.mrb[0].mxu0
  %4107 = vdwg.mxu0
  %v4108 = vtanh.pop %v4102
  %v4109 = vtanh.pop %v4105
  %v4110 = vpack.c.bf16 %v4109, %v4108
  %s4111 = scalar_lea.vmem %s9, 140
  %v4112 = vld [vmem:[%s4111] sm:$0xf]
  %v4113 = vld [vmem:[%s4111 + $0x4] sm:$0xf]
  %v4114 = vld [vmem:[%s4111 + $0x8] sm:$0xf]
  %v4115 = vld [vmem:[%s4111 + $0xc] sm:$0xf]
  %v4116 = vld [vmem:[%s4111 + $0x10] sm:$0xf]
  %v4117 = vld [vmem:[%s4111 + $0x14] sm:$0xf]
  %v4118 = vld [vmem:[%s4111 + $0x18] sm:$0x1]
  %s4119 = scalar_lea.vmem %s10, 5
  %v4120 = vld [vmem:[%s4119] sm:$0x1]
  %v4122 = vlaneseq
  %v4123 = vshrl.u32 %v4122, 7
  %v4124 = vsub.s32 0, %v4123
  %v4125 = vrot.slane %v4120, %v4124
  %v4134 = vunpack.c.l.b16 %v4112
  %v4135 = vunpack.c.l.b16 %v4113
  %v4136 = vunpack.c.l.b16 %v4114
  %v4137 = vunpack.c.l.b16 %v4115
  %v4138 = vunpack.c.l.b16 %v4116
  %v4139 = vunpack.c.l.b16 %v4117
  %v4140 = vunpack.c.l.b16 %v4118
  %v4141 = vpack.c.b16 %v4135, %v4134
  %v4142 = vpack.c.b16 %v4137, %v4136
  %v4143 = vpack.c.b16 %v4139, %v4138
  %v4144 = vpack.c.b16 %v4140, %v4140
  %v4149 = vsel %vm3711, %v4110, 0
  %v4152 = vsel %vm3715, %v4144, 0
  %4154 = vmatprep.subr.bf16.mxu0 0
  %4155 = vmatpush1.bf16.msra.mxu0 %v4141
  %4156 = vmatprep.subr.bf16.mxu0 0
  %4157 = vmatpush1.bf16.msra.mxu0 %v4142
  %4158 = vmatprep.subr.bf16.mxu0 0
  %4159 = vmatpush1.bf16.msra.mxu0 %v4143
  %4160 = vmatprep.subr.bf16.mxu0 0
  %4161 = vmatpush1.bf16.msra.mxu0 %v4152
  %4162 = vmatprep.subr.bf16.mxu0 0
  %4163 = vmatpush1.bf16.msra.mxu0 0
  %4164 = vmatprep.subr.bf16.mxu0 0
  %4165 = vmatpush1.bf16.msra.mxu0 0
  %4166 = vmatprep.subr.bf16.mxu0 0
  %4167 = vmatpush1.bf16.msra.mxu0 0
  %4168 = vmatprep.subr.bf16.mxu0 0
  %4169 = vmatpush1.bf16.msra.mxu0 0
  %4170 = vmatprep.subr.bf16.mxu0 0
  %4171 = vmatpush1.bf16.msra.mxu0 0
  %4172 = vmatprep.subr.bf16.mxu0 0
  %4173 = vmatpush1.bf16.msra.mxu0 0
  %4174 = vmatprep.subr.bf16.mxu0 0
  %4175 = vmatpush1.bf16.msra.mxu0 0
  %4176 = vmatprep.subr.bf16.mxu0 0
  %4177 = vmatpush1.bf16.msra.mxu0 0
  %4178 = vmatprep.subr.bf16.mxu0 0
  %4179 = vmatpush1.bf16.msra.mxu0 0
  %4180 = vmatprep.subr.bf16.mxu0 0
  %4181 = vmatpush1.bf16.msra.mxu0 0
  %4182 = vmatprep.subr.bf16.mxu0 0
  %4183 = vmatpush1.bf16.msra.mxu0 0
  %4184 = vmatprep.subr.bf16.mxu0 0
  %4185 = vmatpush1.bf16.msra.mxu0 0
  %4186 = vmatprep.mubr.bf16.mxu0 0
  %4187 = vmatmul.mubr.bf16.gmra.mrb[0].mxu0 %v4149
  %v4188 = vpop.f32.mrb[0].mxu0
  %v4189 = vadd.f32 %v4125, %v4188
  %v4190 = vpop.f32.mrb[0].mxu0
  %v4191 = vpop.f32.mrb[0].mxu0
  %v4192 = vadd.f32 %v4125, %v4191
  %v4193 = vpop.f32.mrb[0].mxu0
  %4194 = vdwg.mxu0
  %v4195 = vtanh.pop %v4189
  %v4196 = vtanh.pop %v4192
  %v4197 = vpack.c.bf16 %v4196, %v4195
  %s4198 = scalar_lea.vmem %s9, 168
  %v4199 = vld [vmem:[%s4198] sm:$0xf]
  %v4200 = vld [vmem:[%s4198 + $0x4] sm:$0xf]
  %v4201 = vld [vmem:[%s4198 + $0x8] sm:$0xf]
  %v4202 = vld [vmem:[%s4198 + $0xc] sm:$0xf]
  %v4203 = vld [vmem:[%s4198 + $0x10] sm:$0xf]
  %v4204 = vld [vmem:[%s4198 + $0x14] sm:$0xf]
  %v4205 = vld [vmem:[%s4198 + $0x18] sm:$0x1]
  %s4206 = scalar_lea.vmem %s10, 6
  %v4207 = vld [vmem:[%s4206] sm:$0x1]
  %v4209 = vlaneseq
  %v4210 = vshrl.u32 %v4209, 7
  %v4211 = vsub.s32 0, %v4210
  %v4212 = vrot.slane %v4207, %v4211
  %v4221 = vunpack.c.l.b16 %v4199
  %v4222 = vunpack.c.l.b16 %v4200
  %v4223 = vunpack.c.l.b16 %v4201
  %v4224 = vunpack.c.l.b16 %v4202
  %v4225 = vunpack.c.l.b16 %v4203
  %v4226 = vunpack.c.l.b16 %v4204
  %v4227 = vunpack.c.l.b16 %v4205
  %v4228 = vpack.c.b16 %v4222, %v4221
  %v4229 = vpack.c.b16 %v4224, %v4223
  %v4230 = vpack.c.b16 %v4226, %v4225
  %v4231 = vpack.c.b16 %v4227, %v4227
  %v4236 = vsel %vm3711, %v4197, 0
  %v4239 = vsel %vm3715, %v4231, 0
  %4241 = vmatprep.subr.bf16.mxu0 0
  %4242 = vmatpush1.bf16.msra.mxu0 %v4228
  %4243 = vmatprep.subr.bf16.mxu0 0
  %4244 = vmatpush1.bf16.msra.mxu0 %v4229
  %4245 = vmatprep.subr.bf16.mxu0 0
  %4246 = vmatpush1.bf16.msra.mxu0 %v4230
  %4247 = vmatprep.subr.bf16.mxu0 0
  %4248 = vmatpush1.bf16.msra.mxu0 %v4239
  %4249 = vmatprep.subr.bf16.mxu0 0
  %4250 = vmatpush1.bf16.msra.mxu0 0
  %4251 = vmatprep.subr.bf16.mxu0 0
  %4252 = vmatpush1.bf16.msra.mxu0 0
  %4253 = vmatprep.subr.bf16.mxu0 0
  %4254 = vmatpush1.bf16.msra.mxu0 0
  %4255 = vmatprep.subr.bf16.mxu0 0
  %4256 = vmatpush1.bf16.msra.mxu0 0
  %4257 = vmatprep.subr.bf16.mxu0 0
  %4258 = vmatpush1.bf16.msra.mxu0 0
  %4259 = vmatprep.subr.bf16.mxu0 0
  %4260 = vmatpush1.bf16.msra.mxu0 0
  %4261 = vmatprep.subr.bf16.mxu0 0
  %4262 = vmatpush1.bf16.msra.mxu0 0
  %4263 = vmatprep.subr.bf16.mxu0 0
  %4264 = vmatpush1.bf16.msra.mxu0 0
  %4265 = vmatprep.subr.bf16.mxu0 0
  %4266 = vmatpush1.bf16.msra.mxu0 0
  %4267 = vmatprep.subr.bf16.mxu0 0
  %4268 = vmatpush1.bf16.msra.mxu0 0
  %4269 = vmatprep.subr.bf16.mxu0 0
  %4270 = vmatpush1.bf16.msra.mxu0 0
  %4271 = vmatprep.subr.bf16.mxu0 0
  %4272 = vmatpush1.bf16.msra.mxu0 0
  %4273 = vmatprep.mubr.bf16.mxu0 0
  %4274 = vmatmul.mubr.bf16.gmra.mrb[0].mxu0 %v4236
  %v4275 = vpop.f32.mrb[0].mxu0
  %v4276 = vadd.f32 %v4212, %v4275
  %v4277 = vpop.f32.mrb[0].mxu0
  %v4278 = vpop.f32.mrb[0].mxu0
  %v4279 = vadd.f32 %v4212, %v4278
  %v4280 = vpop.f32.mrb[0].mxu0
  %4281 = vdwg.mxu0
  %v4282 = vtanh.pop %v4276
  %v4283 = vtanh.pop %v4279
  %v4284 = vpack.c.bf16 %v4283, %v4282
  %v4285 = vld [vmem:[%s11] sm:$0xf]
  %v4286 = vld [vmem:[%s11 + $0x4] sm:$0xf]
  %v4287 = vld [vmem:[%s11 + $0x8] sm:$0xf]
  %v4288 = vld [vmem:[%s11 + $0xc] sm:$0xf]
  %v4289 = vld [vmem:[%s11 + $0x10] sm:$0xf]
  %v4290 = vld [vmem:[%s11 + $0x14] sm:$0xf]
  %v4291 = vld [vmem:[%s11 + $0x18] sm:$0x1]
  %v4292 = vld [vmem:[%s12] sm:$0x1]
  %v4294 = vlaneseq
  %v4295 = vshrl.u32 %v4294, 7
  %v4296 = vsub.s32 0, %v4295
  %v4297 = vrot.slane %v4292, %v4296
  %v4306 = vunpack.c.l.b16 %v4285
  %v4307 = vunpack.c.l.b16 %v4286
  %v4308 = vunpack.c.l.b16 %v4287
  %v4309 = vunpack.c.l.b16 %v4288
  %v4310 = vunpack.c.l.b16 %v4289
  %v4311 = vunpack.c.l.b16 %v4290
  %v4312 = vunpack.c.l.b16 %v4291
  %v4313 = vpack.c.b16 %v4307, %v4306
  %v4314 = vpack.c.b16 %v4309, %v4308
  %v4315 = vpack.c.b16 %v4311, %v4310
  %v4316 = vpack.c.b16 %v4312, %v4312
  %v4321 = vsel %vm3711, %v4284, 0
  %v4324 = vsel %vm3715, %v4316, 0
  %4326 = vmatprep.subr.bf16.mxu0 0
  %4327 = vmatpush1.bf16.msra.mxu0 %v4313
  %4328 = vmatprep.subr.bf16.mxu0 0
  %4329 = vmatpush1.bf16.msra.mxu0 %v4314
  %4330 = vmatprep.subr.bf16.mxu0 0
  %4331 = vmatpush1.bf16.msra.mxu0 %v4315
  %4332 = vmatprep.subr.bf16.mxu0 0
  %4333 = vmatpush1.bf16.msra.mxu0 %v4324
  %4334 = vmatprep.subr.bf16.mxu0 0
  %4335 = vmatpush1.bf16.msra.mxu0 0
  %4336 = vmatprep.subr.bf16.mxu0 0
  %4337 = vmatpush1.bf16.msra.mxu0 0
  %4338 = vmatprep.subr.bf16.mxu0 0
  %4339 = vmatpush1.bf16.msra.mxu0 0
  %4340 = vmatprep.subr.bf16.mxu0 0
  %4341 = vmatpush1.bf16.msra.mxu0 0
  %4342 = vmatprep.subr.bf16.mxu0 0
  %4343 = vmatpush1.bf16.msra.mxu0 0
  %4344 = vmatprep.subr.bf16.mxu0 0
  %4345 = vmatpush1.bf16.msra.mxu0 0
  %4346 = vmatprep.subr.bf16.mxu0 0
  %4347 = vmatpush1.bf16.msra.mxu0 0
  %4348 = vmatprep.subr.bf16.mxu0 0
  %4349 = vmatpush1.bf16.msra.mxu0 0
  %4350 = vmatprep.subr.bf16.mxu0 0
  %4351 = vmatpush1.bf16.msra.mxu0 0
  %4352 = vmatprep.subr.bf16.mxu0 0
  %4353 = vmatpush1.bf16.msra.mxu0 0
  %4354 = vmatprep.subr.bf16.mxu0 0
  %4355 = vmatpush1.bf16.msra.mxu0 0
  %4356 = vmatprep.subr.bf16.mxu0 0
  %4357 = vmatpush1.bf16.msra.mxu0 0
  %4358 = vmatprep.mubr.bf16.mxu0 0
  %4359 = vmatmul.mubr.bf16.gmra.mrb[0].mxu0 %v4321
  %v4360 = vpop.f32.mrb[0].mxu0
  %v4361 = vadd.f32 %v4297, %v4360
  %v4362 = vpop.f32.mrb[0].mxu0
  %v4363 = vpop.f32.mrb[0].mxu0
  %v4364 = vadd.f32 %v4297, %v4363
  %v4365 = vpop.f32.mrb[0].mxu0
  %4366 = vdwg.mxu0
  %4367 = vmax.xlane.f32.xlu0 %v4361
  %v4368 = vpop.xlane.xlu0 %4367
  %4369 = vmax.xlane.f32.xlu0 %v4364
  %v4370 = vpop.xlane.xlu0 %4369
  %v4371 = vsub.f32 %v4361, %v4368
  %v4372 = vsub.f32 %v4364, %v4370
  %v4373 = vmul.f32 %v4371, 1.442695
  %v4374 = vpow.pop %v4373
  %v4375 = vmul.f32 %v4372, 1.442695
  %v4376 = vpow.pop %v4375
  %4377 = vadd.xlane.f32.xlu0 %v4374
  %v4378 = vpop.xlane.xlu0 %4377
  %4379 = vadd.xlane.f32.xlu0 %v4376
  %v4380 = vpop.xlane.xlu0 %4379
  %v4381 = vlog2.pop %v4378
  %v4382 = vmul.f32 %v4381, 0.6931472
  %v4383 = vlog2.pop %v4380
  %v4384 = vmul.f32 %v4383, 0.6931472
  %v4385 = vsub.f32 %v4371, %v4382
  %v4386 = vsub.f32 %v4372, %v4384
  %4387 = vst [vmem:[%s13] sm:$0xff] %v4385
  %4388 = vst [vmem:[%s13 + $0x8] sm:$0xff] %v4386
  // Predicated region
  $region54: #{deep_tanh_net_forward.1} parent=0 // pred_check
    _
  $region55: #{deep_tanh_net_forward.1} parent=0 // pred_check_branch
    %4390 = sbr.rel (0) target = $region57
  $region56: #{deep_tanh_net_forward.1} parent=0 // pred_region
    _
  $region57: #{deep_tanh_net_forward.1} parent=0 // pred_fallthru
    _
  // Predicated region
  $region58: #{deep_tanh_net_forward.1} parent=0 // pred_check
    _
  $region59: #{deep_tanh_net_forward.1} parent=0 // pred_check_branch
    %4392 = sbr.rel (0) target = $region61
  $region60: #{deep_tanh_net_forward.1} parent=0 // pred_region
    _
  $region61: #{deep_tanh_net_forward.1} parent=0 // pred_fallthru
    _

</llo_original>
